<compile_context>
chip_gen: v6e
topology: v6e:2x2x1
jax: 0.10.0
libtpu: 0.0.40
codegen_flags: <defaults>
</compile_context>

<pallas_src>
import jax
import jax.numpy as jnp
from jax.experimental import pallas as pl
from jax.experimental.pallas import tpu as pltpu

LEAKY_SLOPE = 0.01  # matches F.leaky_relu(negative_slope=0.01) in the module


# ---------------------------------------------------------------------------
# small helpers
# ---------------------------------------------------------------------------
def _round_up(x, m):
    return (x + m - 1) // m * m


def _choose_tiles(mp, s_max):
    """Pick (tile, halo_tile, padded_len) for the flattened spatial axis."""
    th = _round_up(max(s_max, 1), 128)            # halo block, lane aligned
    # Right-size the main tile: large enough to amortize per-step overhead,
    # small enough that even tiny layers get >=2 parallel grid steps (v7x).
    target = max(min(mp, 4096) // 2, 128)
    tm = _round_up(target, th)                    # halo tile divides main tile
    mpad = _round_up(mp, tm)
    return tm, th, mpad


def _fit(flat, front, total):
    """Zero-pad `flat` (..., L) to (..., total) with `front` leading zeros."""
    l = flat.shape[-1]
    body = min(l, total - front)
    flat = flat[..., :body]
    pad = [(0, 0)] * (flat.ndim - 1) + [(front, total - front - body)]
    return jnp.pad(flat, pad)


def _flat_rep(x_nchw):
    """NCHW -> (C, N*Hp*Wp) flat representation with a zero ring per image."""
    n, c, h, w = x_nchw.shape
    hp, wp = h + 2, w + 2
    xp = jnp.pad(x_nchw, ((0, 0), (0, 0), (1, 1), (1, 1)))
    xf = jnp.transpose(xp, (1, 0, 2, 3)).reshape(c, n * hp * wp)
    return xf, (n, h, w, hp, wp)


def _s2d_flat_rep(x_nchw):
    """NCHW -> (4, C, N*Hp2*Wp2): the four (h,w)-parity groups of x, each in
    flat-padded half-resolution form.  Group g=2a+b holds x[..., 2i+a, 2j+b]."""
    n, c, h, w = x_nchw.shape
    assert h % 2 == 0 and w % 2 == 0, "stride-2 branch expects even H, W"
    h2, w2 = h // 2, w // 2
    xr = x_nchw.reshape(n, c, h2, 2, w2, 2)
    xg = jnp.stack([xr[:, :, :, a, :, b] for a in (0, 1) for b in (0, 1)],
                   axis=0)                                     # (4, N, C, H2, W2)
    xg = jnp.pad(xg, ((0, 0), (0, 0), (0, 0), (1, 1), (1, 1)))
    hp2, wp2 = h2 + 2, w2 + 2
    flat = jnp.transpose(xg, (0, 2, 1, 3, 4)).reshape(4, c, n * hp2 * wp2)
    return flat, (n, h2, w2, hp2, wp2)


def _unflatten(of, geom):
    """(C, Mpad) flat rep -> NCHW, cropping the zero ring."""
    n, h, w, hp, wp = geom
    c = of.shape[0]
    x4 = of[:, : n * hp * wp].reshape(c, n, hp, wp)[:, :, 1:h + 1, 1:w + 1]
    return jnp.transpose(x4, (1, 0, 2, 3))


def _interior_mask(geom, mpad):
    """(1, Mpad) f32 mask: 1.0 at interior pixels, 0.0 at ring / tail pad."""
    n, h, w, hp, wp = geom
    q = jnp.arange(mpad, dtype=jnp.int32)
    r = (q % (hp * wp)) // wp
    c = q % wp
    m = (q < n * hp * wp) & (r >= 1) & (r <= h) & (c >= 1) & (c <= w)
    return m.astype(jnp.float32)[None, :]


# ---------------------------------------------------------------------------
# Pallas kernel: fused  out = leaky( sum_t W_t @ shift_t(x) [+ Ws @ sc] [+ res] )
# ---------------------------------------------------------------------------
def _make_conv_kernel(taps, act, has_res, has_sc, slope=LEAKY_SLOPE):
    def kernel(xc_ref, xh_ref, w_ref, m_ref, *rest):
        rest = list(rest)
        r_ref = rest.pop(0) if has_res else None
        sc_ref = rest.pop(0) if has_sc else None
        ws_ref = rest.pop(0) if has_sc else None
        (o_ref,) = rest
        tm = o_ref.shape[-1]

        # Current tile + small halo block, concatenated along lanes (aligned).
        window = jnp.concatenate([xc_ref[...], xh_ref[...]], axis=-1)

        acc = jnp.zeros(o_ref.shape, jnp.float32)
        for t, (g, s) in enumerate(taps):
            tap = window[g, :, s:s + tm]                      # (Cin, TM)
            acc = acc + jnp.dot(w_ref[t], tap,
                                preferred_element_type=jnp.float32)
        if has_sc:  # fused 1x1 stride-2 projection shortcut
            acc = acc + jnp.dot(ws_ref[...], sc_ref[...],
                                preferred_element_type=jnp.float32)
        if has_res:  # fused identity residual
            acc = acc + r_ref[...]
        if act == "leaky":
            acc = jnp.where(acc >= 0, acc, slope * acc)
        # Zero the padding ring / tail so the output is again a valid
        # flat-padded representation (lane-dense (Cout, TM) store).
        o_ref[...] = acc * m_ref[...]
    return kernel


def _conv_flat(x_flat3, w, geom, mode, act="leaky", residual=None, shortcut=None):
    """One fused conv layer on the flat-padded representation.

    x_flat3 : (G, Cin, L) flat-padded input groups (ring zeros).
    w       : (Cout, Cin, 3, 3) conv weight (bias=False as in the module).
    geom    : (n, h, w, hp, wp) geometry of the OUTPUT feature map.
    mode    : "s1"  -> 3x3 stride-1 pad-1 conv (G == 1)
              "s2d" -> 3x3 stride-2 pad-1 conv on space-to-depth groups (G == 4)
    residual: (Cout, Lr) flat rep added before the activation.
    shortcut: (sc_flat (Cs, Ls), ws (Cout, Cs, 1, 1)) fused 1x1 projection.
    Returns (Cout, Mpad) flat-padded rep of the output.
    """
    n, h, wd, hp, wp = geom
    mp = n * hp * wp
    cout, cin = w.shape[0], w.shape[1]
    g = x_flat3.shape[0]
    assert x_flat3.shape[1] == cin

    if mode == "s1":
        assert g == 1
        # tap (di, dj) reads flat index q + (di-1)*Wp + (dj-1)
        taps = tuple((0, di * wp + dj) for di in range(3) for dj in range(3))
    else:
        assert g == 4
        a = (1, 0, 1)   # parity group per kernel offset
        r = (0, 1, 1)   # (row/col shift + 1) per kernel offset
        taps = tuple((2 * a[di] + a[dj], r[di] * wp + r[dj])
                     for di in range(3) for dj in range(3))
    front = wp + 1
    s_max = max(s for _, s in taps)

    tm, th, mpad = _choose_tiles(mp, s_max)
    n_tiles = mpad // tm
    ratio = tm // th
    total = mpad + th

    x_ext = _fit(x_flat3, front, total)                   # (G, Cin, total)
    w_stk = jnp.transpose(w, (2, 3, 0, 1)).reshape(9, cout, cin)
    mask = _interior_mask(geom, mpad)

    inputs = [x_ext, x_ext, w_stk, mask]
    in_specs = [
        pl.BlockSpec((g, cin, tm), lambda i: (0, 0, i)),
        pl.BlockSpec((g, cin, th), lambda i: (0, 0, (i + 1) * ratio)),  # halo
        pl.BlockSpec((9, cout, cin), lambda i: (0, 0, 0)),
        pl.BlockSpec((1, tm), lambda i: (0, i)),
    ]

    has_res = residual is not None
    has_sc = shortcut is not None
    if has_res:
        inputs.append(_fit(residual, 0, mpad))
        in_specs.append(pl.BlockSpec((cout, tm), lambda i: (0, i)))
    if has_sc:
        sc_flat, ws = shortcut
        cs = sc_flat.shape[0]
        inputs += [_fit(sc_flat, 0, mpad), ws.reshape(cout, cs)]
        in_specs += [pl.BlockSpec((cs, tm), lambda i: (0, i)),
                     pl.BlockSpec((cout, cs), lambda i: (0, 0))]

    out = pl.pallas_call(
        _make_conv_kernel(taps, act, has_res, has_sc),
        out_shape=jax.ShapeDtypeStruct((cout, mpad), jnp.float32),
        grid=(n_tiles,),
        in_specs=in_specs,
        out_specs=pl.BlockSpec((cout, tm), lambda i: (0, i)),
        compiler_params=pltpu.CompilerParams(
            dimension_semantics=("parallel",)),
    )(*inputs)
    return out


# ---------------------------------------------------------------------------
# resnet_block forward (matches the PyTorch module semantics)
# ---------------------------------------------------------------------------
def resnet_block_forward(x, params):
    """x: (N, Cin, H, W) float32 NCHW.  params: conv_1, conv_2 [, conv_s]."""
    w1, w2 = params["conv_1"], params["conv_2"]
    dim_out, dim_in = w1.shape[0], w1.shape[1]

    if dim_in == dim_out:
        xf, geom = _flat_rep(x)
        o1 = _conv_flat(xf[None], w1, geom, "s1", act="leaky")
        o2 = _conv_flat(o1[None], w2, geom, "s1", act="leaky", residual=xf)
        return _unflatten(o2, geom)
    else:
        ws = params["conv_s"]
        xg, geom = _s2d_flat_rep(x)              # half-resolution geometry
        o1 = _conv_flat(xg, w1, geom, "s2d", act="leaky")
        o2 = _conv_flat(o1[None], w2, geom, "s1", act="leaky",
                        shortcut=(xg[0], ws))    # group (0,0) == x[:, :, ::2, ::2]
        return _unflatten(o2, geom)


# ---------------------------------------------------------------------------
# pure-JAX reference (for validation only)
# ---------------------------------------------------------------------------
def _leaky(v):
    return jnp.where(v >= 0, v, LEAKY_SLOPE * v)


def resnet_block_reference(x, params):
    def conv(v, w, stride, pad):
        return jax.lax.conv_general_dilated(
            v, w, (stride, stride), [(pad, pad), (pad, pad)],
            dimension_numbers=("NCHW", "OIHW", "NCHW"))
    w1, w2 = params["conv_1"], params["conv_2"]
    if w1.shape[0] == w1.shape[1]:
        o = _leaky(conv(x, w1, 1, 1))
        return _leaky(conv(o, w2, 1, 1) + x)
    else:
        o = _leaky(conv(x, w1, 2, 1))
        return _leaky(conv(o, w2, 1, 1) + conv(x, params["conv_s"], 2, 0))


def _xavier(key, shape):
    fan_in = shape[1] * shape[2] * shape[3]
    fan_out = shape[0] * shape[2] * shape[3]
    lim = (6.0 / (fan_in + fan_out)) ** 0.5
    return jax.random.uniform(key, shape, jnp.float32, -lim, lim)


# ---------------------------------------------------------------------------
if __name__ == "__main__":
    key = jax.random.PRNGKey(0)
    kx, k1, k2, k3, k4, k5 = jax.random.split(key, 6)
    n, c, h, w = 2, 4, 16, 16
    x = jax.random.normal(kx, (n, c, h, w), jnp.float32)

    # Case 1: dim_in == dim_out (identity shortcut).
    params_same = {"conv_1": _xavier(k1, (c, c, 3, 3)),
                   "conv_2": _xavier(k2, (c, c, 3, 3))}
    # Case 2: dim_in != dim_out (stride-2 block with 1x1 projection shortcut).
    c_out = 8
    params_down = {"conv_1": _xavier(k3, (c_out, c, 3, 3)),
                   "conv_2": _xavier(k4, (c_out, c_out, 3, 3)),
                   "conv_s": _xavier(k5, (c_out, c, 1, 1))}

    fwd = jax.jit(resnet_block_forward)
    out_same = jax.block_until_ready(fwd(x, params_same))
    out_down = jax.block_until_ready(fwd(x, params_down))

    assert out_same.shape == (n, c, h, w), out_same.shape
    assert out_down.shape == (n, c_out, h // 2, w // 2), out_down.shape
    assert bool(jnp.all(jnp.isfinite(out_same)))
    assert bool(jnp.all(jnp.isfinite(out_down)))

    ref_same = resnet_block_reference(x, params_same)
    ref_down = resnet_block_reference(x, params_down)
    assert bool(jnp.allclose(out_same, ref_same, atol=5e-2, rtol=5e-2)), \
        float(jnp.max(jnp.abs(out_same - ref_same)))
    assert bool(jnp.allclose(out_down, ref_down, atol=5e-2, rtol=5e-2)), \
        float(jnp.max(jnp.abs(out_down - ref_down)))

    print("KERNEL_OK")
</pallas_src>

<mosaic_0001>
module attributes {stable_mosaic.version = 11 : i64} {
  func.func @kernel(%arg0: i32, %arg1: memref<1x4x384xf32, #tpu.memory_space<vmem>>, %arg2: memref<1x4x128xf32, #tpu.memory_space<vmem>>, %arg3: memref<9x4x4xf32, #tpu.memory_space<vmem>>, %arg4: memref<1x384xf32, #tpu.memory_space<vmem>>, %arg5: memref<4x384xf32, #tpu.memory_space<vmem>>) attributes {dimension_semantics = [#tpu.dimension_semantics<parallel>], iteration_bounds = array<i64: 2>, scalar_prefetch = 0 : i64, scratch_operands = 0 : i64, tpu.core_type = #tpu.core_type<tc>, window_params = [{transform_indices = @transform_0, window_bounds = array<i64: 1, 4, 384>}, {transform_indices = @transform_1, window_bounds = array<i64: 1, 4, 128>}, {pipeline_mode = #tpu.pipeline_mode<synchronous>, transform_indices = @transform_2, window_bounds = array<i64: 9, 4, 4>}, {transform_indices = @transform_3, window_bounds = array<i64: 1, 384>}, {transform_indices = @transform_4, window_bounds = array<i64: 4, 384>}]} {
    %c0 = arith.constant 0 : index
    %c0_0 = arith.constant 0 : index
    %c0_1 = arith.constant 0 : index
    %0 = vector.load %arg1[%c0, %c0_0, %c0_1] : memref<1x4x384xf32, #tpu.memory_space<vmem>>, vector<1x4x384xf32>
    %c0_2 = arith.constant 0 : index
    %c0_3 = arith.constant 0 : index
    %c0_4 = arith.constant 0 : index
    %1 = vector.load %arg2[%c0_2, %c0_3, %c0_4] : memref<1x4x128xf32, #tpu.memory_space<vmem>>, vector<1x4x128xf32>
    %2 = tpu.concatenate %0, %1 in 2 : vector<1x4x384xf32>, vector<1x4x128xf32> -> vector<1x4x512xf32>
    %cst = arith.constant 0.000000e+00 : f32
    %3 = vector.broadcast %cst : f32 to vector<4x384xf32>
    %4 = vector.extract_strided_slice %2 {offsets = [0, 0, 0], sizes = [1, 4, 384], strides = [1, 1, 1]} : vector<1x4x512xf32> to vector<1x4x384xf32>
    %5 = vector.shape_cast %4 : vector<1x4x384xf32> to vector<4x384xf32>
    %c0_5 = arith.constant 0 : index
    %c0_6 = arith.constant 0 : index
    %c0_7 = arith.constant 0 : index
    %6 = vector.load %arg3[%c0_5, %c0_6, %c0_7] : memref<9x4x4xf32, #tpu.memory_space<vmem>>, vector<1x4x4xf32>
    %7 = vector.shape_cast %6 : vector<1x4x4xf32> to vector<4x4xf32>
    %cst_8 = arith.constant dense<0.000000e+00> : vector<4x384xf32>
    %8 = tpu.matmul %7, %5, %cst_8 {dimension_numbers = #tpu.dot_dimension_numbers<[1], [0], [0], [1], [0, 0, 1, 1], [], []>} : vector<4x4xf32>, vector<4x384xf32>, vector<4x384xf32> -> vector<4x384xf32>
    %9 = arith.addf %3, %8 : vector<4x384xf32>
    %10 = vector.extract_strided_slice %2 {offsets = [0, 0, 1], sizes = [1, 4, 384], strides = [1, 1, 1]} : vector<1x4x512xf32> to vector<1x4x384xf32>
    %11 = vector.shape_cast %10 : vector<1x4x384xf32> to vector<4x384xf32>
    %c1 = arith.constant 1 : index
    %c0_9 = arith.constant 0 : index
    %c0_10 = arith.constant 0 : index
    %12 = vector.load %arg3[%c1, %c0_9, %c0_10] : memref<9x4x4xf32, #tpu.memory_space<vmem>>, vector<1x4x4xf32>
    %13 = vector.shape_cast %12 : vector<1x4x4xf32> to vector<4x4xf32>
    %cst_11 = arith.constant dense<0.000000e+00> : vector<4x384xf32>
    %14 = tpu.matmul %13, %11, %cst_11 {dimension_numbers = #tpu.dot_dimension_numbers<[1], [0], [0], [1], [0, 0, 1, 1], [], []>} : vector<4x4xf32>, vector<4x384xf32>, vector<4x384xf32> -> vector<4x384xf32>
    %15 = arith.addf %9, %14 : vector<4x384xf32>
    %16 = vector.extract_strided_slice %2 {offsets = [0, 0, 2], sizes = [1, 4, 384], strides = [1, 1, 1]} : vector<1x4x512xf32> to vector<1x4x384xf32>
    %17 = vector.shape_cast %16 : vector<1x4x384xf32> to vector<4x384xf32>
    %c2 = arith.constant 2 : index
    %c0_12 = arith.constant 0 : index
    %c0_13 = arith.constant 0 : index
    %18 = vector.load %arg3[%c2, %c0_12, %c0_13] : memref<9x4x4xf32, #tpu.memory_space<vmem>>, vector<1x4x4xf32>
    %19 = vector.shape_cast %18 : vector<1x4x4xf32> to vector<4x4xf32>
    %cst_14 = arith.constant dense<0.000000e+00> : vector<4x384xf32>
    %20 = tpu.matmul %19, %17, %cst_14 {dimension_numbers = #tpu.dot_dimension_numbers<[1], [0], [0], [1], [0, 0, 1, 1], [], []>} : vector<4x4xf32>, vector<4x384xf32>, vector<4x384xf32> -> vector<4x384xf32>
    %21 = arith.addf %15, %20 : vector<4x384xf32>
    %22 = vector.extract_strided_slice %2 {offsets = [0, 0, 18], sizes = [1, 4, 384], strides = [1, 1, 1]} : vector<1x4x512xf32> to vector<1x4x384xf32>
    %23 = vector.shape_cast %22 : vector<1x4x384xf32> to vector<4x384xf32>
    %c3 = arith.constant 3 : index
    %c0_15 = arith.constant 0 : index
    %c0_16 = arith.constant 0 : index
    %24 = vector.load %arg3[%c3, %c0_15, %c0_16] : memref<9x4x4xf32, #tpu.memory_space<vmem>>, vector<1x4x4xf32>
    %25 = vector.shape_cast %24 : vector<1x4x4xf32> to vector<4x4xf32>
    %cst_17 = arith.constant dense<0.000000e+00> : vector<4x384xf32>
    %26 = tpu.matmul %25, %23, %cst_17 {dimension_numbers = #tpu.dot_dimension_numbers<[1], [0], [0], [1], [0, 0, 1, 1], [], []>} : vector<4x4xf32>, vector<4x384xf32>, vector<4x384xf32> -> vector<4x384xf32>
    %27 = arith.addf %21, %26 : vector<4x384xf32>
    %28 = vector.extract_strided_slice %2 {offsets = [0, 0, 19], sizes = [1, 4, 384], strides = [1, 1, 1]} : vector<1x4x512xf32> to vector<1x4x384xf32>
    %29 = vector.shape_cast %28 : vector<1x4x384xf32> to vector<4x384xf32>
    %c4 = arith.constant 4 : index
    %c0_18 = arith.constant 0 : index
    %c0_19 = arith.constant 0 : index
    %30 = vector.load %arg3[%c4, %c0_18, %c0_19] : memref<9x4x4xf32, #tpu.memory_space<vmem>>, vector<1x4x4xf32>
    %31 = vector.shape_cast %30 : vector<1x4x4xf32> to vector<4x4xf32>
    %cst_20 = arith.constant dense<0.000000e+00> : vector<4x384xf32>
    %32 = tpu.matmul %31, %29, %cst_20 {dimension_numbers = #tpu.dot_dimension_numbers<[1], [0], [0], [1], [0, 0, 1, 1], [], []>} : vector<4x4xf32>, vector<4x384xf32>, vector<4x384xf32> -> vector<4x384xf32>
    %33 = arith.addf %27, %32 : vector<4x384xf32>
    %34 = vector.extract_strided_slice %2 {offsets = [0, 0, 20], sizes = [1, 4, 384], strides = [1, 1, 1]} : vector<1x4x512xf32> to vector<1x4x384xf32>
    %35 = vector.shape_cast %34 : vector<1x4x384xf32> to vector<4x384xf32>
    %c5 = arith.constant 5 : index
    %c0_21 = arith.constant 0 : index
    %c0_22 = arith.constant 0 : index
    %36 = vector.load %arg3[%c5, %c0_21, %c0_22] : memref<9x4x4xf32, #tpu.memory_space<vmem>>, vector<1x4x4xf32>
    %37 = vector.shape_cast %36 : vector<1x4x4xf32> to vector<4x4xf32>
    %cst_23 = arith.constant dense<0.000000e+00> : vector<4x384xf32>
    %38 = tpu.matmul %37, %35, %cst_23 {dimension_numbers = #tpu.dot_dimension_numbers<[1], [0], [0], [1], [0, 0, 1, 1], [], []>} : vector<4x4xf32>, vector<4x384xf32>, vector<4x384xf32> -> vector<4x384xf32>
    %39 = arith.addf %33, %38 : vector<4x384xf32>
    %40 = vector.extract_strided_slice %2 {offsets = [0, 0, 36], sizes = [1, 4, 384], strides = [1, 1, 1]} : vector<1x4x512xf32> to vector<1x4x384xf32>
    %41 = vector.shape_cast %40 : vector<1x4x384xf32> to vector<4x384xf32>
    %c6 = arith.constant 6 : index
    %c0_24 = arith.constant 0 : index
    %c0_25 = arith.constant 0 : index
    %42 = vector.load %arg3[%c6, %c0_24, %c0_25] : memref<9x4x4xf32, #tpu.memory_space<vmem>>, vector<1x4x4xf32>
    %43 = vector.shape_cast %42 : vector<1x4x4xf32> to vector<4x4xf32>
    %cst_26 = arith.constant dense<0.000000e+00> : vector<4x384xf32>
    %44 = tpu.matmul %43, %41, %cst_26 {dimension_numbers = #tpu.dot_dimension_numbers<[1], [0], [0], [1], [0, 0, 1, 1], [], []>} : vector<4x4xf32>, vector<4x384xf32>, vector<4x384xf32> -> vector<4x384xf32>
    %45 = arith.addf %39, %44 : vector<4x384xf32>
    %46 = vector.extract_strided_slice %2 {offsets = [0, 0, 37], sizes = [1, 4, 384], strides = [1, 1, 1]} : vector<1x4x512xf32> to vector<1x4x384xf32>
    %47 = vector.shape_cast %46 : vector<1x4x384xf32> to vector<4x384xf32>
    %c7 = arith.constant 7 : index
    %c0_27 = arith.constant 0 : index
    %c0_28 = arith.constant 0 : index
    %48 = vector.load %arg3[%c7, %c0_27, %c0_28] : memref<9x4x4xf32, #tpu.memory_space<vmem>>, vector<1x4x4xf32>
    %49 = vector.shape_cast %48 : vector<1x4x4xf32> to vector<4x4xf32>
    %cst_29 = arith.constant dense<0.000000e+00> : vector<4x384xf32>
    %50 = tpu.matmul %49, %47, %cst_29 {dimension_numbers = #tpu.dot_dimension_numbers<[1], [0], [0], [1], [0, 0, 1, 1], [], []>} : vector<4x4xf32>, vector<4x384xf32>, vector<4x384xf32> -> vector<4x384xf32>
    %51 = arith.addf %45, %50 : vector<4x384xf32>
    %52 = vector.extract_strided_slice %2 {offsets = [0, 0, 38], sizes = [1, 4, 384], strides = [1, 1, 1]} : vector<1x4x512xf32> to vector<1x4x384xf32>
    %53 = vector.shape_cast %52 : vector<1x4x384xf32> to vector<4x384xf32>
    %c8 = arith.constant 8 : index
    %c0_30 = arith.constant 0 : index
    %c0_31 = arith.constant 0 : index
    %54 = vector.load %arg3[%c8, %c0_30, %c0_31] : memref<9x4x4xf32, #tpu.memory_space<vmem>>, vector<1x4x4xf32>
    %55 = vector.shape_cast %54 : vector<1x4x4xf32> to vector<4x4xf32>
    %cst_32 = arith.constant dense<0.000000e+00> : vector<4x384xf32>
    %56 = tpu.matmul %55, %53, %cst_32 {dimension_numbers = #tpu.dot_dimension_numbers<[1], [0], [0], [1], [0, 0, 1, 1], [], []>} : vector<4x4xf32>, vector<4x384xf32>, vector<4x384xf32> -> vector<4x384xf32>
    %57 = arith.addf %51, %56 : vector<4x384xf32>
    %cst_33 = arith.constant 0.000000e+00 : f32
    %58 = vector.broadcast %cst_33 : f32 to vector<4x384xf32>
    %59 = arith.cmpf oge, %57, %58 : vector<4x384xf32>
    %cst_34 = arith.constant 0.00999999977 : f32
    %60 = vector.broadcast %cst_34 : f32 to vector<4x384xf32>
    %61 = arith.mulf %60, %57 : vector<4x384xf32>
    %62 = arith.select %59, %57, %61 : vector<4x384xi1>, vector<4x384xf32>
    %c0_35 = arith.constant 0 : index
    %c0_36 = arith.constant 0 : index
    %63 = vector.load %arg4[%c0_35, %c0_36] : memref<1x384xf32, #tpu.memory_space<vmem>>, vector<1x384xf32>
    %64 = vector.broadcast %63 : vector<1x384xf32> to vector<4x384xf32>
    %65 = arith.mulf %62, %64 : vector<4x384xf32>
    %c0_37 = arith.constant 0 : index
    %c0_38 = arith.constant 0 : index
    %66 = vector.load %arg5[%c0_37, %c0_38] : memref<4x384xf32, #tpu.memory_space<vmem>>, vector<4x384xf32>
    tpu.vector_store %arg5[%c0_37, %c0_38], %65 {strides = array<i32>} : memref<4x384xf32, #tpu.memory_space<vmem>>, vector<4x384xf32>,
    return
  }
  func.func @transform_0(%arg0: i32) -> (i32, i32, i32) {
    %c0_i32 = arith.constant 0 : i32
    %c0_i32_0 = arith.constant 0 : i32
    %c0_i32_1 = arith.constant 0 : i32
    return %c0_i32, %c0_i32_0, %arg0 : i32, i32, i32
  }
  func.func @transform_1(%arg0: i32) -> (i32, i32, i32) {
    %c1_i32 = arith.constant 1 : i32
    %0 = arith.addi %arg0, %c1_i32 : i32
    %c3_i32 = arith.constant 3 : i32
    %1 = arith.muli %0, %c3_i32 : i32
    %c0_i32 = arith.constant 0 : i32
    %c0_i32_0 = arith.constant 0 : i32
    %c0_i32_1 = arith.constant 0 : i32
    return %c0_i32, %c0_i32_0, %1 : i32, i32, i32
  }
  func.func @transform_2(%arg0: i32) -> (i32, i32, i32) {
    %c0_i32 = arith.constant 0 : i32
    %c0_i32_0 = arith.constant 0 : i32
    %c0_i32_1 = arith.constant 0 : i32
    %c0_i32_2 = arith.constant 0 : i32
    return %c0_i32, %c0_i32_0, %c0_i32_1 : i32, i32, i32
  }
  func.func @transform_3(%arg0: i32) -> (i32, i32) {
    %c0_i32 = arith.constant 0 : i32
    %c0_i32_0 = arith.constant 0 : i32
    return %c0_i32, %arg0 : i32, i32
  }
  func.func @transform_4(%arg0: i32) -> (i32, i32) {
    %c0_i32 = arith.constant 0 : i32
    %c0_i32_0 = arith.constant 0 : i32
    return %c0_i32, %arg0 : i32, i32
  }
}

module attributes {stable_mosaic.version = 11 : i64} {
  func.func @kernel(%arg0: i32, %arg1: memref<1x4x384xf32, #tpu.memory_space<vmem>>, %arg2: memref<1x4x128xf32, #tpu.memory_space<vmem>>, %arg3: memref<9x4x4xf32, #tpu.memory_space<vmem>>, %arg4: memref<1x384xf32, #tpu.memory_space<vmem>>, %arg5: memref<4x384xf32, #tpu.memory_space<vmem>>, %arg6: memref<4x384xf32, #tpu.memory_space<vmem>>) attributes {dimension_semantics = [#tpu.dimension_semantics<parallel>], iteration_bounds = array<i64: 2>, scalar_prefetch = 0 : i64, scratch_operands = 0 : i64, tpu.core_type = #tpu.core_type<tc>, window_params = [{transform_indices = @transform_0, window_bounds = array<i64: 1, 4, 384>}, {transform_indices = @transform_1, window_bounds = array<i64: 1, 4, 128>}, {pipeline_mode = #tpu.pipeline_mode<synchronous>, transform_indices = @transform_2, window_bounds = array<i64: 9, 4, 4>}, {transform_indices = @transform_3, window_bounds = array<i64: 1, 384>}, {transform_indices = @transform_4, window_bounds = array<i64: 4, 384>}, {transform_indices = @transform_5, window_bounds = array<i64: 4, 384>}]} {
    %c0 = arith.constant 0 : index
    %c0_0 = arith.constant 0 : index
    %c0_1 = arith.constant 0 : index
    %0 = vector.load %arg1[%c0, %c0_0, %c0_1] : memref<1x4x384xf32, #tpu.memory_space<vmem>>, vector<1x4x384xf32>
    %c0_2 = arith.constant 0 : index
    %c0_3 = arith.constant 0 : index
    %c0_4 = arith.constant 0 : index
    %1 = vector.load %arg2[%c0_2, %c0_3, %c0_4] : memref<1x4x128xf32, #tpu.memory_space<vmem>>, vector<1x4x128xf32>
    %2 = tpu.concatenate %0, %1 in 2 : vector<1x4x384xf32>, vector<1x4x128xf32> -> vector<1x4x512xf32>
    %cst = arith.constant 0.000000e+00 : f32
    %3 = vector.broadcast %cst : f32 to vector<4x384xf32>
    %4 = vector.extract_strided_slice %2 {offsets = [0, 0, 0], sizes = [1, 4, 384], strides = [1, 1, 1]} : vector<1x4x512xf32> to vector<1x4x384xf32>
    %5 = vector.shape_cast %4 : vector<1x4x384xf32> to vector<4x384xf32>
    %c0_5 = arith.constant 0 : index
    %c0_6 = arith.constant 0 : index
    %c0_7 = arith.constant 0 : index
    %6 = vector.load %arg3[%c0_5, %c0_6, %c0_7] : memref<9x4x4xf32, #tpu.memory_space<vmem>>, vector<1x4x4xf32>
    %7 = vector.shape_cast %6 : vector<1x4x4xf32> to vector<4x4xf32>
    %cst_8 = arith.constant dense<0.000000e+00> : vector<4x384xf32>
    %8 = tpu.matmul %7, %5, %cst_8 {dimension_numbers = #tpu.dot_dimension_numbers<[1], [0], [0], [1], [0, 0, 1, 1], [], []>} : vector<4x4xf32>, vector<4x384xf32>, vector<4x384xf32> -> vector<4x384xf32>
    %9 = arith.addf %3, %8 : vector<4x384xf32>
    %10 = vector.extract_strided_slice %2 {offsets = [0, 0, 1], sizes = [1, 4, 384], strides = [1, 1, 1]} : vector<1x4x512xf32> to vector<1x4x384xf32>
    %11 = vector.shape_cast %10 : vector<1x4x384xf32> to vector<4x384xf32>
    %c1 = arith.constant 1 : index
    %c0_9 = arith.constant 0 : index
    %c0_10 = arith.constant 0 : index
    %12 = vector.load %arg3[%c1, %c0_9, %c0_10] : memref<9x4x4xf32, #tpu.memory_space<vmem>>, vector<1x4x4xf32>
    %13 = vector.shape_cast %12 : vector<1x4x4xf32> to vector<4x4xf32>
    %cst_11 = arith.constant dense<0.000000e+00> : vector<4x384xf32>
    %14 = tpu.matmul %13, %11, %cst_11 {dimension_numbers = #tpu.dot_dimension_numbers<[1], [0], [0], [1], [0, 0, 1, 1], [], []>} : vector<4x4xf32>, vector<4x384xf32>, vector<4x384xf32> -> vector<4x384xf32>
    %15 = arith.addf %9, %14 : vector<4x384xf32>
    %16 = vector.extract_strided_slice %2 {offsets = [0, 0, 2], sizes = [1, 4, 384], strides = [1, 1, 1]} : vector<1x4x512xf32> to vector<1x4x384xf32>
    %17 = vector.shape_cast %16 : vector<1x4x384xf32> to vector<4x384xf32>
    %c2 = arith.constant 2 : index
    %c0_12 = arith.constant 0 : index
    %c0_13 = arith.constant 0 : index
    %18 = vector.load %arg3[%c2, %c0_12, %c0_13] : memref<9x4x4xf32, #tpu.memory_space<vmem>>, vector<1x4x4xf32>
    %19 = vector.shape_cast %18 : vector<1x4x4xf32> to vector<4x4xf32>
    %cst_14 = arith.constant dense<0.000000e+00> : vector<4x384xf32>
    %20 = tpu.matmul %19, %17, %cst_14 {dimension_numbers = #tpu.dot_dimension_numbers<[1], [0], [0], [1], [0, 0, 1, 1], [], []>} : vector<4x4xf32>, vector<4x384xf32>, vector<4x384xf32> -> vector<4x384xf32>
    %21 = arith.addf %15, %20 : vector<4x384xf32>
    %22 = vector.extract_strided_slice %2 {offsets = [0, 0, 18], sizes = [1, 4, 384], strides = [1, 1, 1]} : vector<1x4x512xf32> to vector<1x4x384xf32>
    %23 = vector.shape_cast %22 : vector<1x4x384xf32> to vector<4x384xf32>
    %c3 = arith.constant 3 : index
    %c0_15 = arith.constant 0 : index
    %c0_16 = arith.constant 0 : index
    %24 = vector.load %arg3[%c3, %c0_15, %c0_16] : memref<9x4x4xf32, #tpu.memory_space<vmem>>, vector<1x4x4xf32>
    %25 = vector.shape_cast %24 : vector<1x4x4xf32> to vector<4x4xf32>
    %cst_17 = arith.constant dense<0.000000e+00> : vector<4x384xf32>
    %26 = tpu.matmul %25, %23, %cst_17 {dimension_numbers = #tpu.dot_dimension_numbers<[1], [0], [0], [1], [0, 0, 1, 1], [], []>} : vector<4x4xf32>, vector<4x384xf32>, vector<4x384xf32> -> vector<4x384xf32>
    %27 = arith.addf %21, %26 : vector<4x384xf32>
    %28 = vector.extract_strided_slice %2 {offsets = [0, 0, 19], sizes = [1, 4, 384], strides = [1, 1, 1]} : vector<1x4x512xf32> to vector<1x4x384xf32>
    %29 = vector.shape_cast %28 : vector<1x4x384xf32> to vector<4x384xf32>
    %c4 = arith.constant 4 : index
    %c0_18 = arith.constant 0 : index
    %c0_19 = arith.constant 0 : index
    %30 = vector.load %arg3[%c4, %c0_18, %c0_19] : memref<9x4x4xf32, #tpu.memory_space<vmem>>, vector<1x4x4xf32>
    %31 = vector.shape_cast %30 : vector<1x4x4xf32> to vector<4x4xf32>
    %cst_20 = arith.constant dense<0.000000e+00> : vector<4x384xf32>
    %32 = tpu.matmul %31, %29, %cst_20 {dimension_numbers = #tpu.dot_dimension_numbers<[1], [0], [0], [1], [0, 0, 1, 1], [], []>} : vector<4x4xf32>, vector<4x384xf32>, vector<4x384xf32> -> vector<4x384xf32>
    %33 = arith.addf %27, %32 : vector<4x384xf32>
    %34 = vector.extract_strided_slice %2 {offsets = [0, 0, 20], sizes = [1, 4, 384], strides = [1, 1, 1]} : vector<1x4x512xf32> to vector<1x4x384xf32>
    %35 = vector.shape_cast %34 : vector<1x4x384xf32> to vector<4x384xf32>
    %c5 = arith.constant 5 : index
    %c0_21 = arith.constant 0 : index
    %c0_22 = arith.constant 0 : index
    %36 = vector.load %arg3[%c5, %c0_21, %c0_22] : memref<9x4x4xf32, #tpu.memory_space<vmem>>, vector<1x4x4xf32>
    %37 = vector.shape_cast %36 : vector<1x4x4xf32> to vector<4x4xf32>
    %cst_23 = arith.constant dense<0.000000e+00> : vector<4x384xf32>
    %38 = tpu.matmul %37, %35, %cst_23 {dimension_numbers = #tpu.dot_dimension_numbers<[1], [0], [0], [1], [0, 0, 1, 1], [], []>} : vector<4x4xf32>, vector<4x384xf32>, vector<4x384xf32> -> vector<4x384xf32>
    %39 = arith.addf %33, %38 : vector<4x384xf32>
    %40 = vector.extract_strided_slice %2 {offsets = [0, 0, 36], sizes = [1, 4, 384], strides = [1, 1, 1]} : vector<1x4x512xf32> to vector<1x4x384xf32>
    %41 = vector.shape_cast %40 : vector<1x4x384xf32> to vector<4x384xf32>
    %c6 = arith.constant 6 : index
    %c0_24 = arith.constant 0 : index
    %c0_25 = arith.constant 0 : index
    %42 = vector.load %arg3[%c6, %c0_24, %c0_25] : memref<9x4x4xf32, #tpu.memory_space<vmem>>, vector<1x4x4xf32>
    %43 = vector.shape_cast %42 : vector<1x4x4xf32> to vector<4x4xf32>
    %cst_26 = arith.constant dense<0.000000e+00> : vector<4x384xf32>
    %44 = tpu.matmul %43, %41, %cst_26 {dimension_numbers = #tpu.dot_dimension_numbers<[1], [0], [0], [1], [0, 0, 1, 1], [], []>} : vector<4x4xf32>, vector<4x384xf32>, vector<4x384xf32> -> vector<4x384xf32>
    %45 = arith.addf %39, %44 : vector<4x384xf32>
    %46 = vector.extract_strided_slice %2 {offsets = [0, 0, 37], sizes = [1, 4, 384], strides = [1, 1, 1]} : vector<1x4x512xf32> to vector<1x4x384xf32>
    %47 = vector.shape_cast %46 : vector<1x4x384xf32> to vector<4x384xf32>
    %c7 = arith.constant 7 : index
    %c0_27 = arith.constant 0 : index
    %c0_28 = arith.constant 0 : index
    %48 = vector.load %arg3[%c7, %c0_27, %c0_28] : memref<9x4x4xf32, #tpu.memory_space<vmem>>, vector<1x4x4xf32>
    %49 = vector.shape_cast %48 : vector<1x4x4xf32> to vector<4x4xf32>
    %cst_29 = arith.constant dense<0.000000e+00> : vector<4x384xf32>
    %50 = tpu.matmul %49, %47, %cst_29 {dimension_numbers = #tpu.dot_dimension_numbers<[1], [0], [0], [1], [0, 0, 1, 1], [], []>} : vector<4x4xf32>, vector<4x384xf32>, vector<4x384xf32> -> vector<4x384xf32>
    %51 = arith.addf %45, %50 : vector<4x384xf32>
    %52 = vector.extract_strided_slice %2 {offsets = [0, 0, 38], sizes = [1, 4, 384], strides = [1, 1, 1]} : vector<1x4x512xf32> to vector<1x4x384xf32>
    %53 = vector.shape_cast %52 : vector<1x4x384xf32> to vector<4x384xf32>
    %c8 = arith.constant 8 : index
    %c0_30 = arith.constant 0 : index
    %c0_31 = arith.constant 0 : index
    %54 = vector.load %arg3[%c8, %c0_30, %c0_31] : memref<9x4x4xf32, #tpu.memory_space<vmem>>, vector<1x4x4xf32>
    %55 = vector.shape_cast %54 : vector<1x4x4xf32> to vector<4x4xf32>
    %cst_32 = arith.constant dense<0.000000e+00> : vector<4x384xf32>
    %56 = tpu.matmul %55, %53, %cst_32 {dimension_numbers = #tpu.dot_dimension_numbers<[1], [0], [0], [1], [0, 0, 1, 1], [], []>} : vector<4x4xf32>, vector<4x384xf32>, vector<4x384xf32> -> vector<4x384xf32>
    %57 = arith.addf %51, %56 : vector<4x384xf32>
    %c0_33 = arith.constant 0 : index
    %c0_34 = arith.constant 0 : index
    %58 = vector.load %arg5[%c0_33, %c0_34] : memref<4x384xf32, #tpu.memory_space<vmem>>, vector<4x384xf32>
    %59 = arith.addf %57, %58 : vector<4x384xf32>
    %cst_35 = arith.constant 0.000000e+00 : f32
    %60 = vector.broadcast %cst_35 : f32 to vector<4x384xf32>
    %61 = arith.cmpf oge, %59, %60 : vector<4x384xf32>
    %cst_36 = arith.constant 0.00999999977 : f32
    %62 = vector.broadcast %cst_36 : f32 to vector<4x384xf32>
    %63 = arith.mulf %62, %59 : vector<4x384xf32>
    %64 = arith.select %61, %59, %63 : vector<4x384xi1>, vector<4x384xf32>
    %c0_37 = arith.constant 0 : index
    %c0_38 = arith.constant 0 : index
    %65 = vector.load %arg4[%c0_37, %c0_38] : memref<1x384xf32, #tpu.memory_space<vmem>>, vector<1x384xf32>
    %66 = vector.broadcast %65 : vector<1x384xf32> to vector<4x384xf32>
    %67 = arith.mulf %64, %66 : vector<4x384xf32>
    %c0_39 = arith.constant 0 : index
    %c0_40 = arith.constant 0 : index
    %68 = vector.load %arg6[%c0_39, %c0_40] : memref<4x384xf32, #tpu.memory_space<vmem>>, vector<4x384xf32>
    tpu.vector_store %arg6[%c0_39, %c0_40], %67 {strides = array<i32>} : memref<4x384xf32, #tpu.memory_space<vmem>>, vector<4x384xf32>,
    return
  }
  func.func @transform_0(%arg0: i32) -> (i32, i32, i32) {
    %c0_i32 = arith.constant 0 : i32
    %c0_i32_0 = arith.constant 0 : i32
    %c0_i32_1 = arith.constant 0 : i32
    return %c0_i32, %c0_i32_0, %arg0 : i32, i32, i32
  }
  func.func @transform_1(%arg0: i32) -> (i32, i32, i32) {
    %c1_i32 = arith.constant 1 : i32
    %0 = arith.addi %arg0, %c1_i32 : i32
    %c3_i32 = arith.constant 3 : i32
    %1 = arith.muli %0, %c3_i32 : i32
    %c0_i32 = arith.constant 0 : i32
    %c0_i32_0 = arith.constant 0 : i32
    %c0_i32_1 = arith.constant 0 : i32
    return %c0_i32, %c0_i32_0, %1 : i32, i32, i32
  }
  func.func @transform_2(%arg0: i32) -> (i32, i32, i32) {
    %c0_i32 = arith.constant 0 : i32
    %c0_i32_0 = arith.constant 0 : i32
    %c0_i32_1 = arith.constant 0 : i32
    %c0_i32_2 = arith.constant 0 : i32
    return %c0_i32, %c0_i32_0, %c0_i32_1 : i32, i32, i32
  }
  func.func @transform_3(%arg0: i32) -> (i32, i32) {
    %c0_i32 = arith.constant 0 : i32
    %c0_i32_0 = arith.constant 0 : i32
    return %c0_i32, %arg0 : i32, i32
  }
  func.func @transform_4(%arg0: i32) -> (i32, i32) {
    %c0_i32 = arith.constant 0 : i32
    %c0_i32_0 = arith.constant 0 : i32
    return %c0_i32, %arg0 : i32, i32
  }
  func.func @transform_5(%arg0: i32) -> (i32, i32) {
    %c0_i32 = arith.constant 0 : i32
    %c0_i32_0 = arith.constant 0 : i32
    return %c0_i32, %arg0 : i32, i32
  }
}

</mosaic_0001>

<llo_original>
// kernel: resnet_block_forward.3
$region0: #{resnet_block_forward.3}
  #allocation0 [shape = 'u32[]', space=smem, size = 0x4, offset = 0x4, fixed_abs, tag = 'smem constant byte address 0x4 - core index']
  #allocation1 [shape = 'u32[144,128]{1,0:T(1,128)}', space=vmem, size = 0x12000, scoped, tag = 'internal scratch']
  %s0 = inlined_call_operand.vmem [shape: f32[1,4,896], index: 0, kind: input, shape index: {}, may-alias: {0,1}]
  %s1 = inlined_call_operand.vmem [shape: f32[1,4,896], index: 1, kind: input, shape index: {}, may-alias: {0,1}]
  %s2 = inlined_call_operand.vmem [shape: f32[9,4,4], index: 2, kind: input, shape index: {}]
  %s3 = inlined_call_operand.vmem [shape: f32[1,768], index: 3, kind: input, shape index: {}]
  %s4 = inlined_call_operand.vmem [shape: f32[4,768], index: 4, kind: input, shape index: {}]
  %s5 = inlined_call_operand.vmem [shape: f32[4,768], index: 5, kind: output, shape index: {}]
  %s6 = sld [smem:[#allocation0]]
  $region53: #{resnet_block_forward.3} parent=0
    _
  %s8 = ssub.s32 1, %s6
  %s9 = scalar_select 0, %s8, %s6
  loop: start=0, step=1, limit=4
  $region2: #{resnet_block_forward.3} parent=0 // loop_pre_header
    _
  $region3: #{resnet_block_forward.3} parent=0 // loop_header
    %s11 = sphi 0, %s15
    %p12 = scmp.ge.s32.totalorder %s11, 4
    %s21 = sphi 0, %s23
    %s24 = sphi 0, %s21
    %s25 = sphi 0, %s24
    %s41 = sphi 0, %s25
    %s51 = sphi 0, %s53
    %s54 = sphi 0, %s51
    %s55 = sphi 0, %s54
    %s71 = sphi 0, %s55
    %s75 = sphi 0, %s75
    %s77 = sphi 0, %s75
    %s78 = sphi 0, %s77
    %s92 = sphi 0, %s78
    %s98 = sphi 0, %s100
    %s101 = sphi 0, %s98
    %s102 = sphi 0, %s101
    %s118 = sphi 0, %s102
    %s124 = sphi 0, %s126
    %s127 = sphi 0, %s124
    %s128 = sphi 0, %s127
    %s144 = sphi 0, %s128
    %s150 = sphi 0, %s152
    %s153 = sphi 0, %s150
    %s154 = sphi 0, %s153
    %s170 = sphi 0, %s154
  $region4: #{resnet_block_forward.3} parent=0 // loop_header_branch
    %14 = sbr.rel (%p12) target = $region8
  $region5: #{resnet_block_forward.3} parent=0 // loop_body
    %s16 = ssub.s32 %s11, 1
    %s17 = ssub.s32 %s11, 2
    %s18 = sadd.s32 %s11, 1
    %s19 = ssub.s32 %s11, %s18
    %p20 = scmp.eq.s32.totalorder %s19, 0
    %s22 = sadd.s32 %s21, 1
    %s23 = scalar_select %p20, %s21, %s22
    %p26 = pneg %p20
    %p27 = scmp.eq.s32.totalorder %s11, 1
    %p28 = por %p26, %p27
    %p29 = scmp.ne.s32.totalorder %s21, %s24
    %p30 = scmp.eq.s32.totalorder %s11, 0
    %p31 = por %p29, %p30
    %p32 = scmp.ne.s32.totalorder %s21, %s24
    %p33 = scmp.eq.s32.totalorder %s16, 1
    %p34 = por %p32, %p33
    %p35 = scmp.ne.s32.totalorder %s24, %s25
    %p36 = scmp.eq.s32.totalorder %s16, 0
    %p37 = por %p35, %p36
    %p38 = scmp.ne.s32.totalorder %s24, %s25
    %p39 = scmp.eq.s32.totalorder %s17, 1
    %p40 = por %p38, %p39
    %p42 = scmp.ne.s32.totalorder %s25, %s41
    %p43 = scmp.eq.s32.totalorder %s17, 0
    %p44 = por %p42, %p43
    %s45 = sadd.s32 %s11, 1
    %s46 = smul.u32 %s45, 3
    %s47 = sadd.s32 %s18, 1
    %s48 = smul.u32 %s47, 3
    %s49 = ssub.s32 %s46, %s48
    %p50 = scmp.eq.s32.totalorder %s49, 0
    %s52 = sadd.s32 %s51, 1
    %s53 = scalar_select %p50, %s51, %s52
    %p56 = pneg %p50
    %p57 = scmp.eq.s32.totalorder %s11, 1
    %p58 = por %p56, %p57
    %p59 = scmp.ne.s32.totalorder %s51, %s54
    %p60 = scmp.eq.s32.totalorder %s11, 0
    %p61 = por %p59, %p60
    %p62 = scmp.ne.s32.totalorder %s51, %s54
    %p63 = scmp.eq.s32.totalorder %s16, 1
    %p64 = por %p62, %p63
    %p65 = scmp.ne.s32.totalorder %s54, %s55
    %p66 = scmp.eq.s32.totalorder %s16, 0
    %p67 = por %p65, %p66
    %p68 = scmp.ne.s32.totalorder %s54, %s55
    %p69 = scmp.eq.s32.totalorder %s17, 1
    %p70 = por %p68, %p69
    %p72 = scmp.ne.s32.totalorder %s55, %s71
    %p73 = scmp.eq.s32.totalorder %s17, 0
    %p74 = por %p72, %p73
    %s76 = sadd.s32 %s75, 1
    %p79 = scmp.eq.s32.totalorder %s11, 1
    %p80 = scmp.ne.s32.totalorder %s75, %s77
    %p81 = scmp.eq.s32.totalorder %s11, 0
    %p82 = por %p80, %p81
    %p83 = scmp.ne.s32.totalorder %s75, %s77
    %p84 = scmp.eq.s32.totalorder %s16, 1
    %p85 = por %p83, %p84
    %p86 = scmp.ne.s32.totalorder %s77, %s78
    %p87 = scmp.eq.s32.totalorder %s16, 0
    %p88 = por %p86, %p87
    %p89 = scmp.ne.s32.totalorder %s77, %s78
    %p90 = scmp.eq.s32.totalorder %s17, 1
    %p91 = por %p89, %p90
    %p93 = scmp.ne.s32.totalorder %s78, %s92
    %p94 = scmp.eq.s32.totalorder %s17, 0
    %p95 = por %p93, %p94
    %s96 = ssub.s32 %s11, %s18
    %p97 = scmp.eq.s32.totalorder %s96, 0
    %s99 = sadd.s32 %s98, 1
    %s100 = scalar_select %p97, %s98, %s99
    %p103 = pneg %p97
    %p104 = scmp.eq.s32.totalorder %s11, 1
    %p105 = por %p103, %p104
    %p106 = scmp.ne.s32.totalorder %s98, %s101
    %p107 = scmp.eq.s32.totalorder %s11, 0
    %p108 = por %p106, %p107
    %p109 = scmp.ne.s32.totalorder %s98, %s101
    %p110 = scmp.eq.s32.totalorder %s16, 1
    %p111 = por %p109, %p110
    %p112 = scmp.ne.s32.totalorder %s101, %s102
    %p113 = scmp.eq.s32.totalorder %s16, 0
    %p114 = por %p112, %p113
    %p115 = scmp.ne.s32.totalorder %s101, %s102
    %p116 = scmp.eq.s32.totalorder %s17, 1
    %p117 = por %p115, %p116
    %p119 = scmp.ne.s32.totalorder %s102, %s118
    %p120 = scmp.eq.s32.totalorder %s17, 0
    %p121 = por %p119, %p120
    %s122 = ssub.s32 %s11, %s18
    %p123 = scmp.eq.s32.totalorder %s122, 0
    %s125 = sadd.s32 %s124, 1
    %s126 = scalar_select %p123, %s124, %s125
    %p129 = pneg %p123
    %p130 = scmp.eq.s32.totalorder %s11, 1
    %p131 = por %p129, %p130
    %p132 = scmp.ne.s32.totalorder %s124, %s127
    %p133 = scmp.eq.s32.totalorder %s11, 0
    %p134 = por %p132, %p133
    %p135 = scmp.ne.s32.totalorder %s124, %s127
    %p136 = scmp.eq.s32.totalorder %s16, 1
    %p137 = por %p135, %p136
    %p138 = scmp.ne.s32.totalorder %s127, %s128
    %p139 = scmp.eq.s32.totalorder %s16, 0
    %p140 = por %p138, %p139
    %p141 = scmp.ne.s32.totalorder %s127, %s128
    %p142 = scmp.eq.s32.totalorder %s17, 1
    %p143 = por %p141, %p142
    %p145 = scmp.ne.s32.totalorder %s128, %s144
    %p146 = scmp.eq.s32.totalorder %s17, 0
    %p147 = por %p145, %p146
    %s148 = ssub.s32 %s11, %s18
    %p149 = scmp.eq.s32.totalorder %s148, 0
    %s151 = sadd.s32 %s150, 1
    %s152 = scalar_select %p149, %s150, %s151
    %p155 = pneg %p149
    %p156 = scmp.eq.s32.totalorder %s11, 1
    %p157 = por %p155, %p156
    %p158 = scmp.ne.s32.totalorder %s150, %s153
    %p159 = scmp.eq.s32.totalorder %s11, 0
    %p160 = por %p158, %p159
    %p161 = scmp.ne.s32.totalorder %s150, %s153
    %p162 = scmp.eq.s32.totalorder %s16, 1
    %p163 = por %p161, %p162
    %p164 = scmp.ne.s32.totalorder %s153, %s154
    %p165 = scmp.eq.s32.totalorder %s16, 0
    %p166 = por %p164, %p165
    %p167 = scmp.ne.s32.totalorder %s153, %s154
    %p168 = scmp.eq.s32.totalorder %s17, 1
    %p169 = por %p167, %p168
    %p171 = scmp.ne.s32.totalorder %s154, %s170
    %p172 = scmp.eq.s32.totalorder %s17, 0
    %p173 = por %p171, %p172
    %p174 = scmp.le.s32.totalorder 1, %s11
    %p175 = scmp.lt.s32.totalorder %s11, 3
    %p176 = pnand %p174, %p175
    %p177 = pneg %p176
    // Predicated region
    $region9: #{resnet_block_forward.3} parent=5 // pred_check
      _
    $region10: #{resnet_block_forward.3} parent=5 // pred_check_branch
      %179 = sbr.rel (%p176) target = $region12
    $region11: #{resnet_block_forward.3} parent=5 // pred_region
      %s180 = ssub.s32 %s11, 1
      // Predicated region
      $region13: #{resnet_block_forward.3} parent=11 // pred_check
        %p181 = pneg %p88
      $region14: #{resnet_block_forward.3} parent=11 // pred_check_branch
        %183 = sbr.rel (%p181) target = $region16
      $region15: #{resnet_block_forward.3} parent=11 // pred_region
        _
      $region16: #{resnet_block_forward.3} parent=11 // pred_fallthru
        _
    $region12: #{resnet_block_forward.3} parent=5 // pred_fallthru
      _
    %p184 = scmp.lt.s32.totalorder %s11, 2
    // Predicated region
    $region17: #{resnet_block_forward.3} parent=5 // pred_check
      %p185 = pneg %p184
    $region18: #{resnet_block_forward.3} parent=5 // pred_check_branch
      %187 = sbr.rel (%p185) target = $region20
    $region19: #{resnet_block_forward.3} parent=5 // pred_region
      // Predicated region
      $region21: #{resnet_block_forward.3} parent=19 // pred_check
        %p188 = pneg %p31
      $region22: #{resnet_block_forward.3} parent=19 // pred_check_branch
        %190 = sbr.rel (%p188) target = $region24
      $region23: #{resnet_block_forward.3} parent=19 // pred_region
        %s191 = smul.u32 3, %s11
        %s192 = ssub.s32 7, %s191
        %p193 = scmp.lt.s32.totalorder %s192, 3
        %s194 = scalar_select %p193, %s192, 3
        %s195 = smul.u32 64, %s194
        %p196 = scmp.lt.s32.totalorder %s191, 6
        %s197 = scalar_select %p196, %s191, 6
        %s198 = smul.addr %s197, 4
        %s199 = scalar_lea.vmem %s0, %s198
        %s200 = smul.u32 3, %s11
        %s201 = ssub.s32 7, %s200
        %p202 = scmp.lt.s32.totalorder %s201, 3
        %s203 = scalar_select %p202, %s201, 3
        %s204 = smul.u32 64, %s203
      $region24: #{resnet_block_forward.3} parent=19 // pred_fallthru
        _
      // Predicated region
      $region25: #{resnet_block_forward.3} parent=19 // pred_check
        %p205 = pneg %p61
      $region26: #{resnet_block_forward.3} parent=19 // pred_check_branch
        %207 = sbr.rel (%p205) target = $region28
      $region27: #{resnet_block_forward.3} parent=19 // pred_region
        %s208 = sadd.s32 %s11, 1
        %s209 = smul.u32 %s208, 3
        %p210 = scmp.lt.s32.totalorder %s209, 6
        %s211 = scalar_select %p210, %s209, 6
        %s212 = smul.addr %s211, 4
        %s213 = scalar_lea.vmem %s1, %s212
        %s214 = sadd.s32 %s11, 1
        %s215 = smul.u32 %s214, 3
      $region28: #{resnet_block_forward.3} parent=19 // pred_fallthru
        _
      // Predicated region
      $region29: #{resnet_block_forward.3} parent=19 // pred_check
        %p216 = pneg %p108
      $region30: #{resnet_block_forward.3} parent=19 // pred_check_branch
        %218 = sbr.rel (%p216) target = $region32
      $region31: #{resnet_block_forward.3} parent=19 // pred_region
        %s219 = smul.u32 3, %s11
        %p220 = scmp.lt.s32.totalorder %s219, 5
        %s221 = scalar_select %p220, %s219, 5
        %s222 = scalar_lea.vmem %s3, %s221
        %s223 = smul.u32 3, %s11
      $region32: #{resnet_block_forward.3} parent=19 // pred_fallthru
        _
      // Predicated region
      $region33: #{resnet_block_forward.3} parent=19 // pred_check
        %p224 = pneg %p134
      $region34: #{resnet_block_forward.3} parent=19 // pred_check_branch
        %226 = sbr.rel (%p224) target = $region36
      $region35: #{resnet_block_forward.3} parent=19 // pred_region
        %s227 = smul.u32 3, %s11
        %p228 = scmp.lt.s32.totalorder %s227, 5
        %s229 = scalar_select %p228, %s227, 5
        %s230 = smul.addr %s229, 4
        %s231 = scalar_lea.vmem %s4, %s230
        %s232 = smul.u32 3, %s11
      $region36: #{resnet_block_forward.3} parent=19 // pred_fallthru
        _
    $region20: #{resnet_block_forward.3} parent=5 // pred_fallthru
      _
    %p233 = scmp.le.s32.totalorder 1, %s11
    %p234 = scmp.lt.s32.totalorder %s11, 3
    %p235 = pnand %p233, %p234
    %p236 = pneg %p235
    // Predicated region
    $region37: #{resnet_block_forward.3} parent=5 // pred_check
      _
    $region38: #{resnet_block_forward.3} parent=5 // pred_check_branch
      %238 = sbr.rel (%p235) target = $region40
    $region39: #{resnet_block_forward.3} parent=5 // pred_region
      %s239 = ssub.s32 %s11, 1
      %s240 = smul.u32 3, %s16
      %s241 = ssub.s32 7, %s240
      %p242 = scmp.lt.s32.totalorder %s241, 3
      %s243 = scalar_select %p242, %s241, 3
      %s244 = smul.u32 64, %s243
      %p245 = scmp.lt.s32.totalorder %s240, 6
      %s246 = scalar_select %p245, %s240, 6
      %s247 = smul.addr %s246, 4
      %s248 = scalar_lea.vmem %s0, %s247
      %p249 = pneg %p37
      %p250 = pneg %p34
      %s251 = sadd.s32 %s16, 1
      %s252 = smul.u32 %s251, 3
      %p253 = scmp.lt.s32.totalorder %s252, 6
      %s254 = scalar_select %p253, %s252, 6
      %s255 = smul.addr %s254, 4
      %s256 = scalar_lea.vmem %s1, %s255
      %p257 = pneg %p67
      %p258 = pneg %p64
      %p259 = pneg %p88
      %p260 = pneg %p85
      %s261 = smul.u32 3, %s16
      %p262 = scmp.lt.s32.totalorder %s261, 5
      %s263 = scalar_select %p262, %s261, 5
      %s264 = scalar_lea.vmem %s3, %s263
      %p265 = pneg %p114
      %p266 = pneg %p111
      %s267 = smul.u32 3, %s16
      %p268 = scmp.lt.s32.totalorder %s267, 5
      %s269 = scalar_select %p268, %s267, 5
      %s270 = smul.addr %s269, 4
      %s271 = scalar_lea.vmem %s4, %s270
      %p272 = pneg %p140
      %p273 = pneg %p137
      %p274 = pneg %p166
      %p275 = pneg %p163
      %s276 = smul.u32 3, %s16
      %p277 = scmp.lt.s32.totalorder %s276, 5
      %s278 = scalar_select %p277, %s276, 5
      %s279 = smul.addr %s278, 4
      %s280 = scalar_lea.vmem %s5, %s279
      %s281 = smul.u32 3, %s16
      %s282 = ssub.s32 7, %s281
      %p283 = scmp.lt.s32.totalorder %s282, 3
      %s284 = scalar_select %p283, %s282, 3
      %s285 = smul.u32 64, %s284
      %p286 = scmp.lt.s32.totalorder %s281, 6
      %s287 = scalar_select %p286, %s281, 6
      %s288 = smul.addr %s287, 4
      %s289 = scalar_lea.vmem %s0, %s288
      %s290 = smul.u32 3, %s16
      %s291 = ssub.s32 7, %s290
      %p292 = scmp.lt.s32.totalorder %s291, 3
      %s293 = scalar_select %p292, %s291, 3
      %s294 = smul.u32 64, %s293
      %s295 = sadd.s32 %s16, 1
      %s296 = smul.u32 %s295, 3
      %p297 = scmp.lt.s32.totalorder %s296, 6
      %s298 = scalar_select %p297, %s296, 6
      %s299 = smul.addr %s298, 4
      %s300 = scalar_lea.vmem %s1, %s299
      %s301 = sadd.s32 %s16, 1
      %s302 = smul.u32 %s301, 3
      %s303 = smul.u32 3, %s16
      %p304 = scmp.lt.s32.totalorder %s303, 5
      %s305 = scalar_select %p304, %s303, 5
      %s306 = scalar_lea.vmem %s3, %s305
      %s307 = smul.u32 3, %s16
      %s308 = smul.u32 3, %s16
      %p309 = scmp.lt.s32.totalorder %s308, 5
      %s310 = scalar_select %p309, %s308, 5
      %s311 = smul.addr %s310, 4
      %s312 = scalar_lea.vmem %s4, %s311
      %s313 = smul.u32 3, %s16
      %s314 = smul.u32 3, %s16
      %p315 = scmp.lt.s32.totalorder %s314, 5
      %s316 = scalar_select %p315, %s314, 5
      %s317 = smul.addr %s316, 4
      %s318 = scalar_lea.vmem %s5, %s317
      %s319 = smul.u32 3, %s16
      %v320 = vld [vmem:[%s289] sm:$0xff]
      %v321 = vld [vmem:[%s289 + $0x8] sm:$0xf]
      %v322 = vld [vmem:[%s300] sm:$0xf]
      %v325 = vcombine.high %v320, %v320
      %v326 = vld [vmem:[%s2] sm:$0xf]
      %s327 = scalar_lea.vmem %s2, 4
      %v328 = vld [vmem:[%s327] sm:$0xf]
      %330 = vrot.lane.b32.xlu0 %v320, 127
      %v331 = vpop.permute.xlu0 %330
      %332 = vrot.lane.b32.xlu0 %v325, 127
      %v333 = vpop.permute.xlu0 %332
      %334 = vrot.lane.b32.xlu0 %v321, 127
      %v335 = vpop.permute.xlu0 %334
      %336 = vrot.lane.b32.xlu0 %v322, 127
      %v337 = vpop.permute.xlu0 %336
      %vm338 = vcmask 1039360
      %v339 = vsel %vm338, %v331, %v333
      %v340 = vsel %vm338, %v333, %v335
      %v341 = vsel %vm338, %v335, %v337
      %vm342 = vcmask 31744
      %v344 = vsel %vm342, %v328, 0
      %vm346 = vcmask 1043456
      %v347 = vsel %vm346, %v339, 0
      %v349 = vsel %vm346, %v340, 0
      %v351 = vsel %vm346, %v341, 0
      %353 = vmatprep.subr.mxu0 0.0
      %354 = vmatpush1.msra.mxu0 0.0
      %355 = vmatprep.subr.mxu0 0.0
      %356 = vmatpush1.msra.mxu0 0.0
      %357 = vmatprep.subr.mxu0 0.0
      %358 = vmatpush1.msra.mxu0 0.0
      %359 = vmatprep.subr.mxu0 0.0
      %360 = vmatpush1.msra.mxu0 0.0
      %361 = vmatprep.subr.mxu0 0.0
      %362 = vmatpush1.msra.mxu0 0.0
      %363 = vmatprep.subr.mxu0 0.0
      %364 = vmatpush1.msra.mxu0 0.0
      %365 = vmatprep.subr.mxu0 0.0
      %366 = vmatpush1.msra.mxu0 0.0
      %367 = vmatprep.subr.mxu0 0.0
      %368 = vmatpush1.msra.mxu0 0.0
      %369 = vmatprep.subr.mxu0 0.0
      %370 = vmatpush1.msra.mxu0 0.0
      %371 = vmatprep.subr.mxu0 0.0
      %372 = vmatpush1.msra.mxu0 0.0
      %373 = vmatprep.subr.mxu0 0.0
      %374 = vmatpush1.msra.mxu0 0.0
      %375 = vmatprep.subr.mxu0 0.0
      %376 = vmatpush1.msra.mxu0 0.0
      %377 = vmatprep.subr.mxu0 0.0
      %378 = vmatpush1.msra.mxu0 0.0
      %379 = vmatprep.subr.mxu0 0.0
      %380 = vmatpush1.msra.mxu0 0.0
      %381 = vmatprep.subr.mxu0 0.0
      %382 = vmatpush1.msra.mxu0 0.0
      %383 = vmatprep.subr.mxu0 %v349
      %384 = vmatpush1.msra.mxu0 %v347
      %385 = vmatprep.subr.mxu0 0.0
      %386 = vmatpush2.msra.mxu0 0.0
      %387 = vmatprep.subr.mxu0 0.0
      %388 = vmatpush2.msra.mxu0 0.0
      %389 = vmatprep.subr.mxu0 0.0
      %390 = vmatpush2.msra.mxu0 0.0
      %391 = vmatprep.subr.mxu0 0.0
      %392 = vmatpush2.msra.mxu0 0.0
      %393 = vmatprep.subr.mxu0 0.0
      %394 = vmatpush2.msra.mxu0 0.0
      %395 = vmatprep.subr.mxu0 0.0
      %396 = vmatpush2.msra.mxu0 0.0
      %397 = vmatprep.subr.mxu0 0.0
      %398 = vmatpush2.msra.mxu0 0.0
      %399 = vmatprep.subr.mxu0 0.0
      %400 = vmatpush2.msra.mxu0 0.0
      %401 = vmatprep.subr.mxu0 0.0
      %402 = vmatpush2.msra.mxu0 0.0
      %403 = vmatprep.subr.mxu0 0.0
      %404 = vmatpush2.msra.mxu0 0.0
      %405 = vmatprep.subr.mxu0 0.0
      %406 = vmatpush2.msra.mxu0 0.0
      %407 = vmatprep.subr.mxu0 0.0
      %408 = vmatpush2.msra.mxu0 0.0
      %409 = vmatprep.subr.mxu0 0.0
      %410 = vmatpush2.msra.mxu0 0.0
      %411 = vmatprep.subr.mxu0 0.0
      %412 = vmatpush2.msra.mxu0 0.0
      %413 = vmatprep.subr.mxu0 0.0
      %414 = vmatpush2.msra.mxu0 0.0
      %415 = vmatprep.subr.mxu0 0.0
      %416 = vmatpush2.msra.mxu0 0.0
      %417 = vmatprep.mubr.f32.mxu0 0.0
      %418 = vmatmul.mubr.f32.gmra.mxu0 %v344
      %v419 = vpop.f32.mrf.mxu0
      %v420 = vadd.f32 0.0, %v419
      %v421 = vpop.f32.mrf.mxu0
      %v422 = vadd.f32 0.0, %v421
      %423 = vdwg.mxu0
      %424 = vmatprep.subr.mxu0 0.0
      %425 = vmatpush1.msra.mxu0 0.0
      %426 = vmatprep.subr.mxu0 0.0
      %427 = vmatpush1.msra.mxu0 0.0
      %428 = vmatprep.subr.mxu0 0.0
      %429 = vmatpush1.msra.mxu0 0.0
      %430 = vmatprep.subr.mxu0 0.0
      %431 = vmatpush1.msra.mxu0 0.0
      %432 = vmatprep.subr.mxu0 0.0
      %433 = vmatpush1.msra.mxu0 0.0
      %434 = vmatprep.subr.mxu0 0.0
      %435 = vmatpush1.msra.mxu0 0.0
      %436 = vmatprep.subr.mxu0 0.0
      %437 = vmatpush1.msra.mxu0 0.0
      %438 = vmatprep.subr.mxu0 0.0
      %439 = vmatpush1.msra.mxu0 0.0
      %440 = vmatprep.subr.mxu0 0.0
      %441 = vmatpush1.msra.mxu0 0.0
      %442 = vmatprep.subr.mxu0 0.0
      %443 = vmatpush1.msra.mxu0 0.0
      %444 = vmatprep.subr.mxu0 0.0
      %445 = vmatpush1.msra.mxu0 0.0
      %446 = vmatprep.subr.mxu0 0.0
      %447 = vmatpush1.msra.mxu0 0.0
      %448 = vmatprep.subr.mxu0 0.0
      %449 = vmatpush1.msra.mxu0 0.0
      %450 = vmatprep.subr.mxu0 0.0
      %451 = vmatpush1.msra.mxu0 0.0
      %452 = vmatprep.subr.mxu0 0.0
      %453 = vmatpush1.msra.mxu0 0.0
      %454 = vmatprep.subr.mxu0 0.0
      %455 = vmatpush1.msra.mxu0 %v351
      %456 = vmatprep.subr.mxu0 0.0
      %457 = vmatpush2.msra.mxu0 0.0
      %458 = vmatprep.subr.mxu0 0.0
      %459 = vmatpush2.msra.mxu0 0.0
      %460 = vmatprep.subr.mxu0 0.0
      %461 = vmatpush2.msra.mxu0 0.0
      %462 = vmatprep.subr.mxu0 0.0
      %463 = vmatpush2.msra.mxu0 0.0
      %464 = vmatprep.subr.mxu0 0.0
      %465 = vmatpush2.msra.mxu0 0.0
      %466 = vmatprep.subr.mxu0 0.0
      %467 = vmatpush2.msra.mxu0 0.0
      %468 = vmatprep.subr.mxu0 0.0
      %469 = vmatpush2.msra.mxu0 0.0
      %470 = vmatprep.subr.mxu0 0.0
      %471 = vmatpush2.msra.mxu0 0.0
      %472 = vmatprep.subr.mxu0 0.0
      %473 = vmatpush2.msra.mxu0 0.0
      %474 = vmatprep.subr.mxu0 0.0
      %475 = vmatpush2.msra.mxu0 0.0
      %476 = vmatprep.subr.mxu0 0.0
      %477 = vmatpush2.msra.mxu0 0.0
      %478 = vmatprep.subr.mxu0 0.0
      %479 = vmatpush2.msra.mxu0 0.0
      %480 = vmatprep.subr.mxu0 0.0
      %481 = vmatpush2.msra.mxu0 0.0
      %482 = vmatprep.subr.mxu0 0.0
      %483 = vmatpush2.msra.mxu0 0.0
      %484 = vmatprep.subr.mxu0 0.0
      %485 = vmatpush2.msra.mxu0 0.0
      %486 = vmatprep.subr.mxu0 0.0
      %487 = vmatpush2.msra.mxu0 0.0
      %488 = vmatprep.mubr.f32.mxu0 0.0
      %489 = vmatmul.mubr.f32.gmra.mxu0 %v344
      %v490 = vpop.f32.mrf.mxu0
      %v491 = vadd.f32 0.0, %v490
      %v492 = vpop.f32.mrf.mxu0
      %493 = vdwg.mxu0
      %v495 = vsel %vm342, %v326, 0
      %v497 = vsel %vm346, %v320, 0
      %v499 = vsel %vm346, %v325, 0
      %v501 = vsel %vm346, %v321, 0
      %503 = vmatprep.subr.mxu0 0.0
      %504 = vmatpush1.msra.mxu0 0.0
      %505 = vmatprep.subr.mxu0 0.0
      %506 = vmatpush1.msra.mxu0 0.0
      %507 = vmatprep.subr.mxu0 0.0
      %508 = vmatpush1.msra.mxu0 0.0
      %509 = vmatprep.subr.mxu0 0.0
      %510 = vmatpush1.msra.mxu0 0.0
      %511 = vmatprep.subr.mxu0 0.0
      %512 = vmatpush1.msra.mxu0 0.0
      %513 = vmatprep.subr.mxu0 0.0
      %514 = vmatpush1.msra.mxu0 0.0
      %515 = vmatprep.subr.mxu0 0.0
      %516 = vmatpush1.msra.mxu0 0.0
      %517 = vmatprep.subr.mxu0 0.0
      %518 = vmatpush1.msra.mxu0 0.0
      %519 = vmatprep.subr.mxu0 0.0
      %520 = vmatpush1.msra.mxu0 0.0
      %521 = vmatprep.subr.mxu0 0.0
      %522 = vmatpush1.msra.mxu0 0.0
      %523 = vmatprep.subr.mxu0 0.0
      %524 = vmatpush1.msra.mxu0 0.0
      %525 = vmatprep.subr.mxu0 0.0
      %526 = vmatpush1.msra.mxu0 0.0
      %527 = vmatprep.subr.mxu0 0.0
      %528 = vmatpush1.msra.mxu0 0.0
      %529 = vmatprep.subr.mxu0 0.0
      %530 = vmatpush1.msra.mxu0 0.0
      %531 = vmatprep.subr.mxu0 0.0
      %532 = vmatpush1.msra.mxu0 0.0
      %533 = vmatprep.subr.mxu0 %v499
      %534 = vmatpush1.msra.mxu0 %v497
      %535 = vmatprep.subr.mxu0 0.0
      %536 = vmatpush2.msra.mxu0 0.0
      %537 = vmatprep.subr.mxu0 0.0
      %538 = vmatpush2.msra.mxu0 0.0
      %539 = vmatprep.subr.mxu0 0.0
      %540 = vmatpush2.msra.mxu0 0.0
      %541 = vmatprep.subr.mxu0 0.0
      %542 = vmatpush2.msra.mxu0 0.0
      %543 = vmatprep.subr.mxu0 0.0
      %544 = vmatpush2.msra.mxu0 0.0
      %545 = vmatprep.subr.mxu0 0.0
      %546 = vmatpush2.msra.mxu0 0.0
      %547 = vmatprep.subr.mxu0 0.0
      %548 = vmatpush2.msra.mxu0 0.0
      %549 = vmatprep.subr.mxu0 0.0
      %550 = vmatpush2.msra.mxu0 0.0
      %551 = vmatprep.subr.mxu0 0.0
      %552 = vmatpush2.msra.mxu0 0.0
      %553 = vmatprep.subr.mxu0 0.0
      %554 = vmatpush2.msra.mxu0 0.0
      %555 = vmatprep.subr.mxu0 0.0
      %556 = vmatpush2.msra.mxu0 0.0
      %557 = vmatprep.subr.mxu0 0.0
      %558 = vmatpush2.msra.mxu0 0.0
      %559 = vmatprep.subr.mxu0 0.0
      %560 = vmatpush2.msra.mxu0 0.0
      %561 = vmatprep.subr.mxu0 0.0
      %562 = vmatpush2.msra.mxu0 0.0
      %563 = vmatprep.subr.mxu0 0.0
      %564 = vmatpush2.msra.mxu0 0.0
      %565 = vmatprep.subr.mxu0 0.0
      %566 = vmatpush2.msra.mxu0 0.0
      %567 = vmatprep.mubr.f32.mxu0 0.0
      %568 = vmatmul.mubr.f32.gmra.mxu0 %v495
      %v569 = vpop.f32.mrf.mxu0
      %v570 = vadd.f32 %v420, %v569
      %v571 = vpop.f32.mrf.mxu0
      %v572 = vadd.f32 %v422, %v571
      %573 = vdwg.mxu0
      %574 = vmatprep.subr.mxu0 0.0
      %575 = vmatpush1.msra.mxu0 0.0
      %576 = vmatprep.subr.mxu0 0.0
      %577 = vmatpush1.msra.mxu0 0.0
      %578 = vmatprep.subr.mxu0 0.0
      %579 = vmatpush1.msra.mxu0 0.0
      %580 = vmatprep.subr.mxu0 0.0
      %581 = vmatpush1.msra.mxu0 0.0
      %582 = vmatprep.subr.mxu0 0.0
      %583 = vmatpush1.msra.mxu0 0.0
      %584 = vmatprep.subr.mxu0 0.0
      %585 = vmatpush1.msra.mxu0 0.0
      %586 = vmatprep.subr.mxu0 0.0
      %587 = vmatpush1.msra.mxu0 0.0
      %588 = vmatprep.subr.mxu0 0.0
      %589 = vmatpush1.msra.mxu0 0.0
      %590 = vmatprep.subr.mxu0 0.0
      %591 = vmatpush1.msra.mxu0 0.0
      %592 = vmatprep.subr.mxu0 0.0
      %593 = vmatpush1.msra.mxu0 0.0
      %594 = vmatprep.subr.mxu0 0.0
      %595 = vmatpush1.msra.mxu0 0.0
      %596 = vmatprep.subr.mxu0 0.0
      %597 = vmatpush1.msra.mxu0 0.0
      %598 = vmatprep.subr.mxu0 0.0
      %599 = vmatpush1.msra.mxu0 0.0
      %600 = vmatprep.subr.mxu0 0.0
      %601 = vmatpush1.msra.mxu0 0.0
      %602 = vmatprep.subr.mxu0 0.0
      %603 = vmatpush1.msra.mxu0 0.0
      %604 = vmatprep.subr.mxu0 0.0
      %605 = vmatpush1.msra.mxu0 %v501
      %606 = vmatprep.subr.mxu0 0.0
      %607 = vmatpush2.msra.mxu0 0.0
      %608 = vmatprep.subr.mxu0 0.0
      %609 = vmatpush2.msra.mxu0 0.0
      %610 = vmatprep.subr.mxu0 0.0
      %611 = vmatpush2.msra.mxu0 0.0
      %612 = vmatprep.subr.mxu0 0.0
      %613 = vmatpush2.msra.mxu0 0.0
      %614 = vmatprep.subr.mxu0 0.0
      %615 = vmatpush2.msra.mxu0 0.0
      %616 = vmatprep.subr.mxu0 0.0
      %617 = vmatpush2.msra.mxu0 0.0
      %618 = vmatprep.subr.mxu0 0.0
      %619 = vmatpush2.msra.mxu0 0.0
      %620 = vmatprep.subr.mxu0 0.0
      %621 = vmatpush2.msra.mxu0 0.0
      %622 = vmatprep.subr.mxu0 0.0
      %623 = vmatpush2.msra.mxu0 0.0
      %624 = vmatprep.subr.mxu0 0.0
      %625 = vmatpush2.msra.mxu0 0.0
      %626 = vmatprep.subr.mxu0 0.0
      %627 = vmatpush2.msra.mxu0 0.0
      %628 = vmatprep.subr.mxu0 0.0
      %629 = vmatpush2.msra.mxu0 0.0
      %630 = vmatprep.subr.mxu0 0.0
      %631 = vmatpush2.msra.mxu0 0.0
      %632 = vmatprep.subr.mxu0 0.0
      %633 = vmatpush2.msra.mxu0 0.0
      %634 = vmatprep.subr.mxu0 0.0
      %635 = vmatpush2.msra.mxu0 0.0
      %636 = vmatprep.subr.mxu0 0.0
      %637 = vmatpush2.msra.mxu0 0.0
      %638 = vmatprep.mubr.f32.mxu0 0.0
      %639 = vmatmul.mubr.f32.gmra.mxu0 %v495
      %v640 = vpop.f32.mrf.mxu0
      %v641 = vadd.f32 %v491, %v640
      %v642 = vpop.f32.mrf.mxu0
      %643 = vdwg.mxu0
      %s644 = scalar_lea.vmem %s2, 8
      %v645 = vld [vmem:[%s644] sm:$0xf]
      %646 = vrot.lane.b32.xlu0 %v320, 126
      %v647 = vpop.permute.xlu0 %646
      %648 = vrot.lane.b32.xlu0 %v325, 126
      %v649 = vpop.permute.xlu0 %648
      %650 = vrot.lane.b32.xlu0 %v321, 126
      %v651 = vpop.permute.xlu0 %650
      %652 = vrot.lane.b32.xlu0 %v322, 126
      %v653 = vpop.permute.xlu0 %652
      %vm654 = vcmask 1031168
      %v655 = vsel %vm654, %v647, %v649
      %v656 = vsel %vm654, %v649, %v651
      %v657 = vsel %vm654, %v651, %v653
      %v659 = vsel %vm342, %v645, 0
      %v661 = vsel %vm346, %v655, 0
      %v663 = vsel %vm346, %v656, 0
      %v665 = vsel %vm346, %v657, 0
      %667 = vmatprep.subr.mxu0 0.0
      %668 = vmatpush1.msra.mxu0 0.0
      %669 = vmatprep.subr.mxu0 0.0
      %670 = vmatpush1.msra.mxu0 0.0
      %671 = vmatprep.subr.mxu0 0.0
      %672 = vmatpush1.msra.mxu0 0.0
      %673 = vmatprep.subr.mxu0 0.0
      %674 = vmatpush1.msra.mxu0 0.0
      %675 = vmatprep.subr.mxu0 0.0
      %676 = vmatpush1.msra.mxu0 0.0
      %677 = vmatprep.subr.mxu0 0.0
      %678 = vmatpush1.msra.mxu0 0.0
      %679 = vmatprep.subr.mxu0 0.0
      %680 = vmatpush1.msra.mxu0 0.0
      %681 = vmatprep.subr.mxu0 0.0
      %682 = vmatpush1.msra.mxu0 0.0
      %683 = vmatprep.subr.mxu0 0.0
      %684 = vmatpush1.msra.mxu0 0.0
      %685 = vmatprep.subr.mxu0 0.0
      %686 = vmatpush1.msra.mxu0 0.0
      %687 = vmatprep.subr.mxu0 0.0
      %688 = vmatpush1.msra.mxu0 0.0
      %689 = vmatprep.subr.mxu0 0.0
      %690 = vmatpush1.msra.mxu0 0.0
      %691 = vmatprep.subr.mxu0 0.0
      %692 = vmatpush1.msra.mxu0 0.0
      %693 = vmatprep.subr.mxu0 0.0
      %694 = vmatpush1.msra.mxu0 0.0
      %695 = vmatprep.subr.mxu0 0.0
      %696 = vmatpush1.msra.mxu0 0.0
      %697 = vmatprep.subr.mxu0 %v663
      %698 = vmatpush1.msra.mxu0 %v661
      %699 = vmatprep.subr.mxu0 0.0
      %700 = vmatpush2.msra.mxu0 0.0
      %701 = vmatprep.subr.mxu0 0.0
      %702 = vmatpush2.msra.mxu0 0.0
      %703 = vmatprep.subr.mxu0 0.0
      %704 = vmatpush2.msra.mxu0 0.0
      %705 = vmatprep.subr.mxu0 0.0
      %706 = vmatpush2.msra.mxu0 0.0
      %707 = vmatprep.subr.mxu0 0.0
      %708 = vmatpush2.msra.mxu0 0.0
      %709 = vmatprep.subr.mxu0 0.0
      %710 = vmatpush2.msra.mxu0 0.0
      %711 = vmatprep.subr.mxu0 0.0
      %712 = vmatpush2.msra.mxu0 0.0
      %713 = vmatprep.subr.mxu0 0.0
      %714 = vmatpush2.msra.mxu0 0.0
      %715 = vmatprep.subr.mxu0 0.0
      %716 = vmatpush2.msra.mxu0 0.0
      %717 = vmatprep.subr.mxu0 0.0
      %718 = vmatpush2.msra.mxu0 0.0
      %719 = vmatprep.subr.mxu0 0.0
      %720 = vmatpush2.msra.mxu0 0.0
      %721 = vmatprep.subr.mxu0 0.0
      %722 = vmatpush2.msra.mxu0 0.0
      %723 = vmatprep.subr.mxu0 0.0
      %724 = vmatpush2.msra.mxu0 0.0
      %725 = vmatprep.subr.mxu0 0.0
      %726 = vmatpush2.msra.mxu0 0.0
      %727 = vmatprep.subr.mxu0 0.0
      %728 = vmatpush2.msra.mxu0 0.0
      %729 = vmatprep.subr.mxu0 0.0
      %730 = vmatpush2.msra.mxu0 0.0
      %731 = vmatprep.mubr.f32.mxu0 0.0
      %732 = vmatmul.mubr.f32.gmra.mxu0 %v659
      %v733 = vpop.f32.mrf.mxu0
      %v734 = vadd.f32 0.0, %v733
      %v735 = vpop.f32.mrf.mxu0
      %v736 = vadd.f32 0.0, %v735
      %737 = vdwg.mxu0
      %738 = vmatprep.subr.mxu0 0.0
      %739 = vmatpush1.msra.mxu0 0.0
      %740 = vmatprep.subr.mxu0 0.0
      %741 = vmatpush1.msra.mxu0 0.0
      %742 = vmatprep.subr.mxu0 0.0
      %743 = vmatpush1.msra.mxu0 0.0
      %744 = vmatprep.subr.mxu0 0.0
      %745 = vmatpush1.msra.mxu0 0.0
      %746 = vmatprep.subr.mxu0 0.0
      %747 = vmatpush1.msra.mxu0 0.0
      %748 = vmatprep.subr.mxu0 0.0
      %749 = vmatpush1.msra.mxu0 0.0
      %750 = vmatprep.subr.mxu0 0.0
      %751 = vmatpush1.msra.mxu0 0.0
      %752 = vmatprep.subr.mxu0 0.0
      %753 = vmatpush1.msra.mxu0 0.0
      %754 = vmatprep.subr.mxu0 0.0
      %755 = vmatpush1.msra.mxu0 0.0
      %756 = vmatprep.subr.mxu0 0.0
      %757 = vmatpush1.msra.mxu0 0.0
      %758 = vmatprep.subr.mxu0 0.0
      %759 = vmatpush1.msra.mxu0 0.0
      %760 = vmatprep.subr.mxu0 0.0
      %761 = vmatpush1.msra.mxu0 0.0
      %762 = vmatprep.subr.mxu0 0.0
      %763 = vmatpush1.msra.mxu0 0.0
      %764 = vmatprep.subr.mxu0 0.0
      %765 = vmatpush1.msra.mxu0 0.0
      %766 = vmatprep.subr.mxu0 0.0
      %767 = vmatpush1.msra.mxu0 0.0
      %768 = vmatprep.subr.mxu0 0.0
      %769 = vmatpush1.msra.mxu0 %v665
      %770 = vmatprep.subr.mxu0 0.0
      %771 = vmatpush2.msra.mxu0 0.0
      %772 = vmatprep.subr.mxu0 0.0
      %773 = vmatpush2.msra.mxu0 0.0
      %774 = vmatprep.subr.mxu0 0.0
      %775 = vmatpush2.msra.mxu0 0.0
      %776 = vmatprep.subr.mxu0 0.0
      %777 = vmatpush2.msra.mxu0 0.0
      %778 = vmatprep.subr.mxu0 0.0
      %779 = vmatpush2.msra.mxu0 0.0
      %780 = vmatprep.subr.mxu0 0.0
      %781 = vmatpush2.msra.mxu0 0.0
      %782 = vmatprep.subr.mxu0 0.0
      %783 = vmatpush2.msra.mxu0 0.0
      %784 = vmatprep.subr.mxu0 0.0
      %785 = vmatpush2.msra.mxu0 0.0
      %786 = vmatprep.subr.mxu0 0.0
      %787 = vmatpush2.msra.mxu0 0.0
      %788 = vmatprep.subr.mxu0 0.0
      %789 = vmatpush2.msra.mxu0 0.0
      %790 = vmatprep.subr.mxu0 0.0
      %791 = vmatpush2.msra.mxu0 0.0
      %792 = vmatprep.subr.mxu0 0.0
      %793 = vmatpush2.msra.mxu0 0.0
      %794 = vmatprep.subr.mxu0 0.0
      %795 = vmatpush2.msra.mxu0 0.0
      %796 = vmatprep.subr.mxu0 0.0
      %797 = vmatpush2.msra.mxu0 0.0
      %798 = vmatprep.subr.mxu0 0.0
      %799 = vmatpush2.msra.mxu0 0.0
      %800 = vmatprep.subr.mxu0 0.0
      %801 = vmatpush2.msra.mxu0 0.0
      %802 = vmatprep.mubr.f32.mxu0 0.0
      %803 = vmatmul.mubr.f32.gmra.mxu0 %v659
      %v804 = vpop.f32.mrf.mxu0
      %v805 = vadd.f32 0.0, %v804
      %v806 = vpop.f32.mrf.mxu0
      %807 = vdwg.mxu0
      %v808 = vadd.f32 %v570, %v734
      %v809 = vadd.f32 %v572, %v736
      %v810 = vadd.f32 %v641, %v805
      %s811 = scalar_lea.vmem %s2, 12
      %v812 = vld [vmem:[%s811] sm:$0xf]
      %813 = vrot.lane.b32.xlu0 %v320, 110
      %v814 = vpop.permute.xlu0 %813
      %815 = vrot.lane.b32.xlu0 %v325, 110
      %v816 = vpop.permute.xlu0 %815
      %817 = vrot.lane.b32.xlu0 %v321, 110
      %v818 = vpop.permute.xlu0 %817
      %819 = vrot.lane.b32.xlu0 %v322, 110
      %v820 = vpop.permute.xlu0 %819
      %vm821 = vcmask 900096
      %v822 = vsel %vm821, %v814, %v816
      %v823 = vsel %vm821, %v816, %v818
      %v824 = vsel %vm821, %v818, %v820
      %v826 = vsel %vm342, %v812, 0
      %v828 = vsel %vm346, %v822, 0
      %v830 = vsel %vm346, %v823, 0
      %v832 = vsel %vm346, %v824, 0
      %834 = vmatprep.subr.mxu0 0.0
      %835 = vmatpush1.msra.mxu0 0.0
      %836 = vmatprep.subr.mxu0 0.0
      %837 = vmatpush1.msra.mxu0 0.0
      %838 = vmatprep.subr.mxu0 0.0
      %839 = vmatpush1.msra.mxu0 0.0
      %840 = vmatprep.subr.mxu0 0.0
      %841 = vmatpush1.msra.mxu0 0.0
      %842 = vmatprep.subr.mxu0 0.0
      %843 = vmatpush1.msra.mxu0 0.0
      %844 = vmatprep.subr.mxu0 0.0
      %845 = vmatpush1.msra.mxu0 0.0
      %846 = vmatprep.subr.mxu0 0.0
      %847 = vmatpush1.msra.mxu0 0.0
      %848 = vmatprep.subr.mxu0 0.0
      %849 = vmatpush1.msra.mxu0 0.0
      %850 = vmatprep.subr.mxu0 0.0
      %851 = vmatpush1.msra.mxu0 0.0
      %852 = vmatprep.subr.mxu0 0.0
      %853 = vmatpush1.msra.mxu0 0.0
      %854 = vmatprep.subr.mxu0 0.0
      %855 = vmatpush1.msra.mxu0 0.0
      %856 = vmatprep.subr.mxu0 0.0
      %857 = vmatpush1.msra.mxu0 0.0
      %858 = vmatprep.subr.mxu0 0.0
      %859 = vmatpush1.msra.mxu0 0.0
      %860 = vmatprep.subr.mxu0 0.0
      %861 = vmatpush1.msra.mxu0 0.0
      %862 = vmatprep.subr.mxu0 0.0
      %863 = vmatpush1.msra.mxu0 0.0
      %864 = vmatprep.subr.mxu0 %v830
      %865 = vmatpush1.msra.mxu0 %v828
      %866 = vmatprep.subr.mxu0 0.0
      %867 = vmatpush2.msra.mxu0 0.0
      %868 = vmatprep.subr.mxu0 0.0
      %869 = vmatpush2.msra.mxu0 0.0
      %870 = vmatprep.subr.mxu0 0.0
      %871 = vmatpush2.msra.mxu0 0.0
      %872 = vmatprep.subr.mxu0 0.0
      %873 = vmatpush2.msra.mxu0 0.0
      %874 = vmatprep.subr.mxu0 0.0
      %875 = vmatpush2.msra.mxu0 0.0
      %876 = vmatprep.subr.mxu0 0.0
      %877 = vmatpush2.msra.mxu0 0.0
      %878 = vmatprep.subr.mxu0 0.0
      %879 = vmatpush2.msra.mxu0 0.0
      %880 = vmatprep.subr.mxu0 0.0
      %881 = vmatpush2.msra.mxu0 0.0
      %882 = vmatprep.subr.mxu0 0.0
      %883 = vmatpush2.msra.mxu0 0.0
      %884 = vmatprep.subr.mxu0 0.0
      %885 = vmatpush2.msra.mxu0 0.0
      %886 = vmatprep.subr.mxu0 0.0
      %887 = vmatpush2.msra.mxu0 0.0
      %888 = vmatprep.subr.mxu0 0.0
      %889 = vmatpush2.msra.mxu0 0.0
      %890 = vmatprep.subr.mxu0 0.0
      %891 = vmatpush2.msra.mxu0 0.0
      %892 = vmatprep.subr.mxu0 0.0
      %893 = vmatpush2.msra.mxu0 0.0
      %894 = vmatprep.subr.mxu0 0.0
      %895 = vmatpush2.msra.mxu0 0.0
      %896 = vmatprep.subr.mxu0 0.0
      %897 = vmatpush2.msra.mxu0 0.0
      %898 = vmatprep.mubr.f32.mxu0 0.0
      %899 = vmatmul.mubr.f32.gmra.mxu0 %v826
      %v900 = vpop.f32.mrf.mxu0
      %v901 = vadd.f32 0.0, %v900
      %v902 = vpop.f32.mrf.mxu0
      %v903 = vadd.f32 0.0, %v902
      %904 = vdwg.mxu0
      %905 = vmatprep.subr.mxu0 0.0
      %906 = vmatpush1.msra.mxu0 0.0
      %907 = vmatprep.subr.mxu0 0.0
      %908 = vmatpush1.msra.mxu0 0.0
      %909 = vmatprep.subr.mxu0 0.0
      %910 = vmatpush1.msra.mxu0 0.0
      %911 = vmatprep.subr.mxu0 0.0
      %912 = vmatpush1.msra.mxu0 0.0
      %913 = vmatprep.subr.mxu0 0.0
      %914 = vmatpush1.msra.mxu0 0.0
      %915 = vmatprep.subr.mxu0 0.0
      %916 = vmatpush1.msra.mxu0 0.0
      %917 = vmatprep.subr.mxu0 0.0
      %918 = vmatpush1.msra.mxu0 0.0
      %919 = vmatprep.subr.mxu0 0.0
      %920 = vmatpush1.msra.mxu0 0.0
      %921 = vmatprep.subr.mxu0 0.0
      %922 = vmatpush1.msra.mxu0 0.0
      %923 = vmatprep.subr.mxu0 0.0
      %924 = vmatpush1.msra.mxu0 0.0
      %925 = vmatprep.subr.mxu0 0.0
      %926 = vmatpush1.msra.mxu0 0.0
      %927 = vmatprep.subr.mxu0 0.0
      %928 = vmatpush1.msra.mxu0 0.0
      %929 = vmatprep.subr.mxu0 0.0
      %930 = vmatpush1.msra.mxu0 0.0
      %931 = vmatprep.subr.mxu0 0.0
      %932 = vmatpush1.msra.mxu0 0.0
      %933 = vmatprep.subr.mxu0 0.0
      %934 = vmatpush1.msra.mxu0 0.0
      %935 = vmatprep.subr.mxu0 0.0
      %936 = vmatpush1.msra.mxu0 %v832
      %937 = vmatprep.subr.mxu0 0.0
      %938 = vmatpush2.msra.mxu0 0.0
      %939 = vmatprep.subr.mxu0 0.0
      %940 = vmatpush2.msra.mxu0 0.0
      %941 = vmatprep.subr.mxu0 0.0
      %942 = vmatpush2.msra.mxu0 0.0
      %943 = vmatprep.subr.mxu0 0.0
      %944 = vmatpush2.msra.mxu0 0.0
      %945 = vmatprep.subr.mxu0 0.0
      %946 = vmatpush2.msra.mxu0 0.0
      %947 = vmatprep.subr.mxu0 0.0
      %948 = vmatpush2.msra.mxu0 0.0
      %949 = vmatprep.subr.mxu0 0.0
      %950 = vmatpush2.msra.mxu0 0.0
      %951 = vmatprep.subr.mxu0 0.0
      %952 = vmatpush2.msra.mxu0 0.0
      %953 = vmatprep.subr.mxu0 0.0
      %954 = vmatpush2.msra.mxu0 0.0
      %955 = vmatprep.subr.mxu0 0.0
      %956 = vmatpush2.msra.mxu0 0.0
      %957 = vmatprep.subr.mxu0 0.0
      %958 = vmatpush2.msra.mxu0 0.0
      %959 = vmatprep.subr.mxu0 0.0
      %960 = vmatpush2.msra.mxu0 0.0
      %961 = vmatprep.subr.mxu0 0.0
      %962 = vmatpush2.msra.mxu0 0.0
      %963 = vmatprep.subr.mxu0 0.0
      %964 = vmatpush2.msra.mxu0 0.0
      %965 = vmatprep.subr.mxu0 0.0
      %966 = vmatpush2.msra.mxu0 0.0
      %967 = vmatprep.subr.mxu0 0.0
      %968 = vmatpush2.msra.mxu0 0.0
      %969 = vmatprep.mubr.f32.mxu0 0.0
      %970 = vmatmul.mubr.f32.gmra.mxu0 %v826
      %v971 = vpop.f32.mrf.mxu0
      %v972 = vadd.f32 0.0, %v971
      %v973 = vpop.f32.mrf.mxu0
      %974 = vdwg.mxu0
      %v975 = vadd.f32 %v808, %v901
      %v976 = vadd.f32 %v809, %v903
      %v977 = vadd.f32 %v810, %v972
      %s978 = scalar_lea.vmem %s2, 16
      %v979 = vld [vmem:[%s978] sm:$0xf]
      %980 = vrot.lane.b32.xlu0 %v320, 109
      %v981 = vpop.permute.xlu0 %980
      %982 = vrot.lane.b32.xlu0 %v325, 109
      %v983 = vpop.permute.xlu0 %982
      %984 = vrot.lane.b32.xlu0 %v321, 109
      %v985 = vpop.permute.xlu0 %984
      %986 = vrot.lane.b32.xlu0 %v322, 109
      %v987 = vpop.permute.xlu0 %986
      %vm988 = vcmask 891904
      %v989 = vsel %vm988, %v981, %v983
      %v990 = vsel %vm988, %v983, %v985
      %v991 = vsel %vm988, %v985, %v987
      %v993 = vsel %vm342, %v979, 0
      %v995 = vsel %vm346, %v989, 0
      %v997 = vsel %vm346, %v990, 0
      %v999 = vsel %vm346, %v991, 0
      %1001 = vmatprep.subr.mxu0 0.0
      %1002 = vmatpush1.msra.mxu0 0.0
      %1003 = vmatprep.subr.mxu0 0.0
      %1004 = vmatpush1.msra.mxu0 0.0
      %1005 = vmatprep.subr.mxu0 0.0
      %1006 = vmatpush1.msra.mxu0 0.0
      %1007 = vmatprep.subr.mxu0 0.0
      %1008 = vmatpush1.msra.mxu0 0.0
      %1009 = vmatprep.subr.mxu0 0.0
      %1010 = vmatpush1.msra.mxu0 0.0
      %1011 = vmatprep.subr.mxu0 0.0
      %1012 = vmatpush1.msra.mxu0 0.0
      %1013 = vmatprep.subr.mxu0 0.0
      %1014 = vmatpush1.msra.mxu0 0.0
      %1015 = vmatprep.subr.mxu0 0.0
      %1016 = vmatpush1.msra.mxu0 0.0
      %1017 = vmatprep.subr.mxu0 0.0
      %1018 = vmatpush1.msra.mxu0 0.0
      %1019 = vmatprep.subr.mxu0 0.0
      %1020 = vmatpush1.msra.mxu0 0.0
      %1021 = vmatprep.subr.mxu0 0.0
      %1022 = vmatpush1.msra.mxu0 0.0
      %1023 = vmatprep.subr.mxu0 0.0
      %1024 = vmatpush1.msra.mxu0 0.0
      %1025 = vmatprep.subr.mxu0 0.0
      %1026 = vmatpush1.msra.mxu0 0.0
      %1027 = vmatprep.subr.mxu0 0.0
      %1028 = vmatpush1.msra.mxu0 0.0
      %1029 = vmatprep.subr.mxu0 0.0
      %1030 = vmatpush1.msra.mxu0 0.0
      %1031 = vmatprep.subr.mxu0 %v997
      %1032 = vmatpush1.msra.mxu0 %v995
      %1033 = vmatprep.subr.mxu0 0.0
      %1034 = vmatpush2.msra.mxu0 0.0
      %1035 = vmatprep.subr.mxu0 0.0
      %1036 = vmatpush2.msra.mxu0 0.0
      %1037 = vmatprep.subr.mxu0 0.0
      %1038 = vmatpush2.msra.mxu0 0.0
      %1039 = vmatprep.subr.mxu0 0.0
      %1040 = vmatpush2.msra.mxu0 0.0
      %1041 = vmatprep.subr.mxu0 0.0
      %1042 = vmatpush2.msra.mxu0 0.0
      %1043 = vmatprep.subr.mxu0 0.0
      %1044 = vmatpush2.msra.mxu0 0.0
      %1045 = vmatprep.subr.mxu0 0.0
      %1046 = vmatpush2.msra.mxu0 0.0
      %1047 = vmatprep.subr.mxu0 0.0
      %1048 = vmatpush2.msra.mxu0 0.0
      %1049 = vmatprep.subr.mxu0 0.0
      %1050 = vmatpush2.msra.mxu0 0.0
      %1051 = vmatprep.subr.mxu0 0.0
      %1052 = vmatpush2.msra.mxu0 0.0
      %1053 = vmatprep.subr.mxu0 0.0
      %1054 = vmatpush2.msra.mxu0 0.0
      %1055 = vmatprep.subr.mxu0 0.0
      %1056 = vmatpush2.msra.mxu0 0.0
      %1057 = vmatprep.subr.mxu0 0.0
      %1058 = vmatpush2.msra.mxu0 0.0
      %1059 = vmatprep.subr.mxu0 0.0
      %1060 = vmatpush2.msra.mxu0 0.0
      %1061 = vmatprep.subr.mxu0 0.0
      %1062 = vmatpush2.msra.mxu0 0.0
      %1063 = vmatprep.subr.mxu0 0.0
      %1064 = vmatpush2.msra.mxu0 0.0
      %1065 = vmatprep.mubr.f32.mxu0 0.0
      %1066 = vmatmul.mubr.f32.gmra.mxu0 %v993
      %v1067 = vpop.f32.mrf.mxu0
      %v1068 = vadd.f32 0.0, %v1067
      %v1069 = vpop.f32.mrf.mxu0
      %v1070 = vadd.f32 0.0, %v1069
      %1071 = vdwg.mxu0
      %1072 = vmatprep.subr.mxu0 0.0
      %1073 = vmatpush1.msra.mxu0 0.0
      %1074 = vmatprep.subr.mxu0 0.0
      %1075 = vmatpush1.msra.mxu0 0.0
      %1076 = vmatprep.subr.mxu0 0.0
      %1077 = vmatpush1.msra.mxu0 0.0
      %1078 = vmatprep.subr.mxu0 0.0
      %1079 = vmatpush1.msra.mxu0 0.0
      %1080 = vmatprep.subr.mxu0 0.0
      %1081 = vmatpush1.msra.mxu0 0.0
      %1082 = vmatprep.subr.mxu0 0.0
      %1083 = vmatpush1.msra.mxu0 0.0
      %1084 = vmatprep.subr.mxu0 0.0
      %1085 = vmatpush1.msra.mxu0 0.0
      %1086 = vmatprep.subr.mxu0 0.0
      %1087 = vmatpush1.msra.mxu0 0.0
      %1088 = vmatprep.subr.mxu0 0.0
      %1089 = vmatpush1.msra.mxu0 0.0
      %1090 = vmatprep.subr.mxu0 0.0
      %1091 = vmatpush1.msra.mxu0 0.0
      %1092 = vmatprep.subr.mxu0 0.0
      %1093 = vmatpush1.msra.mxu0 0.0
      %1094 = vmatprep.subr.mxu0 0.0
      %1095 = vmatpush1.msra.mxu0 0.0
      %1096 = vmatprep.subr.mxu0 0.0
      %1097 = vmatpush1.msra.mxu0 0.0
      %1098 = vmatprep.subr.mxu0 0.0
      %1099 = vmatpush1.msra.mxu0 0.0
      %1100 = vmatprep.subr.mxu0 0.0
      %1101 = vmatpush1.msra.mxu0 0.0
      %1102 = vmatprep.subr.mxu0 0.0
      %1103 = vmatpush1.msra.mxu0 %v999
      %1104 = vmatprep.subr.mxu0 0.0
      %1105 = vmatpush2.msra.mxu0 0.0
      %1106 = vmatprep.subr.mxu0 0.0
      %1107 = vmatpush2.msra.mxu0 0.0
      %1108 = vmatprep.subr.mxu0 0.0
      %1109 = vmatpush2.msra.mxu0 0.0
      %1110 = vmatprep.subr.mxu0 0.0
      %1111 = vmatpush2.msra.mxu0 0.0
      %1112 = vmatprep.subr.mxu0 0.0
      %1113 = vmatpush2.msra.mxu0 0.0
      %1114 = vmatprep.subr.mxu0 0.0
      %1115 = vmatpush2.msra.mxu0 0.0
      %1116 = vmatprep.subr.mxu0 0.0
      %1117 = vmatpush2.msra.mxu0 0.0
      %1118 = vmatprep.subr.mxu0 0.0
      %1119 = vmatpush2.msra.mxu0 0.0
      %1120 = vmatprep.subr.mxu0 0.0
      %1121 = vmatpush2.msra.mxu0 0.0
      %1122 = vmatprep.subr.mxu0 0.0
      %1123 = vmatpush2.msra.mxu0 0.0
      %1124 = vmatprep.subr.mxu0 0.0
      %1125 = vmatpush2.msra.mxu0 0.0
      %1126 = vmatprep.subr.mxu0 0.0
      %1127 = vmatpush2.msra.mxu0 0.0
      %1128 = vmatprep.subr.mxu0 0.0
      %1129 = vmatpush2.msra.mxu0 0.0
      %1130 = vmatprep.subr.mxu0 0.0
      %1131 = vmatpush2.msra.mxu0 0.0
      %1132 = vmatprep.subr.mxu0 0.0
      %1133 = vmatpush2.msra.mxu0 0.0
      %1134 = vmatprep.subr.mxu0 0.0
      %1135 = vmatpush2.msra.mxu0 0.0
      %1136 = vmatprep.mubr.f32.mxu0 0.0
      %1137 = vmatmul.mubr.f32.gmra.mxu0 %v993
      %v1138 = vpop.f32.mrf.mxu0
      %v1139 = vadd.f32 0.0, %v1138
      %v1140 = vpop.f32.mrf.mxu0
      %1141 = vdwg.mxu0
      %v1142 = vadd.f32 %v975, %v1068
      %v1143 = vadd.f32 %v976, %v1070
      %v1144 = vadd.f32 %v977, %v1139
      %s1145 = scalar_lea.vmem %s2, 20
      %v1146 = vld [vmem:[%s1145] sm:$0xf]
      %1147 = vrot.lane.b32.xlu0 %v320, 108
      %v1148 = vpop.permute.xlu0 %1147
      %1149 = vrot.lane.b32.xlu0 %v325, 108
      %v1150 = vpop.permute.xlu0 %1149
      %1151 = vrot.lane.b32.xlu0 %v321, 108
      %v1152 = vpop.permute.xlu0 %1151
      %1153 = vrot.lane.b32.xlu0 %v322, 108
      %v1154 = vpop.permute.xlu0 %1153
      %vm1155 = vcmask 883712
      %v1156 = vsel %vm1155, %v1148, %v1150
      %v1157 = vsel %vm1155, %v1150, %v1152
      %v1158 = vsel %vm1155, %v1152, %v1154
      %v1160 = vsel %vm342, %v1146, 0
      %v1162 = vsel %vm346, %v1156, 0
      %v1164 = vsel %vm346, %v1157, 0
      %v1166 = vsel %vm346, %v1158, 0
      %1168 = vmatprep.subr.mxu0 0.0
      %1169 = vmatpush1.msra.mxu0 0.0
      %1170 = vmatprep.subr.mxu0 0.0
      %1171 = vmatpush1.msra.mxu0 0.0
      %1172 = vmatprep.subr.mxu0 0.0
      %1173 = vmatpush1.msra.mxu0 0.0
      %1174 = vmatprep.subr.mxu0 0.0
      %1175 = vmatpush1.msra.mxu0 0.0
      %1176 = vmatprep.subr.mxu0 0.0
      %1177 = vmatpush1.msra.mxu0 0.0
      %1178 = vmatprep.subr.mxu0 0.0
      %1179 = vmatpush1.msra.mxu0 0.0
      %1180 = vmatprep.subr.mxu0 0.0
      %1181 = vmatpush1.msra.mxu0 0.0
      %1182 = vmatprep.subr.mxu0 0.0
      %1183 = vmatpush1.msra.mxu0 0.0
      %1184 = vmatprep.subr.mxu0 0.0
      %1185 = vmatpush1.msra.mxu0 0.0
      %1186 = vmatprep.subr.mxu0 0.0
      %1187 = vmatpush1.msra.mxu0 0.0
      %1188 = vmatprep.subr.mxu0 0.0
      %1189 = vmatpush1.msra.mxu0 0.0
      %1190 = vmatprep.subr.mxu0 0.0
      %1191 = vmatpush1.msra.mxu0 0.0
      %1192 = vmatprep.subr.mxu0 0.0
      %1193 = vmatpush1.msra.mxu0 0.0
      %1194 = vmatprep.subr.mxu0 0.0
      %1195 = vmatpush1.msra.mxu0 0.0
      %1196 = vmatprep.subr.mxu0 0.0
      %1197 = vmatpush1.msra.mxu0 0.0
      %1198 = vmatprep.subr.mxu0 %v1164
      %1199 = vmatpush1.msra.mxu0 %v1162
      %1200 = vmatprep.subr.mxu0 0.0
      %1201 = vmatpush2.msra.mxu0 0.0
      %1202 = vmatprep.subr.mxu0 0.0
      %1203 = vmatpush2.msra.mxu0 0.0
      %1204 = vmatprep.subr.mxu0 0.0
      %1205 = vmatpush2.msra.mxu0 0.0
      %1206 = vmatprep.subr.mxu0 0.0
      %1207 = vmatpush2.msra.mxu0 0.0
      %1208 = vmatprep.subr.mxu0 0.0
      %1209 = vmatpush2.msra.mxu0 0.0
      %1210 = vmatprep.subr.mxu0 0.0
      %1211 = vmatpush2.msra.mxu0 0.0
      %1212 = vmatprep.subr.mxu0 0.0
      %1213 = vmatpush2.msra.mxu0 0.0
      %1214 = vmatprep.subr.mxu0 0.0
      %1215 = vmatpush2.msra.mxu0 0.0
      %1216 = vmatprep.subr.mxu0 0.0
      %1217 = vmatpush2.msra.mxu0 0.0
      %1218 = vmatprep.subr.mxu0 0.0
      %1219 = vmatpush2.msra.mxu0 0.0
      %1220 = vmatprep.subr.mxu0 0.0
      %1221 = vmatpush2.msra.mxu0 0.0
      %1222 = vmatprep.subr.mxu0 0.0
      %1223 = vmatpush2.msra.mxu0 0.0
      %1224 = vmatprep.subr.mxu0 0.0
      %1225 = vmatpush2.msra.mxu0 0.0
      %1226 = vmatprep.subr.mxu0 0.0
      %1227 = vmatpush2.msra.mxu0 0.0
      %1228 = vmatprep.subr.mxu0 0.0
      %1229 = vmatpush2.msra.mxu0 0.0
      %1230 = vmatprep.subr.mxu0 0.0
      %1231 = vmatpush2.msra.mxu0 0.0
      %1232 = vmatprep.mubr.f32.mxu0 0.0
      %1233 = vmatmul.mubr.f32.gmra.mxu0 %v1160
      %v1234 = vpop.f32.mrf.mxu0
      %v1235 = vadd.f32 0.0, %v1234
      %v1236 = vpop.f32.mrf.mxu0
      %v1237 = vadd.f32 0.0, %v1236
      %1238 = vdwg.mxu0
      %1239 = vmatprep.subr.mxu0 0.0
      %1240 = vmatpush1.msra.mxu0 0.0
      %1241 = vmatprep.subr.mxu0 0.0
      %1242 = vmatpush1.msra.mxu0 0.0
      %1243 = vmatprep.subr.mxu0 0.0
      %1244 = vmatpush1.msra.mxu0 0.0
      %1245 = vmatprep.subr.mxu0 0.0
      %1246 = vmatpush1.msra.mxu0 0.0
      %1247 = vmatprep.subr.mxu0 0.0
      %1248 = vmatpush1.msra.mxu0 0.0
      %1249 = vmatprep.subr.mxu0 0.0
      %1250 = vmatpush1.msra.mxu0 0.0
      %1251 = vmatprep.subr.mxu0 0.0
      %1252 = vmatpush1.msra.mxu0 0.0
      %1253 = vmatprep.subr.mxu0 0.0
      %1254 = vmatpush1.msra.mxu0 0.0
      %1255 = vmatprep.subr.mxu0 0.0
      %1256 = vmatpush1.msra.mxu0 0.0
      %1257 = vmatprep.subr.mxu0 0.0
      %1258 = vmatpush1.msra.mxu0 0.0
      %1259 = vmatprep.subr.mxu0 0.0
      %1260 = vmatpush1.msra.mxu0 0.0
      %1261 = vmatprep.subr.mxu0 0.0
      %1262 = vmatpush1.msra.mxu0 0.0
      %1263 = vmatprep.subr.mxu0 0.0
      %1264 = vmatpush1.msra.mxu0 0.0
      %1265 = vmatprep.subr.mxu0 0.0
      %1266 = vmatpush1.msra.mxu0 0.0
      %1267 = vmatprep.subr.mxu0 0.0
      %1268 = vmatpush1.msra.mxu0 0.0
      %1269 = vmatprep.subr.mxu0 0.0
      %1270 = vmatpush1.msra.mxu0 %v1166
      %1271 = vmatprep.subr.mxu0 0.0
      %1272 = vmatpush2.msra.mxu0 0.0
      %1273 = vmatprep.subr.mxu0 0.0
      %1274 = vmatpush2.msra.mxu0 0.0
      %1275 = vmatprep.subr.mxu0 0.0
      %1276 = vmatpush2.msra.mxu0 0.0
      %1277 = vmatprep.subr.mxu0 0.0
      %1278 = vmatpush2.msra.mxu0 0.0
      %1279 = vmatprep.subr.mxu0 0.0
      %1280 = vmatpush2.msra.mxu0 0.0
      %1281 = vmatprep.subr.mxu0 0.0
      %1282 = vmatpush2.msra.mxu0 0.0
      %1283 = vmatprep.subr.mxu0 0.0
      %1284 = vmatpush2.msra.mxu0 0.0
      %1285 = vmatprep.subr.mxu0 0.0
      %1286 = vmatpush2.msra.mxu0 0.0
      %1287 = vmatprep.subr.mxu0 0.0
      %1288 = vmatpush2.msra.mxu0 0.0
      %1289 = vmatprep.subr.mxu0 0.0
      %1290 = vmatpush2.msra.mxu0 0.0
      %1291 = vmatprep.subr.mxu0 0.0
      %1292 = vmatpush2.msra.mxu0 0.0
      %1293 = vmatprep.subr.mxu0 0.0
      %1294 = vmatpush2.msra.mxu0 0.0
      %1295 = vmatprep.subr.mxu0 0.0
      %1296 = vmatpush2.msra.mxu0 0.0
      %1297 = vmatprep.subr.mxu0 0.0
      %1298 = vmatpush2.msra.mxu0 0.0
      %1299 = vmatprep.subr.mxu0 0.0
      %1300 = vmatpush2.msra.mxu0 0.0
      %1301 = vmatprep.subr.mxu0 0.0
      %1302 = vmatpush2.msra.mxu0 0.0
      %1303 = vmatprep.mubr.f32.mxu0 0.0
      %1304 = vmatmul.mubr.f32.gmra.mxu0 %v1160
      %v1305 = vpop.f32.mrf.mxu0
      %v1306 = vadd.f32 0.0, %v1305
      %v1307 = vpop.f32.mrf.mxu0
      %1308 = vdwg.mxu0
      %v1309 = vadd.f32 %v1142, %v1235
      %v1310 = vadd.f32 %v1143, %v1237
      %v1311 = vadd.f32 %v1144, %v1306
      %s1312 = scalar_lea.vmem %s2, 24
      %v1313 = vld [vmem:[%s1312] sm:$0xf]
      %1314 = vrot.lane.b32.xlu0 %v320, 92
      %v1315 = vpop.permute.xlu0 %1314
      %1316 = vrot.lane.b32.xlu0 %v325, 92
      %v1317 = vpop.permute.xlu0 %1316
      %1318 = vrot.lane.b32.xlu0 %v321, 92
      %v1319 = vpop.permute.xlu0 %1318
      %1320 = vrot.lane.b32.xlu0 %v322, 92
      %v1321 = vpop.permute.xlu0 %1320
      %vm1322 = vcmask 752640
      %v1323 = vsel %vm1322, %v1315, %v1317
      %v1324 = vsel %vm1322, %v1317, %v1319
      %v1325 = vsel %vm1322, %v1319, %v1321
      %v1327 = vsel %vm342, %v1313, 0
      %v1329 = vsel %vm346, %v1323, 0
      %v1331 = vsel %vm346, %v1324, 0
      %v1333 = vsel %vm346, %v1325, 0
      %1335 = vmatprep.subr.mxu0 0.0
      %1336 = vmatpush1.msra.mxu0 0.0
      %1337 = vmatprep.subr.mxu0 0.0
      %1338 = vmatpush1.msra.mxu0 0.0
      %1339 = vmatprep.subr.mxu0 0.0
      %1340 = vmatpush1.msra.mxu0 0.0
      %1341 = vmatprep.subr.mxu0 0.0
      %1342 = vmatpush1.msra.mxu0 0.0
      %1343 = vmatprep.subr.mxu0 0.0
      %1344 = vmatpush1.msra.mxu0 0.0
      %1345 = vmatprep.subr.mxu0 0.0
      %1346 = vmatpush1.msra.mxu0 0.0
      %1347 = vmatprep.subr.mxu0 0.0
      %1348 = vmatpush1.msra.mxu0 0.0
      %1349 = vmatprep.subr.mxu0 0.0
      %1350 = vmatpush1.msra.mxu0 0.0
      %1351 = vmatprep.subr.mxu0 0.0
      %1352 = vmatpush1.msra.mxu0 0.0
      %1353 = vmatprep.subr.mxu0 0.0
      %1354 = vmatpush1.msra.mxu0 0.0
      %1355 = vmatprep.subr.mxu0 0.0
      %1356 = vmatpush1.msra.mxu0 0.0
      %1357 = vmatprep.subr.mxu0 0.0
      %1358 = vmatpush1.msra.mxu0 0.0
      %1359 = vmatprep.subr.mxu0 0.0
      %1360 = vmatpush1.msra.mxu0 0.0
      %1361 = vmatprep.subr.mxu0 0.0
      %1362 = vmatpush1.msra.mxu0 0.0
      %1363 = vmatprep.subr.mxu0 0.0
      %1364 = vmatpush1.msra.mxu0 0.0
      %1365 = vmatprep.subr.mxu0 %v1331
      %1366 = vmatpush1.msra.mxu0 %v1329
      %1367 = vmatprep.subr.mxu0 0.0
      %1368 = vmatpush2.msra.mxu0 0.0
      %1369 = vmatprep.subr.mxu0 0.0
      %1370 = vmatpush2.msra.mxu0 0.0
      %1371 = vmatprep.subr.mxu0 0.0
      %1372 = vmatpush2.msra.mxu0 0.0
      %1373 = vmatprep.subr.mxu0 0.0
      %1374 = vmatpush2.msra.mxu0 0.0
      %1375 = vmatprep.subr.mxu0 0.0
      %1376 = vmatpush2.msra.mxu0 0.0
      %1377 = vmatprep.subr.mxu0 0.0
      %1378 = vmatpush2.msra.mxu0 0.0
      %1379 = vmatprep.subr.mxu0 0.0
      %1380 = vmatpush2.msra.mxu0 0.0
      %1381 = vmatprep.subr.mxu0 0.0
      %1382 = vmatpush2.msra.mxu0 0.0
      %1383 = vmatprep.subr.mxu0 0.0
      %1384 = vmatpush2.msra.mxu0 0.0
      %1385 = vmatprep.subr.mxu0 0.0
      %1386 = vmatpush2.msra.mxu0 0.0
      %1387 = vmatprep.subr.mxu0 0.0
      %1388 = vmatpush2.msra.mxu0 0.0
      %1389 = vmatprep.subr.mxu0 0.0
      %1390 = vmatpush2.msra.mxu0 0.0
      %1391 = vmatprep.subr.mxu0 0.0
      %1392 = vmatpush2.msra.mxu0 0.0
      %1393 = vmatprep.subr.mxu0 0.0
      %1394 = vmatpush2.msra.mxu0 0.0
      %1395 = vmatprep.subr.mxu0 0.0
      %1396 = vmatpush2.msra.mxu0 0.0
      %1397 = vmatprep.subr.mxu0 0.0
      %1398 = vmatpush2.msra.mxu0 0.0
      %1399 = vmatprep.mubr.f32.mxu0 0.0
      %1400 = vmatmul.mubr.f32.gmra.mxu0 %v1327
      %v1401 = vpop.f32.mrf.mxu0
      %v1402 = vadd.f32 0.0, %v1401
      %v1403 = vpop.f32.mrf.mxu0
      %v1404 = vadd.f32 0.0, %v1403
      %1405 = vdwg.mxu0
      %1406 = vmatprep.subr.mxu0 0.0
      %1407 = vmatpush1.msra.mxu0 0.0
      %1408 = vmatprep.subr.mxu0 0.0
      %1409 = vmatpush1.msra.mxu0 0.0
      %1410 = vmatprep.subr.mxu0 0.0
      %1411 = vmatpush1.msra.mxu0 0.0
      %1412 = vmatprep.subr.mxu0 0.0
      %1413 = vmatpush1.msra.mxu0 0.0
      %1414 = vmatprep.subr.mxu0 0.0
      %1415 = vmatpush1.msra.mxu0 0.0
      %1416 = vmatprep.subr.mxu0 0.0
      %1417 = vmatpush1.msra.mxu0 0.0
      %1418 = vmatprep.subr.mxu0 0.0
      %1419 = vmatpush1.msra.mxu0 0.0
      %1420 = vmatprep.subr.mxu0 0.0
      %1421 = vmatpush1.msra.mxu0 0.0
      %1422 = vmatprep.subr.mxu0 0.0
      %1423 = vmatpush1.msra.mxu0 0.0
      %1424 = vmatprep.subr.mxu0 0.0
      %1425 = vmatpush1.msra.mxu0 0.0
      %1426 = vmatprep.subr.mxu0 0.0
      %1427 = vmatpush1.msra.mxu0 0.0
      %1428 = vmatprep.subr.mxu0 0.0
      %1429 = vmatpush1.msra.mxu0 0.0
      %1430 = vmatprep.subr.mxu0 0.0
      %1431 = vmatpush1.msra.mxu0 0.0
      %1432 = vmatprep.subr.mxu0 0.0
      %1433 = vmatpush1.msra.mxu0 0.0
      %1434 = vmatprep.subr.mxu0 0.0
      %1435 = vmatpush1.msra.mxu0 0.0
      %1436 = vmatprep.subr.mxu0 0.0
      %1437 = vmatpush1.msra.mxu0 %v1333
      %1438 = vmatprep.subr.mxu0 0.0
      %1439 = vmatpush2.msra.mxu0 0.0
      %1440 = vmatprep.subr.mxu0 0.0
      %1441 = vmatpush2.msra.mxu0 0.0
      %1442 = vmatprep.subr.mxu0 0.0
      %1443 = vmatpush2.msra.mxu0 0.0
      %1444 = vmatprep.subr.mxu0 0.0
      %1445 = vmatpush2.msra.mxu0 0.0
      %1446 = vmatprep.subr.mxu0 0.0
      %1447 = vmatpush2.msra.mxu0 0.0
      %1448 = vmatprep.subr.mxu0 0.0
      %1449 = vmatpush2.msra.mxu0 0.0
      %1450 = vmatprep.subr.mxu0 0.0
      %1451 = vmatpush2.msra.mxu0 0.0
      %1452 = vmatprep.subr.mxu0 0.0
      %1453 = vmatpush2.msra.mxu0 0.0
      %1454 = vmatprep.subr.mxu0 0.0
      %1455 = vmatpush2.msra.mxu0 0.0
      %1456 = vmatprep.subr.mxu0 0.0
      %1457 = vmatpush2.msra.mxu0 0.0
      %1458 = vmatprep.subr.mxu0 0.0
      %1459 = vmatpush2.msra.mxu0 0.0
      %1460 = vmatprep.subr.mxu0 0.0
      %1461 = vmatpush2.msra.mxu0 0.0
      %1462 = vmatprep.subr.mxu0 0.0
      %1463 = vmatpush2.msra.mxu0 0.0
      %1464 = vmatprep.subr.mxu0 0.0
      %1465 = vmatpush2.msra.mxu0 0.0
      %1466 = vmatprep.subr.mxu0 0.0
      %1467 = vmatpush2.msra.mxu0 0.0
      %1468 = vmatprep.subr.mxu0 0.0
      %1469 = vmatpush2.msra.mxu0 0.0
      %1470 = vmatprep.mubr.f32.mxu0 0.0
      %1471 = vmatmul.mubr.f32.gmra.mxu0 %v1327
      %v1472 = vpop.f32.mrf.mxu0
      %v1473 = vadd.f32 0.0, %v1472
      %v1474 = vpop.f32.mrf.mxu0
      %1475 = vdwg.mxu0
      %v1476 = vadd.f32 %v1309, %v1402
      %v1477 = vadd.f32 %v1310, %v1404
      %v1478 = vadd.f32 %v1311, %v1473
      %s1479 = scalar_lea.vmem %s2, 28
      %v1480 = vld [vmem:[%s1479] sm:$0xf]
      %1481 = vrot.lane.b32.xlu0 %v320, 91
      %v1482 = vpop.permute.xlu0 %1481
      %1483 = vrot.lane.b32.xlu0 %v325, 91
      %v1484 = vpop.permute.xlu0 %1483
      %1485 = vrot.lane.b32.xlu0 %v321, 91
      %v1486 = vpop.permute.xlu0 %1485
      %1487 = vrot.lane.b32.xlu0 %v322, 91
      %v1488 = vpop.permute.xlu0 %1487
      %vm1489 = vcmask 744448
      %v1490 = vsel %vm1489, %v1482, %v1484
      %v1491 = vsel %vm1489, %v1484, %v1486
      %v1492 = vsel %vm1489, %v1486, %v1488
      %v1494 = vsel %vm342, %v1480, 0
      %v1496 = vsel %vm346, %v1490, 0
      %v1498 = vsel %vm346, %v1491, 0
      %v1500 = vsel %vm346, %v1492, 0
      %1502 = vmatprep.subr.mxu0 0.0
      %1503 = vmatpush1.msra.mxu0 0.0
      %1504 = vmatprep.subr.mxu0 0.0
      %1505 = vmatpush1.msra.mxu0 0.0
      %1506 = vmatprep.subr.mxu0 0.0
      %1507 = vmatpush1.msra.mxu0 0.0
      %1508 = vmatprep.subr.mxu0 0.0
      %1509 = vmatpush1.msra.mxu0 0.0
      %1510 = vmatprep.subr.mxu0 0.0
      %1511 = vmatpush1.msra.mxu0 0.0
      %1512 = vmatprep.subr.mxu0 0.0
      %1513 = vmatpush1.msra.mxu0 0.0
      %1514 = vmatprep.subr.mxu0 0.0
      %1515 = vmatpush1.msra.mxu0 0.0
      %1516 = vmatprep.subr.mxu0 0.0
      %1517 = vmatpush1.msra.mxu0 0.0
      %1518 = vmatprep.subr.mxu0 0.0
      %1519 = vmatpush1.msra.mxu0 0.0
      %1520 = vmatprep.subr.mxu0 0.0
      %1521 = vmatpush1.msra.mxu0 0.0
      %1522 = vmatprep.subr.mxu0 0.0
      %1523 = vmatpush1.msra.mxu0 0.0
      %1524 = vmatprep.subr.mxu0 0.0
      %1525 = vmatpush1.msra.mxu0 0.0
      %1526 = vmatprep.subr.mxu0 0.0
      %1527 = vmatpush1.msra.mxu0 0.0
      %1528 = vmatprep.subr.mxu0 0.0
      %1529 = vmatpush1.msra.mxu0 0.0
      %1530 = vmatprep.subr.mxu0 0.0
      %1531 = vmatpush1.msra.mxu0 0.0
      %1532 = vmatprep.subr.mxu0 %v1498
      %1533 = vmatpush1.msra.mxu0 %v1496
      %1534 = vmatprep.subr.mxu0 0.0
      %1535 = vmatpush2.msra.mxu0 0.0
      %1536 = vmatprep.subr.mxu0 0.0
      %1537 = vmatpush2.msra.mxu0 0.0
      %1538 = vmatprep.subr.mxu0 0.0
      %1539 = vmatpush2.msra.mxu0 0.0
      %1540 = vmatprep.subr.mxu0 0.0
      %1541 = vmatpush2.msra.mxu0 0.0
      %1542 = vmatprep.subr.mxu0 0.0
      %1543 = vmatpush2.msra.mxu0 0.0
      %1544 = vmatprep.subr.mxu0 0.0
      %1545 = vmatpush2.msra.mxu0 0.0
      %1546 = vmatprep.subr.mxu0 0.0
      %1547 = vmatpush2.msra.mxu0 0.0
      %1548 = vmatprep.subr.mxu0 0.0
      %1549 = vmatpush2.msra.mxu0 0.0
      %1550 = vmatprep.subr.mxu0 0.0
      %1551 = vmatpush2.msra.mxu0 0.0
      %1552 = vmatprep.subr.mxu0 0.0
      %1553 = vmatpush2.msra.mxu0 0.0
      %1554 = vmatprep.subr.mxu0 0.0
      %1555 = vmatpush2.msra.mxu0 0.0
      %1556 = vmatprep.subr.mxu0 0.0
      %1557 = vmatpush2.msra.mxu0 0.0
      %1558 = vmatprep.subr.mxu0 0.0
      %1559 = vmatpush2.msra.mxu0 0.0
      %1560 = vmatprep.subr.mxu0 0.0
      %1561 = vmatpush2.msra.mxu0 0.0
      %1562 = vmatprep.subr.mxu0 0.0
      %1563 = vmatpush2.msra.mxu0 0.0
      %1564 = vmatprep.subr.mxu0 0.0
      %1565 = vmatpush2.msra.mxu0 0.0
      %1566 = vmatprep.mubr.f32.mxu0 0.0
      %1567 = vmatmul.mubr.f32.gmra.mxu0 %v1494
      %v1568 = vpop.f32.mrf.mxu0
      %v1569 = vadd.f32 0.0, %v1568
      %v1570 = vpop.f32.mrf.mxu0
      %v1571 = vadd.f32 0.0, %v1570
      %1572 = vdwg.mxu0
      %1573 = vmatprep.subr.mxu0 0.0
      %1574 = vmatpush1.msra.mxu0 0.0
      %1575 = vmatprep.subr.mxu0 0.0
      %1576 = vmatpush1.msra.mxu0 0.0
      %1577 = vmatprep.subr.mxu0 0.0
      %1578 = vmatpush1.msra.mxu0 0.0
      %1579 = vmatprep.subr.mxu0 0.0
      %1580 = vmatpush1.msra.mxu0 0.0
      %1581 = vmatprep.subr.mxu0 0.0
      %1582 = vmatpush1.msra.mxu0 0.0
      %1583 = vmatprep.subr.mxu0 0.0
      %1584 = vmatpush1.msra.mxu0 0.0
      %1585 = vmatprep.subr.mxu0 0.0
      %1586 = vmatpush1.msra.mxu0 0.0
      %1587 = vmatprep.subr.mxu0 0.0
      %1588 = vmatpush1.msra.mxu0 0.0
      %1589 = vmatprep.subr.mxu0 0.0
      %1590 = vmatpush1.msra.mxu0 0.0
      %1591 = vmatprep.subr.mxu0 0.0
      %1592 = vmatpush1.msra.mxu0 0.0
      %1593 = vmatprep.subr.mxu0 0.0
      %1594 = vmatpush1.msra.mxu0 0.0
      %1595 = vmatprep.subr.mxu0 0.0
      %1596 = vmatpush1.msra.mxu0 0.0
      %1597 = vmatprep.subr.mxu0 0.0
      %1598 = vmatpush1.msra.mxu0 0.0
      %1599 = vmatprep.subr.mxu0 0.0
      %1600 = vmatpush1.msra.mxu0 0.0
      %1601 = vmatprep.subr.mxu0 0.0
      %1602 = vmatpush1.msra.mxu0 0.0
      %1603 = vmatprep.subr.mxu0 0.0
      %1604 = vmatpush1.msra.mxu0 %v1500
      %1605 = vmatprep.subr.mxu0 0.0
      %1606 = vmatpush2.msra.mxu0 0.0
      %1607 = vmatprep.subr.mxu0 0.0
      %1608 = vmatpush2.msra.mxu0 0.0
      %1609 = vmatprep.subr.mxu0 0.0
      %1610 = vmatpush2.msra.mxu0 0.0
      %1611 = vmatprep.subr.mxu0 0.0
      %1612 = vmatpush2.msra.mxu0 0.0
      %1613 = vmatprep.subr.mxu0 0.0
      %1614 = vmatpush2.msra.mxu0 0.0
      %1615 = vmatprep.subr.mxu0 0.0
      %1616 = vmatpush2.msra.mxu0 0.0
      %1617 = vmatprep.subr.mxu0 0.0
      %1618 = vmatpush2.msra.mxu0 0.0
      %1619 = vmatprep.subr.mxu0 0.0
      %1620 = vmatpush2.msra.mxu0 0.0
      %1621 = vmatprep.subr.mxu0 0.0
      %1622 = vmatpush2.msra.mxu0 0.0
      %1623 = vmatprep.subr.mxu0 0.0
      %1624 = vmatpush2.msra.mxu0 0.0
      %1625 = vmatprep.subr.mxu0 0.0
      %1626 = vmatpush2.msra.mxu0 0.0
      %1627 = vmatprep.subr.mxu0 0.0
      %1628 = vmatpush2.msra.mxu0 0.0
      %1629 = vmatprep.subr.mxu0 0.0
      %1630 = vmatpush2.msra.mxu0 0.0
      %1631 = vmatprep.subr.mxu0 0.0
      %1632 = vmatpush2.msra.mxu0 0.0
      %1633 = vmatprep.subr.mxu0 0.0
      %1634 = vmatpush2.msra.mxu0 0.0
      %1635 = vmatprep.subr.mxu0 0.0
      %1636 = vmatpush2.msra.mxu0 0.0
      %1637 = vmatprep.mubr.f32.mxu0 0.0
      %1638 = vmatmul.mubr.f32.gmra.mxu0 %v1494
      %v1639 = vpop.f32.mrf.mxu0
      %v1640 = vadd.f32 0.0, %v1639
      %v1641 = vpop.f32.mrf.mxu0
      %1642 = vdwg.mxu0
      %v1643 = vadd.f32 %v1476, %v1569
      %v1644 = vadd.f32 %v1477, %v1571
      %v1645 = vadd.f32 %v1478, %v1640
      %s1646 = scalar_lea.vmem %s2, 32
      %v1647 = vld [vmem:[%s1646] sm:$0xf]
      %1648 = vrot.lane.b32.xlu0 %v320, 90
      %v1649 = vpop.permute.xlu0 %1648
      %1650 = vrot.lane.b32.xlu0 %v325, 90
      %v1651 = vpop.permute.xlu0 %1650
      %1652 = vrot.lane.b32.xlu0 %v321, 90
      %v1653 = vpop.permute.xlu0 %1652
      %1654 = vrot.lane.b32.xlu0 %v322, 90
      %v1655 = vpop.permute.xlu0 %1654
      %vm1656 = vcmask 736256
      %v1657 = vsel %vm1656, %v1649, %v1651
      %v1658 = vsel %vm1656, %v1651, %v1653
      %v1659 = vsel %vm1656, %v1653, %v1655
      %v1661 = vsel %vm342, %v1647, 0
      %v1663 = vsel %vm346, %v1657, 0
      %v1665 = vsel %vm346, %v1658, 0
      %v1667 = vsel %vm346, %v1659, 0
      %1669 = vmatprep.subr.mxu0 0.0
      %1670 = vmatpush1.msra.mxu0 0.0
      %1671 = vmatprep.subr.mxu0 0.0
      %1672 = vmatpush1.msra.mxu0 0.0
      %1673 = vmatprep.subr.mxu0 0.0
      %1674 = vmatpush1.msra.mxu0 0.0
      %1675 = vmatprep.subr.mxu0 0.0
      %1676 = vmatpush1.msra.mxu0 0.0
      %1677 = vmatprep.subr.mxu0 0.0
      %1678 = vmatpush1.msra.mxu0 0.0
      %1679 = vmatprep.subr.mxu0 0.0
      %1680 = vmatpush1.msra.mxu0 0.0
      %1681 = vmatprep.subr.mxu0 0.0
      %1682 = vmatpush1.msra.mxu0 0.0
      %1683 = vmatprep.subr.mxu0 0.0
      %1684 = vmatpush1.msra.mxu0 0.0
      %1685 = vmatprep.subr.mxu0 0.0
      %1686 = vmatpush1.msra.mxu0 0.0
      %1687 = vmatprep.subr.mxu0 0.0
      %1688 = vmatpush1.msra.mxu0 0.0
      %1689 = vmatprep.subr.mxu0 0.0
      %1690 = vmatpush1.msra.mxu0 0.0
      %1691 = vmatprep.subr.mxu0 0.0
      %1692 = vmatpush1.msra.mxu0 0.0
      %1693 = vmatprep.subr.mxu0 0.0
      %1694 = vmatpush1.msra.mxu0 0.0
      %1695 = vmatprep.subr.mxu0 0.0
      %1696 = vmatpush1.msra.mxu0 0.0
      %1697 = vmatprep.subr.mxu0 0.0
      %1698 = vmatpush1.msra.mxu0 0.0
      %1699 = vmatprep.subr.mxu0 %v1665
      %1700 = vmatpush1.msra.mxu0 %v1663
      %1701 = vmatprep.subr.mxu0 0.0
      %1702 = vmatpush2.msra.mxu0 0.0
      %1703 = vmatprep.subr.mxu0 0.0
      %1704 = vmatpush2.msra.mxu0 0.0
      %1705 = vmatprep.subr.mxu0 0.0
      %1706 = vmatpush2.msra.mxu0 0.0
      %1707 = vmatprep.subr.mxu0 0.0
      %1708 = vmatpush2.msra.mxu0 0.0
      %1709 = vmatprep.subr.mxu0 0.0
      %1710 = vmatpush2.msra.mxu0 0.0
      %1711 = vmatprep.subr.mxu0 0.0
      %1712 = vmatpush2.msra.mxu0 0.0
      %1713 = vmatprep.subr.mxu0 0.0
      %1714 = vmatpush2.msra.mxu0 0.0
      %1715 = vmatprep.subr.mxu0 0.0
      %1716 = vmatpush2.msra.mxu0 0.0
      %1717 = vmatprep.subr.mxu0 0.0
      %1718 = vmatpush2.msra.mxu0 0.0
      %1719 = vmatprep.subr.mxu0 0.0
      %1720 = vmatpush2.msra.mxu0 0.0
      %1721 = vmatprep.subr.mxu0 0.0
      %1722 = vmatpush2.msra.mxu0 0.0
      %1723 = vmatprep.subr.mxu0 0.0
      %1724 = vmatpush2.msra.mxu0 0.0
      %1725 = vmatprep.subr.mxu0 0.0
      %1726 = vmatpush2.msra.mxu0 0.0
      %1727 = vmatprep.subr.mxu0 0.0
      %1728 = vmatpush2.msra.mxu0 0.0
      %1729 = vmatprep.subr.mxu0 0.0
      %1730 = vmatpush2.msra.mxu0 0.0
      %1731 = vmatprep.subr.mxu0 0.0
      %1732 = vmatpush2.msra.mxu0 0.0
      %1733 = vmatprep.mubr.f32.mxu0 0.0
      %1734 = vmatmul.mubr.f32.gmra.mxu0 %v1661
      %v1735 = vpop.f32.mrf.mxu0
      %v1736 = vadd.f32 0.0, %v1735
      %v1737 = vpop.f32.mrf.mxu0
      %v1738 = vadd.f32 0.0, %v1737
      %1739 = vdwg.mxu0
      %1740 = vmatprep.subr.mxu0 0.0
      %1741 = vmatpush1.msra.mxu0 0.0
      %1742 = vmatprep.subr.mxu0 0.0
      %1743 = vmatpush1.msra.mxu0 0.0
      %1744 = vmatprep.subr.mxu0 0.0
      %1745 = vmatpush1.msra.mxu0 0.0
      %1746 = vmatprep.subr.mxu0 0.0
      %1747 = vmatpush1.msra.mxu0 0.0
      %1748 = vmatprep.subr.mxu0 0.0
      %1749 = vmatpush1.msra.mxu0 0.0
      %1750 = vmatprep.subr.mxu0 0.0
      %1751 = vmatpush1.msra.mxu0 0.0
      %1752 = vmatprep.subr.mxu0 0.0
      %1753 = vmatpush1.msra.mxu0 0.0
      %1754 = vmatprep.subr.mxu0 0.0
      %1755 = vmatpush1.msra.mxu0 0.0
      %1756 = vmatprep.subr.mxu0 0.0
      %1757 = vmatpush1.msra.mxu0 0.0
      %1758 = vmatprep.subr.mxu0 0.0
      %1759 = vmatpush1.msra.mxu0 0.0
      %1760 = vmatprep.subr.mxu0 0.0
      %1761 = vmatpush1.msra.mxu0 0.0
      %1762 = vmatprep.subr.mxu0 0.0
      %1763 = vmatpush1.msra.mxu0 0.0
      %1764 = vmatprep.subr.mxu0 0.0
      %1765 = vmatpush1.msra.mxu0 0.0
      %1766 = vmatprep.subr.mxu0 0.0
      %1767 = vmatpush1.msra.mxu0 0.0
      %1768 = vmatprep.subr.mxu0 0.0
      %1769 = vmatpush1.msra.mxu0 0.0
      %1770 = vmatprep.subr.mxu0 0.0
      %1771 = vmatpush1.msra.mxu0 %v1667
      %1772 = vmatprep.subr.mxu0 0.0
      %1773 = vmatpush2.msra.mxu0 0.0
      %1774 = vmatprep.subr.mxu0 0.0
      %1775 = vmatpush2.msra.mxu0 0.0
      %1776 = vmatprep.subr.mxu0 0.0
      %1777 = vmatpush2.msra.mxu0 0.0
      %1778 = vmatprep.subr.mxu0 0.0
      %1779 = vmatpush2.msra.mxu0 0.0
      %1780 = vmatprep.subr.mxu0 0.0
      %1781 = vmatpush2.msra.mxu0 0.0
      %1782 = vmatprep.subr.mxu0 0.0
      %1783 = vmatpush2.msra.mxu0 0.0
      %1784 = vmatprep.subr.mxu0 0.0
      %1785 = vmatpush2.msra.mxu0 0.0
      %1786 = vmatprep.subr.mxu0 0.0
      %1787 = vmatpush2.msra.mxu0 0.0
      %1788 = vmatprep.subr.mxu0 0.0
      %1789 = vmatpush2.msra.mxu0 0.0
      %1790 = vmatprep.subr.mxu0 0.0
      %1791 = vmatpush2.msra.mxu0 0.0
      %1792 = vmatprep.subr.mxu0 0.0
      %1793 = vmatpush2.msra.mxu0 0.0
      %1794 = vmatprep.subr.mxu0 0.0
      %1795 = vmatpush2.msra.mxu0 0.0
      %1796 = vmatprep.subr.mxu0 0.0
      %1797 = vmatpush2.msra.mxu0 0.0
      %1798 = vmatprep.subr.mxu0 0.0
      %1799 = vmatpush2.msra.mxu0 0.0
      %1800 = vmatprep.subr.mxu0 0.0
      %1801 = vmatpush2.msra.mxu0 0.0
      %1802 = vmatprep.subr.mxu0 0.0
      %1803 = vmatpush2.msra.mxu0 0.0
      %1804 = vmatprep.mubr.f32.mxu0 0.0
      %1805 = vmatmul.mubr.f32.gmra.mxu0 %v1661
      %v1806 = vpop.f32.mrf.mxu0
      %v1807 = vadd.f32 0.0, %v1806
      %v1808 = vpop.f32.mrf.mxu0
      %1809 = vdwg.mxu0
      %v1810 = vadd.f32 %v1643, %v1736
      %v1811 = vadd.f32 %v1644, %v1738
      %v1812 = vadd.f32 %v1645, %v1807
      %v1813 = vld [vmem:[%s312] sm:$0xff]
      %v1814 = vld [vmem:[%s312 + $0x8] sm:$0xf]
      %v1816 = vcombine.high %v1813, %v1813
      %v1818 = vadd.f32 %v1810, %v1813
      %v1819 = vadd.f32 %v1811, %v1816
      %v1820 = vadd.f32 %v1812, %v1814
      %vm1821 = vcmp.ge.f32.partialorder %v1818, 0.0
      %vm1822 = vcmp.ge.f32.partialorder %v1819, 0.0
      %vm1823 = vcmp.ge.f32.partialorder %v1820, 0.0
      %v1824 = vmul.f32 %v1818, 0.01
      %v1825 = vmul.f32 %v1819, 0.01
      %v1826 = vmul.f32 %v1820, 0.01
      %v1827 = vsel %vm1821, %v1818, %v1824
      %v1828 = vsel %vm1822, %v1819, %v1825
      %v1829 = vsel %vm1823, %v1820, %v1826
      %v1830 = vld [vmem:[%s306] sm:$0x7]
      %v1832 = vlaneseq
      %v1833 = vshrl.u32 %v1832, 7
      %v1834 = vsub.s32 0, %v1833
      %v1835 = vrot.slane %v1830, %v1834
      %v1836 = vlaneseq
      %v1837 = vshrl.u32 %v1836, 7
      %v1838 = vsub.s32 1, %v1837
      %v1839 = vrot.slane %v1830, %v1838
      %v1840 = vlaneseq
      %v1841 = vshrl.u32 %v1840, 7
      %v1842 = vsub.s32 2, %v1841
      %v1843 = vrot.slane %v1830, %v1842
      %v1847 = vmul.f32 %v1827, %v1835
      %v1848 = vmul.f32 %v1828, %v1839
      %v1849 = vmul.f32 %v1829, %v1843
      %v1852 = vcombine.low %v1847, %v1848
      %1854 = vst [vmem:[%s318] sm:$0xff] %v1852
      %1855 = vst [vmem:[%s318 + $0x8] sm:$0xf] %v1849
      %s1856 = smul.u32 3, %s16
      %p1857 = scmp.lt.s32.totalorder %s1856, 5
      %s1858 = scalar_select %p1857, %s1856, 5
      %s1859 = smul.addr %s1858, 4
      %s1860 = scalar_lea.vmem %s5, %s1859
      // Predicated region
      $region41: #{resnet_block_forward.3} parent=39 // pred_check
        %p1861 = pneg %p163
      $region42: #{resnet_block_forward.3} parent=39 // pred_check_branch
        %1863 = sbr.rel (%p1861) target = $region44
      $region43: #{resnet_block_forward.3} parent=39 // pred_region
        %s1864 = smul.u32 3, %s16
      $region44: #{resnet_block_forward.3} parent=39 // pred_fallthru
        _
    $region40: #{resnet_block_forward.3} parent=5 // pred_fallthru
      _
    %p1865 = scmp.le.s32.totalorder 2, %s11
    // Predicated region
    $region45: #{resnet_block_forward.3} parent=5 // pred_check
      %p1866 = pneg %p1865
    $region46: #{resnet_block_forward.3} parent=5 // pred_check_branch
      %1868 = sbr.rel (%p1866) target = $region48
    $region47: #{resnet_block_forward.3} parent=5 // pred_region
      %s1869 = ssub.s32 %s11, 2
      // Predicated region
      $region49: #{resnet_block_forward.3} parent=47 // pred_check
        %p1870 = pneg %p169
      $region50: #{resnet_block_forward.3} parent=47 // pred_check_branch
        %1872 = sbr.rel (%p1870) target = $region52
      $region51: #{resnet_block_forward.3} parent=47 // pred_region
        %s1873 = smul.u32 3, %s17
        %p1874 = scmp.lt.s32.totalorder %s1873, 5
        %s1875 = scalar_select %p1874, %s1873, 5
        %s1876 = smul.addr %s1875, 4
        %s1877 = scalar_lea.vmem %s5, %s1876
      $region52: #{resnet_block_forward.3} parent=47 // pred_fallthru
        _
    $region48: #{resnet_block_forward.3} parent=5 // pred_fallthru
      _
  $region6: #{resnet_block_forward.3} parent=0 // loop_footer
    %s15 = sadd.s32 1, %s11
  $region7: #{resnet_block_forward.3} parent=0 // loop_footer_branch
    %10 = sbr.rel target = $region3
  $region8: #{resnet_block_forward.3} parent=0 // loop_exit
    _

// kernel: resnet_block_forward.2
$region0: #{resnet_block_forward.2}
  #allocation0 [shape = 'u32[]', space=smem, size = 0x4, offset = 0x4, fixed_abs, tag = 'smem constant byte address 0x4 - core index']
  #allocation1 [shape = 'u32[144,128]{1,0:T(1,128)}', space=vmem, size = 0x12000, scoped, tag = 'internal scratch']
  %s0 = inlined_call_operand.vmem [shape: f32[1,4,896], index: 0, kind: input, shape index: {}, may-alias: {0,1}]
  %s1 = inlined_call_operand.vmem [shape: f32[1,4,896], index: 1, kind: input, shape index: {}, may-alias: {0,1}]
  %s2 = inlined_call_operand.vmem [shape: f32[9,4,4], index: 2, kind: input, shape index: {}]
  %s3 = inlined_call_operand.vmem [shape: f32[1,768], index: 3, kind: input, shape index: {}]
  %s4 = inlined_call_operand.vmem [shape: f32[4,768], index: 4, kind: output, shape index: {}]
  %s5 = sld [smem:[#allocation0]]
  $region49: #{resnet_block_forward.2} parent=0
    _
  %s7 = ssub.s32 1, %s5
  %s8 = scalar_select 0, %s7, %s5
  loop: start=0, step=1, limit=4
  $region2: #{resnet_block_forward.2} parent=0 // loop_pre_header
    _
  $region3: #{resnet_block_forward.2} parent=0 // loop_header
    %s10 = sphi 0, %s14
    %p11 = scmp.ge.s32.totalorder %s10, 4
    %s20 = sphi 0, %s22
    %s23 = sphi 0, %s20
    %s24 = sphi 0, %s23
    %s40 = sphi 0, %s24
    %s50 = sphi 0, %s52
    %s53 = sphi 0, %s50
    %s54 = sphi 0, %s53
    %s70 = sphi 0, %s54
    %s74 = sphi 0, %s74
    %s76 = sphi 0, %s74
    %s77 = sphi 0, %s76
    %s91 = sphi 0, %s77
    %s97 = sphi 0, %s99
    %s100 = sphi 0, %s97
    %s101 = sphi 0, %s100
    %s117 = sphi 0, %s101
    %s123 = sphi 0, %s125
    %s126 = sphi 0, %s123
    %s127 = sphi 0, %s126
    %s143 = sphi 0, %s127
  $region4: #{resnet_block_forward.2} parent=0 // loop_header_branch
    %13 = sbr.rel (%p11) target = $region8
  $region5: #{resnet_block_forward.2} parent=0 // loop_body
    %s15 = ssub.s32 %s10, 1
    %s16 = ssub.s32 %s10, 2
    %s17 = sadd.s32 %s10, 1
    %s18 = ssub.s32 %s10, %s17
    %p19 = scmp.eq.s32.totalorder %s18, 0
    %s21 = sadd.s32 %s20, 1
    %s22 = scalar_select %p19, %s20, %s21
    %p25 = pneg %p19
    %p26 = scmp.eq.s32.totalorder %s10, 1
    %p27 = por %p25, %p26
    %p28 = scmp.ne.s32.totalorder %s20, %s23
    %p29 = scmp.eq.s32.totalorder %s10, 0
    %p30 = por %p28, %p29
    %p31 = scmp.ne.s32.totalorder %s20, %s23
    %p32 = scmp.eq.s32.totalorder %s15, 1
    %p33 = por %p31, %p32
    %p34 = scmp.ne.s32.totalorder %s23, %s24
    %p35 = scmp.eq.s32.totalorder %s15, 0
    %p36 = por %p34, %p35
    %p37 = scmp.ne.s32.totalorder %s23, %s24
    %p38 = scmp.eq.s32.totalorder %s16, 1
    %p39 = por %p37, %p38
    %p41 = scmp.ne.s32.totalorder %s24, %s40
    %p42 = scmp.eq.s32.totalorder %s16, 0
    %p43 = por %p41, %p42
    %s44 = sadd.s32 %s10, 1
    %s45 = smul.u32 %s44, 3
    %s46 = sadd.s32 %s17, 1
    %s47 = smul.u32 %s46, 3
    %s48 = ssub.s32 %s45, %s47
    %p49 = scmp.eq.s32.totalorder %s48, 0
    %s51 = sadd.s32 %s50, 1
    %s52 = scalar_select %p49, %s50, %s51
    %p55 = pneg %p49
    %p56 = scmp.eq.s32.totalorder %s10, 1
    %p57 = por %p55, %p56
    %p58 = scmp.ne.s32.totalorder %s50, %s53
    %p59 = scmp.eq.s32.totalorder %s10, 0
    %p60 = por %p58, %p59
    %p61 = scmp.ne.s32.totalorder %s50, %s53
    %p62 = scmp.eq.s32.totalorder %s15, 1
    %p63 = por %p61, %p62
    %p64 = scmp.ne.s32.totalorder %s53, %s54
    %p65 = scmp.eq.s32.totalorder %s15, 0
    %p66 = por %p64, %p65
    %p67 = scmp.ne.s32.totalorder %s53, %s54
    %p68 = scmp.eq.s32.totalorder %s16, 1
    %p69 = por %p67, %p68
    %p71 = scmp.ne.s32.totalorder %s54, %s70
    %p72 = scmp.eq.s32.totalorder %s16, 0
    %p73 = por %p71, %p72
    %s75 = sadd.s32 %s74, 1
    %p78 = scmp.eq.s32.totalorder %s10, 1
    %p79 = scmp.ne.s32.totalorder %s74, %s76
    %p80 = scmp.eq.s32.totalorder %s10, 0
    %p81 = por %p79, %p80
    %p82 = scmp.ne.s32.totalorder %s74, %s76
    %p83 = scmp.eq.s32.totalorder %s15, 1
    %p84 = por %p82, %p83
    %p85 = scmp.ne.s32.totalorder %s76, %s77
    %p86 = scmp.eq.s32.totalorder %s15, 0
    %p87 = por %p85, %p86
    %p88 = scmp.ne.s32.totalorder %s76, %s77
    %p89 = scmp.eq.s32.totalorder %s16, 1
    %p90 = por %p88, %p89
    %p92 = scmp.ne.s32.totalorder %s77, %s91
    %p93 = scmp.eq.s32.totalorder %s16, 0
    %p94 = por %p92, %p93
    %s95 = ssub.s32 %s10, %s17
    %p96 = scmp.eq.s32.totalorder %s95, 0
    %s98 = sadd.s32 %s97, 1
    %s99 = scalar_select %p96, %s97, %s98
    %p102 = pneg %p96
    %p103 = scmp.eq.s32.totalorder %s10, 1
    %p104 = por %p102, %p103
    %p105 = scmp.ne.s32.totalorder %s97, %s100
    %p106 = scmp.eq.s32.totalorder %s10, 0
    %p107 = por %p105, %p106
    %p108 = scmp.ne.s32.totalorder %s97, %s100
    %p109 = scmp.eq.s32.totalorder %s15, 1
    %p110 = por %p108, %p109
    %p111 = scmp.ne.s32.totalorder %s100, %s101
    %p112 = scmp.eq.s32.totalorder %s15, 0
    %p113 = por %p111, %p112
    %p114 = scmp.ne.s32.totalorder %s100, %s101
    %p115 = scmp.eq.s32.totalorder %s16, 1
    %p116 = por %p114, %p115
    %p118 = scmp.ne.s32.totalorder %s101, %s117
    %p119 = scmp.eq.s32.totalorder %s16, 0
    %p120 = por %p118, %p119
    %s121 = ssub.s32 %s10, %s17
    %p122 = scmp.eq.s32.totalorder %s121, 0
    %s124 = sadd.s32 %s123, 1
    %s125 = scalar_select %p122, %s123, %s124
    %p128 = pneg %p122
    %p129 = scmp.eq.s32.totalorder %s10, 1
    %p130 = por %p128, %p129
    %p131 = scmp.ne.s32.totalorder %s123, %s126
    %p132 = scmp.eq.s32.totalorder %s10, 0
    %p133 = por %p131, %p132
    %p134 = scmp.ne.s32.totalorder %s123, %s126
    %p135 = scmp.eq.s32.totalorder %s15, 1
    %p136 = por %p134, %p135
    %p137 = scmp.ne.s32.totalorder %s126, %s127
    %p138 = scmp.eq.s32.totalorder %s15, 0
    %p139 = por %p137, %p138
    %p140 = scmp.ne.s32.totalorder %s126, %s127
    %p141 = scmp.eq.s32.totalorder %s16, 1
    %p142 = por %p140, %p141
    %p144 = scmp.ne.s32.totalorder %s127, %s143
    %p145 = scmp.eq.s32.totalorder %s16, 0
    %p146 = por %p144, %p145
    %p147 = scmp.le.s32.totalorder 1, %s10
    %p148 = scmp.lt.s32.totalorder %s10, 3
    %p149 = pnand %p147, %p148
    %p150 = pneg %p149
    // Predicated region
    $region9: #{resnet_block_forward.2} parent=5 // pred_check
      _
    $region10: #{resnet_block_forward.2} parent=5 // pred_check_branch
      %152 = sbr.rel (%p149) target = $region12
    $region11: #{resnet_block_forward.2} parent=5 // pred_region
      %s153 = ssub.s32 %s10, 1
      // Predicated region
      $region13: #{resnet_block_forward.2} parent=11 // pred_check
        %p154 = pneg %p87
      $region14: #{resnet_block_forward.2} parent=11 // pred_check_branch
        %156 = sbr.rel (%p154) target = $region16
      $region15: #{resnet_block_forward.2} parent=11 // pred_region
        _
      $region16: #{resnet_block_forward.2} parent=11 // pred_fallthru
        _
    $region12: #{resnet_block_forward.2} parent=5 // pred_fallthru
      _
    %p157 = scmp.lt.s32.totalorder %s10, 2
    // Predicated region
    $region17: #{resnet_block_forward.2} parent=5 // pred_check
      %p158 = pneg %p157
    $region18: #{resnet_block_forward.2} parent=5 // pred_check_branch
      %160 = sbr.rel (%p158) target = $region20
    $region19: #{resnet_block_forward.2} parent=5 // pred_region
      // Predicated region
      $region21: #{resnet_block_forward.2} parent=19 // pred_check
        %p161 = pneg %p30
      $region22: #{resnet_block_forward.2} parent=19 // pred_check_branch
        %163 = sbr.rel (%p161) target = $region24
      $region23: #{resnet_block_forward.2} parent=19 // pred_region
        %s164 = smul.u32 3, %s10
        %s165 = ssub.s32 7, %s164
        %p166 = scmp.lt.s32.totalorder %s165, 3
        %s167 = scalar_select %p166, %s165, 3
        %s168 = smul.u32 64, %s167
        %p169 = scmp.lt.s32.totalorder %s164, 6
        %s170 = scalar_select %p169, %s164, 6
        %s171 = smul.addr %s170, 4
        %s172 = scalar_lea.vmem %s0, %s171
        %s173 = smul.u32 3, %s10
        %s174 = ssub.s32 7, %s173
        %p175 = scmp.lt.s32.totalorder %s174, 3
        %s176 = scalar_select %p175, %s174, 3
        %s177 = smul.u32 64, %s176
      $region24: #{resnet_block_forward.2} parent=19 // pred_fallthru
        _
      // Predicated region
      $region25: #{resnet_block_forward.2} parent=19 // pred_check
        %p178 = pneg %p60
      $region26: #{resnet_block_forward.2} parent=19 // pred_check_branch
        %180 = sbr.rel (%p178) target = $region28
      $region27: #{resnet_block_forward.2} parent=19 // pred_region
        %s181 = sadd.s32 %s10, 1
        %s182 = smul.u32 %s181, 3
        %p183 = scmp.lt.s32.totalorder %s182, 6
        %s184 = scalar_select %p183, %s182, 6
        %s185 = smul.addr %s184, 4
        %s186 = scalar_lea.vmem %s1, %s185
        %s187 = sadd.s32 %s10, 1
        %s188 = smul.u32 %s187, 3
      $region28: #{resnet_block_forward.2} parent=19 // pred_fallthru
        _
      // Predicated region
      $region29: #{resnet_block_forward.2} parent=19 // pred_check
        %p189 = pneg %p107
      $region30: #{resnet_block_forward.2} parent=19 // pred_check_branch
        %191 = sbr.rel (%p189) target = $region32
      $region31: #{resnet_block_forward.2} parent=19 // pred_region
        %s192 = smul.u32 3, %s10
        %p193 = scmp.lt.s32.totalorder %s192, 5
        %s194 = scalar_select %p193, %s192, 5
        %s195 = scalar_lea.vmem %s3, %s194
        %s196 = smul.u32 3, %s10
      $region32: #{resnet_block_forward.2} parent=19 // pred_fallthru
        _
    $region20: #{resnet_block_forward.2} parent=5 // pred_fallthru
      _
    %p197 = scmp.le.s32.totalorder 1, %s10
    %p198 = scmp.lt.s32.totalorder %s10, 3
    %p199 = pnand %p197, %p198
    %p200 = pneg %p199
    // Predicated region
    $region33: #{resnet_block_forward.2} parent=5 // pred_check
      _
    $region34: #{resnet_block_forward.2} parent=5 // pred_check_branch
      %202 = sbr.rel (%p199) target = $region36
    $region35: #{resnet_block_forward.2} parent=5 // pred_region
      %s203 = ssub.s32 %s10, 1
      %s204 = smul.u32 3, %s15
      %s205 = ssub.s32 7, %s204
      %p206 = scmp.lt.s32.totalorder %s205, 3
      %s207 = scalar_select %p206, %s205, 3
      %s208 = smul.u32 64, %s207
      %p209 = scmp.lt.s32.totalorder %s204, 6
      %s210 = scalar_select %p209, %s204, 6
      %s211 = smul.addr %s210, 4
      %s212 = scalar_lea.vmem %s0, %s211
      %p213 = pneg %p36
      %p214 = pneg %p33
      %s215 = sadd.s32 %s15, 1
      %s216 = smul.u32 %s215, 3
      %p217 = scmp.lt.s32.totalorder %s216, 6
      %s218 = scalar_select %p217, %s216, 6
      %s219 = smul.addr %s218, 4
      %s220 = scalar_lea.vmem %s1, %s219
      %p221 = pneg %p66
      %p222 = pneg %p63
      %p223 = pneg %p87
      %p224 = pneg %p84
      %s225 = smul.u32 3, %s15
      %p226 = scmp.lt.s32.totalorder %s225, 5
      %s227 = scalar_select %p226, %s225, 5
      %s228 = scalar_lea.vmem %s3, %s227
      %p229 = pneg %p113
      %p230 = pneg %p110
      %p231 = pneg %p139
      %p232 = pneg %p136
      %s233 = smul.u32 3, %s15
      %p234 = scmp.lt.s32.totalorder %s233, 5
      %s235 = scalar_select %p234, %s233, 5
      %s236 = smul.addr %s235, 4
      %s237 = scalar_lea.vmem %s4, %s236
      %s238 = smul.u32 3, %s15
      %s239 = ssub.s32 7, %s238
      %p240 = scmp.lt.s32.totalorder %s239, 3
      %s241 = scalar_select %p240, %s239, 3
      %s242 = smul.u32 64, %s241
      %p243 = scmp.lt.s32.totalorder %s238, 6
      %s244 = scalar_select %p243, %s238, 6
      %s245 = smul.addr %s244, 4
      %s246 = scalar_lea.vmem %s0, %s245
      %s247 = smul.u32 3, %s15
      %s248 = ssub.s32 7, %s247
      %p249 = scmp.lt.s32.totalorder %s248, 3
      %s250 = scalar_select %p249, %s248, 3
      %s251 = smul.u32 64, %s250
      %s252 = sadd.s32 %s15, 1
      %s253 = smul.u32 %s252, 3
      %p254 = scmp.lt.s32.totalorder %s253, 6
      %s255 = scalar_select %p254, %s253, 6
      %s256 = smul.addr %s255, 4
      %s257 = scalar_lea.vmem %s1, %s256
      %s258 = sadd.s32 %s15, 1
      %s259 = smul.u32 %s258, 3
      %s260 = smul.u32 3, %s15
      %p261 = scmp.lt.s32.totalorder %s260, 5
      %s262 = scalar_select %p261, %s260, 5
      %s263 = scalar_lea.vmem %s3, %s262
      %s264 = smul.u32 3, %s15
      %s265 = smul.u32 3, %s15
      %p266 = scmp.lt.s32.totalorder %s265, 5
      %s267 = scalar_select %p266, %s265, 5
      %s268 = smul.addr %s267, 4
      %s269 = scalar_lea.vmem %s4, %s268
      %s270 = smul.u32 3, %s15
      %v271 = vld [vmem:[%s246] sm:$0xff]
      %v272 = vld [vmem:[%s246 + $0x8] sm:$0xf]
      %v273 = vld [vmem:[%s257] sm:$0xf]
      %v276 = vcombine.high %v271, %v271
      %v277 = vld [vmem:[%s2] sm:$0xf]
      %s278 = scalar_lea.vmem %s2, 4
      %v279 = vld [vmem:[%s278] sm:$0xf]
      %281 = vrot.lane.b32.xlu0 %v271, 127
      %v282 = vpop.permute.xlu0 %281
      %283 = vrot.lane.b32.xlu0 %v276, 127
      %v284 = vpop.permute.xlu0 %283
      %285 = vrot.lane.b32.xlu0 %v272, 127
      %v286 = vpop.permute.xlu0 %285
      %287 = vrot.lane.b32.xlu0 %v273, 127
      %v288 = vpop.permute.xlu0 %287
      %vm289 = vcmask 1039360
      %v290 = vsel %vm289, %v282, %v284
      %v291 = vsel %vm289, %v284, %v286
      %v292 = vsel %vm289, %v286, %v288
      %vm293 = vcmask 31744
      %v295 = vsel %vm293, %v279, 0
      %vm297 = vcmask 1043456
      %v298 = vsel %vm297, %v290, 0
      %v300 = vsel %vm297, %v291, 0
      %v302 = vsel %vm297, %v292, 0
      %304 = vmatprep.subr.mxu0 0.0
      %305 = vmatpush1.msra.mxu0 0.0
      %306 = vmatprep.subr.mxu0 0.0
      %307 = vmatpush1.msra.mxu0 0.0
      %308 = vmatprep.subr.mxu0 0.0
      %309 = vmatpush1.msra.mxu0 0.0
      %310 = vmatprep.subr.mxu0 0.0
      %311 = vmatpush1.msra.mxu0 0.0
      %312 = vmatprep.subr.mxu0 0.0
      %313 = vmatpush1.msra.mxu0 0.0
      %314 = vmatprep.subr.mxu0 0.0
      %315 = vmatpush1.msra.mxu0 0.0
      %316 = vmatprep.subr.mxu0 0.0
      %317 = vmatpush1.msra.mxu0 0.0
      %318 = vmatprep.subr.mxu0 0.0
      %319 = vmatpush1.msra.mxu0 0.0
      %320 = vmatprep.subr.mxu0 0.0
      %321 = vmatpush1.msra.mxu0 0.0
      %322 = vmatprep.subr.mxu0 0.0
      %323 = vmatpush1.msra.mxu0 0.0
      %324 = vmatprep.subr.mxu0 0.0
      %325 = vmatpush1.msra.mxu0 0.0
      %326 = vmatprep.subr.mxu0 0.0
      %327 = vmatpush1.msra.mxu0 0.0
      %328 = vmatprep.subr.mxu0 0.0
      %329 = vmatpush1.msra.mxu0 0.0
      %330 = vmatprep.subr.mxu0 0.0
      %331 = vmatpush1.msra.mxu0 0.0
      %332 = vmatprep.subr.mxu0 0.0
      %333 = vmatpush1.msra.mxu0 0.0
      %334 = vmatprep.subr.mxu0 %v300
      %335 = vmatpush1.msra.mxu0 %v298
      %336 = vmatprep.subr.mxu0 0.0
      %337 = vmatpush2.msra.mxu0 0.0
      %338 = vmatprep.subr.mxu0 0.0
      %339 = vmatpush2.msra.mxu0 0.0
      %340 = vmatprep.subr.mxu0 0.0
      %341 = vmatpush2.msra.mxu0 0.0
      %342 = vmatprep.subr.mxu0 0.0
      %343 = vmatpush2.msra.mxu0 0.0
      %344 = vmatprep.subr.mxu0 0.0
      %345 = vmatpush2.msra.mxu0 0.0
      %346 = vmatprep.subr.mxu0 0.0
      %347 = vmatpush2.msra.mxu0 0.0
      %348 = vmatprep.subr.mxu0 0.0
      %349 = vmatpush2.msra.mxu0 0.0
      %350 = vmatprep.subr.mxu0 0.0
      %351 = vmatpush2.msra.mxu0 0.0
      %352 = vmatprep.subr.mxu0 0.0
      %353 = vmatpush2.msra.mxu0 0.0
      %354 = vmatprep.subr.mxu0 0.0
      %355 = vmatpush2.msra.mxu0 0.0
      %356 = vmatprep.subr.mxu0 0.0
      %357 = vmatpush2.msra.mxu0 0.0
      %358 = vmatprep.subr.mxu0 0.0
      %359 = vmatpush2.msra.mxu0 0.0
      %360 = vmatprep.subr.mxu0 0.0
      %361 = vmatpush2.msra.mxu0 0.0
      %362 = vmatprep.subr.mxu0 0.0
      %363 = vmatpush2.msra.mxu0 0.0
      %364 = vmatprep.subr.mxu0 0.0
      %365 = vmatpush2.msra.mxu0 0.0
      %366 = vmatprep.subr.mxu0 0.0
      %367 = vmatpush2.msra.mxu0 0.0
      %368 = vmatprep.mubr.f32.mxu0 0.0
      %369 = vmatmul.mubr.f32.gmra.mxu0 %v295
      %v370 = vpop.f32.mrf.mxu0
      %v371 = vadd.f32 0.0, %v370
      %v372 = vpop.f32.mrf.mxu0
      %v373 = vadd.f32 0.0, %v372
      %374 = vdwg.mxu0
      %375 = vmatprep.subr.mxu0 0.0
      %376 = vmatpush1.msra.mxu0 0.0
      %377 = vmatprep.subr.mxu0 0.0
      %378 = vmatpush1.msra.mxu0 0.0
      %379 = vmatprep.subr.mxu0 0.0
      %380 = vmatpush1.msra.mxu0 0.0
      %381 = vmatprep.subr.mxu0 0.0
      %382 = vmatpush1.msra.mxu0 0.0
      %383 = vmatprep.subr.mxu0 0.0
      %384 = vmatpush1.msra.mxu0 0.0
      %385 = vmatprep.subr.mxu0 0.0
      %386 = vmatpush1.msra.mxu0 0.0
      %387 = vmatprep.subr.mxu0 0.0
      %388 = vmatpush1.msra.mxu0 0.0
      %389 = vmatprep.subr.mxu0 0.0
      %390 = vmatpush1.msra.mxu0 0.0
      %391 = vmatprep.subr.mxu0 0.0
      %392 = vmatpush1.msra.mxu0 0.0
      %393 = vmatprep.subr.mxu0 0.0
      %394 = vmatpush1.msra.mxu0 0.0
      %395 = vmatprep.subr.mxu0 0.0
      %396 = vmatpush1.msra.mxu0 0.0
      %397 = vmatprep.subr.mxu0 0.0
      %398 = vmatpush1.msra.mxu0 0.0
      %399 = vmatprep.subr.mxu0 0.0
      %400 = vmatpush1.msra.mxu0 0.0
      %401 = vmatprep.subr.mxu0 0.0
      %402 = vmatpush1.msra.mxu0 0.0
      %403 = vmatprep.subr.mxu0 0.0
      %404 = vmatpush1.msra.mxu0 0.0
      %405 = vmatprep.subr.mxu0 0.0
      %406 = vmatpush1.msra.mxu0 %v302
      %407 = vmatprep.subr.mxu0 0.0
      %408 = vmatpush2.msra.mxu0 0.0
      %409 = vmatprep.subr.mxu0 0.0
      %410 = vmatpush2.msra.mxu0 0.0
      %411 = vmatprep.subr.mxu0 0.0
      %412 = vmatpush2.msra.mxu0 0.0
      %413 = vmatprep.subr.mxu0 0.0
      %414 = vmatpush2.msra.mxu0 0.0
      %415 = vmatprep.subr.mxu0 0.0
      %416 = vmatpush2.msra.mxu0 0.0
      %417 = vmatprep.subr.mxu0 0.0
      %418 = vmatpush2.msra.mxu0 0.0
      %419 = vmatprep.subr.mxu0 0.0
      %420 = vmatpush2.msra.mxu0 0.0
      %421 = vmatprep.subr.mxu0 0.0
      %422 = vmatpush2.msra.mxu0 0.0
      %423 = vmatprep.subr.mxu0 0.0
      %424 = vmatpush2.msra.mxu0 0.0
      %425 = vmatprep.subr.mxu0 0.0
      %426 = vmatpush2.msra.mxu0 0.0
      %427 = vmatprep.subr.mxu0 0.0
      %428 = vmatpush2.msra.mxu0 0.0
      %429 = vmatprep.subr.mxu0 0.0
      %430 = vmatpush2.msra.mxu0 0.0
      %431 = vmatprep.subr.mxu0 0.0
      %432 = vmatpush2.msra.mxu0 0.0
      %433 = vmatprep.subr.mxu0 0.0
      %434 = vmatpush2.msra.mxu0 0.0
      %435 = vmatprep.subr.mxu0 0.0
      %436 = vmatpush2.msra.mxu0 0.0
      %437 = vmatprep.subr.mxu0 0.0
      %438 = vmatpush2.msra.mxu0 0.0
      %439 = vmatprep.mubr.f32.mxu0 0.0
      %440 = vmatmul.mubr.f32.gmra.mxu0 %v295
      %v441 = vpop.f32.mrf.mxu0
      %v442 = vadd.f32 0.0, %v441
      %v443 = vpop.f32.mrf.mxu0
      %444 = vdwg.mxu0
      %v446 = vsel %vm293, %v277, 0
      %v448 = vsel %vm297, %v271, 0
      %v450 = vsel %vm297, %v276, 0
      %v452 = vsel %vm297, %v272, 0
      %454 = vmatprep.subr.mxu0 0.0
      %455 = vmatpush1.msra.mxu0 0.0
      %456 = vmatprep.subr.mxu0 0.0
      %457 = vmatpush1.msra.mxu0 0.0
      %458 = vmatprep.subr.mxu0 0.0
      %459 = vmatpush1.msra.mxu0 0.0
      %460 = vmatprep.subr.mxu0 0.0
      %461 = vmatpush1.msra.mxu0 0.0
      %462 = vmatprep.subr.mxu0 0.0
      %463 = vmatpush1.msra.mxu0 0.0
      %464 = vmatprep.subr.mxu0 0.0
      %465 = vmatpush1.msra.mxu0 0.0
      %466 = vmatprep.subr.mxu0 0.0
      %467 = vmatpush1.msra.mxu0 0.0
      %468 = vmatprep.subr.mxu0 0.0
      %469 = vmatpush1.msra.mxu0 0.0
      %470 = vmatprep.subr.mxu0 0.0
      %471 = vmatpush1.msra.mxu0 0.0
      %472 = vmatprep.subr.mxu0 0.0
      %473 = vmatpush1.msra.mxu0 0.0
      %474 = vmatprep.subr.mxu0 0.0
      %475 = vmatpush1.msra.mxu0 0.0
      %476 = vmatprep.subr.mxu0 0.0
      %477 = vmatpush1.msra.mxu0 0.0
      %478 = vmatprep.subr.mxu0 0.0
      %479 = vmatpush1.msra.mxu0 0.0
      %480 = vmatprep.subr.mxu0 0.0
      %481 = vmatpush1.msra.mxu0 0.0
      %482 = vmatprep.subr.mxu0 0.0
      %483 = vmatpush1.msra.mxu0 0.0
      %484 = vmatprep.subr.mxu0 %v450
      %485 = vmatpush1.msra.mxu0 %v448
      %486 = vmatprep.subr.mxu0 0.0
      %487 = vmatpush2.msra.mxu0 0.0
      %488 = vmatprep.subr.mxu0 0.0
      %489 = vmatpush2.msra.mxu0 0.0
      %490 = vmatprep.subr.mxu0 0.0
      %491 = vmatpush2.msra.mxu0 0.0
      %492 = vmatprep.subr.mxu0 0.0
      %493 = vmatpush2.msra.mxu0 0.0
      %494 = vmatprep.subr.mxu0 0.0
      %495 = vmatpush2.msra.mxu0 0.0
      %496 = vmatprep.subr.mxu0 0.0
      %497 = vmatpush2.msra.mxu0 0.0
      %498 = vmatprep.subr.mxu0 0.0
      %499 = vmatpush2.msra.mxu0 0.0
      %500 = vmatprep.subr.mxu0 0.0
      %501 = vmatpush2.msra.mxu0 0.0
      %502 = vmatprep.subr.mxu0 0.0
      %503 = vmatpush2.msra.mxu0 0.0
      %504 = vmatprep.subr.mxu0 0.0
      %505 = vmatpush2.msra.mxu0 0.0
      %506 = vmatprep.subr.mxu0 0.0
      %507 = vmatpush2.msra.mxu0 0.0
      %508 = vmatprep.subr.mxu0 0.0
      %509 = vmatpush2.msra.mxu0 0.0
      %510 = vmatprep.subr.mxu0 0.0
      %511 = vmatpush2.msra.mxu0 0.0
      %512 = vmatprep.subr.mxu0 0.0
      %513 = vmatpush2.msra.mxu0 0.0
      %514 = vmatprep.subr.mxu0 0.0
      %515 = vmatpush2.msra.mxu0 0.0
      %516 = vmatprep.subr.mxu0 0.0
      %517 = vmatpush2.msra.mxu0 0.0
      %518 = vmatprep.mubr.f32.mxu0 0.0
      %519 = vmatmul.mubr.f32.gmra.mxu0 %v446
      %v520 = vpop.f32.mrf.mxu0
      %v521 = vadd.f32 %v371, %v520
      %v522 = vpop.f32.mrf.mxu0
      %v523 = vadd.f32 %v373, %v522
      %524 = vdwg.mxu0
      %525 = vmatprep.subr.mxu0 0.0
      %526 = vmatpush1.msra.mxu0 0.0
      %527 = vmatprep.subr.mxu0 0.0
      %528 = vmatpush1.msra.mxu0 0.0
      %529 = vmatprep.subr.mxu0 0.0
      %530 = vmatpush1.msra.mxu0 0.0
      %531 = vmatprep.subr.mxu0 0.0
      %532 = vmatpush1.msra.mxu0 0.0
      %533 = vmatprep.subr.mxu0 0.0
      %534 = vmatpush1.msra.mxu0 0.0
      %535 = vmatprep.subr.mxu0 0.0
      %536 = vmatpush1.msra.mxu0 0.0
      %537 = vmatprep.subr.mxu0 0.0
      %538 = vmatpush1.msra.mxu0 0.0
      %539 = vmatprep.subr.mxu0 0.0
      %540 = vmatpush1.msra.mxu0 0.0
      %541 = vmatprep.subr.mxu0 0.0
      %542 = vmatpush1.msra.mxu0 0.0
      %543 = vmatprep.subr.mxu0 0.0
      %544 = vmatpush1.msra.mxu0 0.0
      %545 = vmatprep.subr.mxu0 0.0
      %546 = vmatpush1.msra.mxu0 0.0
      %547 = vmatprep.subr.mxu0 0.0
      %548 = vmatpush1.msra.mxu0 0.0
      %549 = vmatprep.subr.mxu0 0.0
      %550 = vmatpush1.msra.mxu0 0.0
      %551 = vmatprep.subr.mxu0 0.0
      %552 = vmatpush1.msra.mxu0 0.0
      %553 = vmatprep.subr.mxu0 0.0
      %554 = vmatpush1.msra.mxu0 0.0
      %555 = vmatprep.subr.mxu0 0.0
      %556 = vmatpush1.msra.mxu0 %v452
      %557 = vmatprep.subr.mxu0 0.0
      %558 = vmatpush2.msra.mxu0 0.0
      %559 = vmatprep.subr.mxu0 0.0
      %560 = vmatpush2.msra.mxu0 0.0
      %561 = vmatprep.subr.mxu0 0.0
      %562 = vmatpush2.msra.mxu0 0.0
      %563 = vmatprep.subr.mxu0 0.0
      %564 = vmatpush2.msra.mxu0 0.0
      %565 = vmatprep.subr.mxu0 0.0
      %566 = vmatpush2.msra.mxu0 0.0
      %567 = vmatprep.subr.mxu0 0.0
      %568 = vmatpush2.msra.mxu0 0.0
      %569 = vmatprep.subr.mxu0 0.0
      %570 = vmatpush2.msra.mxu0 0.0
      %571 = vmatprep.subr.mxu0 0.0
      %572 = vmatpush2.msra.mxu0 0.0
      %573 = vmatprep.subr.mxu0 0.0
      %574 = vmatpush2.msra.mxu0 0.0
      %575 = vmatprep.subr.mxu0 0.0
      %576 = vmatpush2.msra.mxu0 0.0
      %577 = vmatprep.subr.mxu0 0.0
      %578 = vmatpush2.msra.mxu0 0.0
      %579 = vmatprep.subr.mxu0 0.0
      %580 = vmatpush2.msra.mxu0 0.0
      %581 = vmatprep.subr.mxu0 0.0
      %582 = vmatpush2.msra.mxu0 0.0
      %583 = vmatprep.subr.mxu0 0.0
      %584 = vmatpush2.msra.mxu0 0.0
      %585 = vmatprep.subr.mxu0 0.0
      %586 = vmatpush2.msra.mxu0 0.0
      %587 = vmatprep.subr.mxu0 0.0
      %588 = vmatpush2.msra.mxu0 0.0
      %589 = vmatprep.mubr.f32.mxu0 0.0
      %590 = vmatmul.mubr.f32.gmra.mxu0 %v446
      %v591 = vpop.f32.mrf.mxu0
      %v592 = vadd.f32 %v442, %v591
      %v593 = vpop.f32.mrf.mxu0
      %594 = vdwg.mxu0
      %s595 = scalar_lea.vmem %s2, 8
      %v596 = vld [vmem:[%s595] sm:$0xf]
      %597 = vrot.lane.b32.xlu0 %v271, 126
      %v598 = vpop.permute.xlu0 %597
      %599 = vrot.lane.b32.xlu0 %v276, 126
      %v600 = vpop.permute.xlu0 %599
      %601 = vrot.lane.b32.xlu0 %v272, 126
      %v602 = vpop.permute.xlu0 %601
      %603 = vrot.lane.b32.xlu0 %v273, 126
      %v604 = vpop.permute.xlu0 %603
      %vm605 = vcmask 1031168
      %v606 = vsel %vm605, %v598, %v600
      %v607 = vsel %vm605, %v600, %v602
      %v608 = vsel %vm605, %v602, %v604
      %v610 = vsel %vm293, %v596, 0
      %v612 = vsel %vm297, %v606, 0
      %v614 = vsel %vm297, %v607, 0
      %v616 = vsel %vm297, %v608, 0
      %618 = vmatprep.subr.mxu0 0.0
      %619 = vmatpush1.msra.mxu0 0.0
      %620 = vmatprep.subr.mxu0 0.0
      %621 = vmatpush1.msra.mxu0 0.0
      %622 = vmatprep.subr.mxu0 0.0
      %623 = vmatpush1.msra.mxu0 0.0
      %624 = vmatprep.subr.mxu0 0.0
      %625 = vmatpush1.msra.mxu0 0.0
      %626 = vmatprep.subr.mxu0 0.0
      %627 = vmatpush1.msra.mxu0 0.0
      %628 = vmatprep.subr.mxu0 0.0
      %629 = vmatpush1.msra.mxu0 0.0
      %630 = vmatprep.subr.mxu0 0.0
      %631 = vmatpush1.msra.mxu0 0.0
      %632 = vmatprep.subr.mxu0 0.0
      %633 = vmatpush1.msra.mxu0 0.0
      %634 = vmatprep.subr.mxu0 0.0
      %635 = vmatpush1.msra.mxu0 0.0
      %636 = vmatprep.subr.mxu0 0.0
      %637 = vmatpush1.msra.mxu0 0.0
      %638 = vmatprep.subr.mxu0 0.0
      %639 = vmatpush1.msra.mxu0 0.0
      %640 = vmatprep.subr.mxu0 0.0
      %641 = vmatpush1.msra.mxu0 0.0
      %642 = vmatprep.subr.mxu0 0.0
      %643 = vmatpush1.msra.mxu0 0.0
      %644 = vmatprep.subr.mxu0 0.0
      %645 = vmatpush1.msra.mxu0 0.0
      %646 = vmatprep.subr.mxu0 0.0
      %647 = vmatpush1.msra.mxu0 0.0
      %648 = vmatprep.subr.mxu0 %v614
      %649 = vmatpush1.msra.mxu0 %v612
      %650 = vmatprep.subr.mxu0 0.0
      %651 = vmatpush2.msra.mxu0 0.0
      %652 = vmatprep.subr.mxu0 0.0
      %653 = vmatpush2.msra.mxu0 0.0
      %654 = vmatprep.subr.mxu0 0.0
      %655 = vmatpush2.msra.mxu0 0.0
      %656 = vmatprep.subr.mxu0 0.0
      %657 = vmatpush2.msra.mxu0 0.0
      %658 = vmatprep.subr.mxu0 0.0
      %659 = vmatpush2.msra.mxu0 0.0
      %660 = vmatprep.subr.mxu0 0.0
      %661 = vmatpush2.msra.mxu0 0.0
      %662 = vmatprep.subr.mxu0 0.0
      %663 = vmatpush2.msra.mxu0 0.0
      %664 = vmatprep.subr.mxu0 0.0
      %665 = vmatpush2.msra.mxu0 0.0
      %666 = vmatprep.subr.mxu0 0.0
      %667 = vmatpush2.msra.mxu0 0.0
      %668 = vmatprep.subr.mxu0 0.0
      %669 = vmatpush2.msra.mxu0 0.0
      %670 = vmatprep.subr.mxu0 0.0
      %671 = vmatpush2.msra.mxu0 0.0
      %672 = vmatprep.subr.mxu0 0.0
      %673 = vmatpush2.msra.mxu0 0.0
      %674 = vmatprep.subr.mxu0 0.0
      %675 = vmatpush2.msra.mxu0 0.0
      %676 = vmatprep.subr.mxu0 0.0
      %677 = vmatpush2.msra.mxu0 0.0
      %678 = vmatprep.subr.mxu0 0.0
      %679 = vmatpush2.msra.mxu0 0.0
      %680 = vmatprep.subr.mxu0 0.0
      %681 = vmatpush2.msra.mxu0 0.0
      %682 = vmatprep.mubr.f32.mxu0 0.0
      %683 = vmatmul.mubr.f32.gmra.mxu0 %v610
      %v684 = vpop.f32.mrf.mxu0
      %v685 = vadd.f32 0.0, %v684
      %v686 = vpop.f32.mrf.mxu0
      %v687 = vadd.f32 0.0, %v686
      %688 = vdwg.mxu0
      %689 = vmatprep.subr.mxu0 0.0
      %690 = vmatpush1.msra.mxu0 0.0
      %691 = vmatprep.subr.mxu0 0.0
      %692 = vmatpush1.msra.mxu0 0.0
      %693 = vmatprep.subr.mxu0 0.0
      %694 = vmatpush1.msra.mxu0 0.0
      %695 = vmatprep.subr.mxu0 0.0
      %696 = vmatpush1.msra.mxu0 0.0
      %697 = vmatprep.subr.mxu0 0.0
      %698 = vmatpush1.msra.mxu0 0.0
      %699 = vmatprep.subr.mxu0 0.0
      %700 = vmatpush1.msra.mxu0 0.0
      %701 = vmatprep.subr.mxu0 0.0
      %702 = vmatpush1.msra.mxu0 0.0
      %703 = vmatprep.subr.mxu0 0.0
      %704 = vmatpush1.msra.mxu0 0.0
      %705 = vmatprep.subr.mxu0 0.0
      %706 = vmatpush1.msra.mxu0 0.0
      %707 = vmatprep.subr.mxu0 0.0
      %708 = vmatpush1.msra.mxu0 0.0
      %709 = vmatprep.subr.mxu0 0.0
      %710 = vmatpush1.msra.mxu0 0.0
      %711 = vmatprep.subr.mxu0 0.0
      %712 = vmatpush1.msra.mxu0 0.0
      %713 = vmatprep.subr.mxu0 0.0
      %714 = vmatpush1.msra.mxu0 0.0
      %715 = vmatprep.subr.mxu0 0.0
      %716 = vmatpush1.msra.mxu0 0.0
      %717 = vmatprep.subr.mxu0 0.0
      %718 = vmatpush1.msra.mxu0 0.0
      %719 = vmatprep.subr.mxu0 0.0
      %720 = vmatpush1.msra.mxu0 %v616
      %721 = vmatprep.subr.mxu0 0.0
      %722 = vmatpush2.msra.mxu0 0.0
      %723 = vmatprep.subr.mxu0 0.0
      %724 = vmatpush2.msra.mxu0 0.0
      %725 = vmatprep.subr.mxu0 0.0
      %726 = vmatpush2.msra.mxu0 0.0
      %727 = vmatprep.subr.mxu0 0.0
      %728 = vmatpush2.msra.mxu0 0.0
      %729 = vmatprep.subr.mxu0 0.0
      %730 = vmatpush2.msra.mxu0 0.0
      %731 = vmatprep.subr.mxu0 0.0
      %732 = vmatpush2.msra.mxu0 0.0
      %733 = vmatprep.subr.mxu0 0.0
      %734 = vmatpush2.msra.mxu0 0.0
      %735 = vmatprep.subr.mxu0 0.0
      %736 = vmatpush2.msra.mxu0 0.0
      %737 = vmatprep.subr.mxu0 0.0
      %738 = vmatpush2.msra.mxu0 0.0
      %739 = vmatprep.subr.mxu0 0.0
      %740 = vmatpush2.msra.mxu0 0.0
      %741 = vmatprep.subr.mxu0 0.0
      %742 = vmatpush2.msra.mxu0 0.0
      %743 = vmatprep.subr.mxu0 0.0
      %744 = vmatpush2.msra.mxu0 0.0
      %745 = vmatprep.subr.mxu0 0.0
      %746 = vmatpush2.msra.mxu0 0.0
      %747 = vmatprep.subr.mxu0 0.0
      %748 = vmatpush2.msra.mxu0 0.0
      %749 = vmatprep.subr.mxu0 0.0
      %750 = vmatpush2.msra.mxu0 0.0
      %751 = vmatprep.subr.mxu0 0.0
      %752 = vmatpush2.msra.mxu0 0.0
      %753 = vmatprep.mubr.f32.mxu0 0.0
      %754 = vmatmul.mubr.f32.gmra.mxu0 %v610
      %v755 = vpop.f32.mrf.mxu0
      %v756 = vadd.f32 0.0, %v755
      %v757 = vpop.f32.mrf.mxu0
      %758 = vdwg.mxu0
      %v759 = vadd.f32 %v521, %v685
      %v760 = vadd.f32 %v523, %v687
      %v761 = vadd.f32 %v592, %v756
      %s762 = scalar_lea.vmem %s2, 12
      %v763 = vld [vmem:[%s762] sm:$0xf]
      %764 = vrot.lane.b32.xlu0 %v271, 110
      %v765 = vpop.permute.xlu0 %764
      %766 = vrot.lane.b32.xlu0 %v276, 110
      %v767 = vpop.permute.xlu0 %766
      %768 = vrot.lane.b32.xlu0 %v272, 110
      %v769 = vpop.permute.xlu0 %768
      %770 = vrot.lane.b32.xlu0 %v273, 110
      %v771 = vpop.permute.xlu0 %770
      %vm772 = vcmask 900096
      %v773 = vsel %vm772, %v765, %v767
      %v774 = vsel %vm772, %v767, %v769
      %v775 = vsel %vm772, %v769, %v771
      %v777 = vsel %vm293, %v763, 0
      %v779 = vsel %vm297, %v773, 0
      %v781 = vsel %vm297, %v774, 0
      %v783 = vsel %vm297, %v775, 0
      %785 = vmatprep.subr.mxu0 0.0
      %786 = vmatpush1.msra.mxu0 0.0
      %787 = vmatprep.subr.mxu0 0.0
      %788 = vmatpush1.msra.mxu0 0.0
      %789 = vmatprep.subr.mxu0 0.0
      %790 = vmatpush1.msra.mxu0 0.0
      %791 = vmatprep.subr.mxu0 0.0
      %792 = vmatpush1.msra.mxu0 0.0
      %793 = vmatprep.subr.mxu0 0.0
      %794 = vmatpush1.msra.mxu0 0.0
      %795 = vmatprep.subr.mxu0 0.0
      %796 = vmatpush1.msra.mxu0 0.0
      %797 = vmatprep.subr.mxu0 0.0
      %798 = vmatpush1.msra.mxu0 0.0
      %799 = vmatprep.subr.mxu0 0.0
      %800 = vmatpush1.msra.mxu0 0.0
      %801 = vmatprep.subr.mxu0 0.0
      %802 = vmatpush1.msra.mxu0 0.0
      %803 = vmatprep.subr.mxu0 0.0
      %804 = vmatpush1.msra.mxu0 0.0
      %805 = vmatprep.subr.mxu0 0.0
      %806 = vmatpush1.msra.mxu0 0.0
      %807 = vmatprep.subr.mxu0 0.0
      %808 = vmatpush1.msra.mxu0 0.0
      %809 = vmatprep.subr.mxu0 0.0
      %810 = vmatpush1.msra.mxu0 0.0
      %811 = vmatprep.subr.mxu0 0.0
      %812 = vmatpush1.msra.mxu0 0.0
      %813 = vmatprep.subr.mxu0 0.0
      %814 = vmatpush1.msra.mxu0 0.0
      %815 = vmatprep.subr.mxu0 %v781
      %816 = vmatpush1.msra.mxu0 %v779
      %817 = vmatprep.subr.mxu0 0.0
      %818 = vmatpush2.msra.mxu0 0.0
      %819 = vmatprep.subr.mxu0 0.0
      %820 = vmatpush2.msra.mxu0 0.0
      %821 = vmatprep.subr.mxu0 0.0
      %822 = vmatpush2.msra.mxu0 0.0
      %823 = vmatprep.subr.mxu0 0.0
      %824 = vmatpush2.msra.mxu0 0.0
      %825 = vmatprep.subr.mxu0 0.0
      %826 = vmatpush2.msra.mxu0 0.0
      %827 = vmatprep.subr.mxu0 0.0
      %828 = vmatpush2.msra.mxu0 0.0
      %829 = vmatprep.subr.mxu0 0.0
      %830 = vmatpush2.msra.mxu0 0.0
      %831 = vmatprep.subr.mxu0 0.0
      %832 = vmatpush2.msra.mxu0 0.0
      %833 = vmatprep.subr.mxu0 0.0
      %834 = vmatpush2.msra.mxu0 0.0
      %835 = vmatprep.subr.mxu0 0.0
      %836 = vmatpush2.msra.mxu0 0.0
      %837 = vmatprep.subr.mxu0 0.0
      %838 = vmatpush2.msra.mxu0 0.0
      %839 = vmatprep.subr.mxu0 0.0
      %840 = vmatpush2.msra.mxu0 0.0
      %841 = vmatprep.subr.mxu0 0.0
      %842 = vmatpush2.msra.mxu0 0.0
      %843 = vmatprep.subr.mxu0 0.0
      %844 = vmatpush2.msra.mxu0 0.0
      %845 = vmatprep.subr.mxu0 0.0
      %846 = vmatpush2.msra.mxu0 0.0
      %847 = vmatprep.subr.mxu0 0.0
      %848 = vmatpush2.msra.mxu0 0.0
      %849 = vmatprep.mubr.f32.mxu0 0.0
      %850 = vmatmul.mubr.f32.gmra.mxu0 %v777
      %v851 = vpop.f32.mrf.mxu0
      %v852 = vadd.f32 0.0, %v851
      %v853 = vpop.f32.mrf.mxu0
      %v854 = vadd.f32 0.0, %v853
      %855 = vdwg.mxu0
      %856 = vmatprep.subr.mxu0 0.0
      %857 = vmatpush1.msra.mxu0 0.0
      %858 = vmatprep.subr.mxu0 0.0
      %859 = vmatpush1.msra.mxu0 0.0
      %860 = vmatprep.subr.mxu0 0.0
      %861 = vmatpush1.msra.mxu0 0.0
      %862 = vmatprep.subr.mxu0 0.0
      %863 = vmatpush1.msra.mxu0 0.0
      %864 = vmatprep.subr.mxu0 0.0
      %865 = vmatpush1.msra.mxu0 0.0
      %866 = vmatprep.subr.mxu0 0.0
      %867 = vmatpush1.msra.mxu0 0.0
      %868 = vmatprep.subr.mxu0 0.0
      %869 = vmatpush1.msra.mxu0 0.0
      %870 = vmatprep.subr.mxu0 0.0
      %871 = vmatpush1.msra.mxu0 0.0
      %872 = vmatprep.subr.mxu0 0.0
      %873 = vmatpush1.msra.mxu0 0.0
      %874 = vmatprep.subr.mxu0 0.0
      %875 = vmatpush1.msra.mxu0 0.0
      %876 = vmatprep.subr.mxu0 0.0
      %877 = vmatpush1.msra.mxu0 0.0
      %878 = vmatprep.subr.mxu0 0.0
      %879 = vmatpush1.msra.mxu0 0.0
      %880 = vmatprep.subr.mxu0 0.0
      %881 = vmatpush1.msra.mxu0 0.0
      %882 = vmatprep.subr.mxu0 0.0
      %883 = vmatpush1.msra.mxu0 0.0
      %884 = vmatprep.subr.mxu0 0.0
      %885 = vmatpush1.msra.mxu0 0.0
      %886 = vmatprep.subr.mxu0 0.0
      %887 = vmatpush1.msra.mxu0 %v783
      %888 = vmatprep.subr.mxu0 0.0
      %889 = vmatpush2.msra.mxu0 0.0
      %890 = vmatprep.subr.mxu0 0.0
      %891 = vmatpush2.msra.mxu0 0.0
      %892 = vmatprep.subr.mxu0 0.0
      %893 = vmatpush2.msra.mxu0 0.0
      %894 = vmatprep.subr.mxu0 0.0
      %895 = vmatpush2.msra.mxu0 0.0
      %896 = vmatprep.subr.mxu0 0.0
      %897 = vmatpush2.msra.mxu0 0.0
      %898 = vmatprep.subr.mxu0 0.0
      %899 = vmatpush2.msra.mxu0 0.0
      %900 = vmatprep.subr.mxu0 0.0
      %901 = vmatpush2.msra.mxu0 0.0
      %902 = vmatprep.subr.mxu0 0.0
      %903 = vmatpush2.msra.mxu0 0.0
      %904 = vmatprep.subr.mxu0 0.0
      %905 = vmatpush2.msra.mxu0 0.0
      %906 = vmatprep.subr.mxu0 0.0
      %907 = vmatpush2.msra.mxu0 0.0
      %908 = vmatprep.subr.mxu0 0.0
      %909 = vmatpush2.msra.mxu0 0.0
      %910 = vmatprep.subr.mxu0 0.0
      %911 = vmatpush2.msra.mxu0 0.0
      %912 = vmatprep.subr.mxu0 0.0
      %913 = vmatpush2.msra.mxu0 0.0
      %914 = vmatprep.subr.mxu0 0.0
      %915 = vmatpush2.msra.mxu0 0.0
      %916 = vmatprep.subr.mxu0 0.0
      %917 = vmatpush2.msra.mxu0 0.0
      %918 = vmatprep.subr.mxu0 0.0
      %919 = vmatpush2.msra.mxu0 0.0
      %920 = vmatprep.mubr.f32.mxu0 0.0
      %921 = vmatmul.mubr.f32.gmra.mxu0 %v777
      %v922 = vpop.f32.mrf.mxu0
      %v923 = vadd.f32 0.0, %v922
      %v924 = vpop.f32.mrf.mxu0
      %925 = vdwg.mxu0
      %v926 = vadd.f32 %v759, %v852
      %v927 = vadd.f32 %v760, %v854
      %v928 = vadd.f32 %v761, %v923
      %s929 = scalar_lea.vmem %s2, 16
      %v930 = vld [vmem:[%s929] sm:$0xf]
      %931 = vrot.lane.b32.xlu0 %v271, 109
      %v932 = vpop.permute.xlu0 %931
      %933 = vrot.lane.b32.xlu0 %v276, 109
      %v934 = vpop.permute.xlu0 %933
      %935 = vrot.lane.b32.xlu0 %v272, 109
      %v936 = vpop.permute.xlu0 %935
      %937 = vrot.lane.b32.xlu0 %v273, 109
      %v938 = vpop.permute.xlu0 %937
      %vm939 = vcmask 891904
      %v940 = vsel %vm939, %v932, %v934
      %v941 = vsel %vm939, %v934, %v936
      %v942 = vsel %vm939, %v936, %v938
      %v944 = vsel %vm293, %v930, 0
      %v946 = vsel %vm297, %v940, 0
      %v948 = vsel %vm297, %v941, 0
      %v950 = vsel %vm297, %v942, 0
      %952 = vmatprep.subr.mxu0 0.0
      %953 = vmatpush1.msra.mxu0 0.0
      %954 = vmatprep.subr.mxu0 0.0
      %955 = vmatpush1.msra.mxu0 0.0
      %956 = vmatprep.subr.mxu0 0.0
      %957 = vmatpush1.msra.mxu0 0.0
      %958 = vmatprep.subr.mxu0 0.0
      %959 = vmatpush1.msra.mxu0 0.0
      %960 = vmatprep.subr.mxu0 0.0
      %961 = vmatpush1.msra.mxu0 0.0
      %962 = vmatprep.subr.mxu0 0.0
      %963 = vmatpush1.msra.mxu0 0.0
      %964 = vmatprep.subr.mxu0 0.0
      %965 = vmatpush1.msra.mxu0 0.0
      %966 = vmatprep.subr.mxu0 0.0
      %967 = vmatpush1.msra.mxu0 0.0
      %968 = vmatprep.subr.mxu0 0.0
      %969 = vmatpush1.msra.mxu0 0.0
      %970 = vmatprep.subr.mxu0 0.0
      %971 = vmatpush1.msra.mxu0 0.0
      %972 = vmatprep.subr.mxu0 0.0
      %973 = vmatpush1.msra.mxu0 0.0
      %974 = vmatprep.subr.mxu0 0.0
      %975 = vmatpush1.msra.mxu0 0.0
      %976 = vmatprep.subr.mxu0 0.0
      %977 = vmatpush1.msra.mxu0 0.0
      %978 = vmatprep.subr.mxu0 0.0
      %979 = vmatpush1.msra.mxu0 0.0
      %980 = vmatprep.subr.mxu0 0.0
      %981 = vmatpush1.msra.mxu0 0.0
      %982 = vmatprep.subr.mxu0 %v948
      %983 = vmatpush1.msra.mxu0 %v946
      %984 = vmatprep.subr.mxu0 0.0
      %985 = vmatpush2.msra.mxu0 0.0
      %986 = vmatprep.subr.mxu0 0.0
      %987 = vmatpush2.msra.mxu0 0.0
      %988 = vmatprep.subr.mxu0 0.0
      %989 = vmatpush2.msra.mxu0 0.0
      %990 = vmatprep.subr.mxu0 0.0
      %991 = vmatpush2.msra.mxu0 0.0
      %992 = vmatprep.subr.mxu0 0.0
      %993 = vmatpush2.msra.mxu0 0.0
      %994 = vmatprep.subr.mxu0 0.0
      %995 = vmatpush2.msra.mxu0 0.0
      %996 = vmatprep.subr.mxu0 0.0
      %997 = vmatpush2.msra.mxu0 0.0
      %998 = vmatprep.subr.mxu0 0.0
      %999 = vmatpush2.msra.mxu0 0.0
      %1000 = vmatprep.subr.mxu0 0.0
      %1001 = vmatpush2.msra.mxu0 0.0
      %1002 = vmatprep.subr.mxu0 0.0
      %1003 = vmatpush2.msra.mxu0 0.0
      %1004 = vmatprep.subr.mxu0 0.0
      %1005 = vmatpush2.msra.mxu0 0.0
      %1006 = vmatprep.subr.mxu0 0.0
      %1007 = vmatpush2.msra.mxu0 0.0
      %1008 = vmatprep.subr.mxu0 0.0
      %1009 = vmatpush2.msra.mxu0 0.0
      %1010 = vmatprep.subr.mxu0 0.0
      %1011 = vmatpush2.msra.mxu0 0.0
      %1012 = vmatprep.subr.mxu0 0.0
      %1013 = vmatpush2.msra.mxu0 0.0
      %1014 = vmatprep.subr.mxu0 0.0
      %1015 = vmatpush2.msra.mxu0 0.0
      %1016 = vmatprep.mubr.f32.mxu0 0.0
      %1017 = vmatmul.mubr.f32.gmra.mxu0 %v944
      %v1018 = vpop.f32.mrf.mxu0
      %v1019 = vadd.f32 0.0, %v1018
      %v1020 = vpop.f32.mrf.mxu0
      %v1021 = vadd.f32 0.0, %v1020
      %1022 = vdwg.mxu0
      %1023 = vmatprep.subr.mxu0 0.0
      %1024 = vmatpush1.msra.mxu0 0.0
      %1025 = vmatprep.subr.mxu0 0.0
      %1026 = vmatpush1.msra.mxu0 0.0
      %1027 = vmatprep.subr.mxu0 0.0
      %1028 = vmatpush1.msra.mxu0 0.0
      %1029 = vmatprep.subr.mxu0 0.0
      %1030 = vmatpush1.msra.mxu0 0.0
      %1031 = vmatprep.subr.mxu0 0.0
      %1032 = vmatpush1.msra.mxu0 0.0
      %1033 = vmatprep.subr.mxu0 0.0
      %1034 = vmatpush1.msra.mxu0 0.0
      %1035 = vmatprep.subr.mxu0 0.0
      %1036 = vmatpush1.msra.mxu0 0.0
      %1037 = vmatprep.subr.mxu0 0.0
      %1038 = vmatpush1.msra.mxu0 0.0
      %1039 = vmatprep.subr.mxu0 0.0
      %1040 = vmatpush1.msra.mxu0 0.0
      %1041 = vmatprep.subr.mxu0 0.0
      %1042 = vmatpush1.msra.mxu0 0.0
      %1043 = vmatprep.subr.mxu0 0.0
      %1044 = vmatpush1.msra.mxu0 0.0
      %1045 = vmatprep.subr.mxu0 0.0
      %1046 = vmatpush1.msra.mxu0 0.0
      %1047 = vmatprep.subr.mxu0 0.0
      %1048 = vmatpush1.msra.mxu0 0.0
      %1049 = vmatprep.subr.mxu0 0.0
      %1050 = vmatpush1.msra.mxu0 0.0
      %1051 = vmatprep.subr.mxu0 0.0
      %1052 = vmatpush1.msra.mxu0 0.0
      %1053 = vmatprep.subr.mxu0 0.0
      %1054 = vmatpush1.msra.mxu0 %v950
      %1055 = vmatprep.subr.mxu0 0.0
      %1056 = vmatpush2.msra.mxu0 0.0
      %1057 = vmatprep.subr.mxu0 0.0
      %1058 = vmatpush2.msra.mxu0 0.0
      %1059 = vmatprep.subr.mxu0 0.0
      %1060 = vmatpush2.msra.mxu0 0.0
      %1061 = vmatprep.subr.mxu0 0.0
      %1062 = vmatpush2.msra.mxu0 0.0
      %1063 = vmatprep.subr.mxu0 0.0
      %1064 = vmatpush2.msra.mxu0 0.0
      %1065 = vmatprep.subr.mxu0 0.0
      %1066 = vmatpush2.msra.mxu0 0.0
      %1067 = vmatprep.subr.mxu0 0.0
      %1068 = vmatpush2.msra.mxu0 0.0
      %1069 = vmatprep.subr.mxu0 0.0
      %1070 = vmatpush2.msra.mxu0 0.0
      %1071 = vmatprep.subr.mxu0 0.0
      %1072 = vmatpush2.msra.mxu0 0.0
      %1073 = vmatprep.subr.mxu0 0.0
      %1074 = vmatpush2.msra.mxu0 0.0
      %1075 = vmatprep.subr.mxu0 0.0
      %1076 = vmatpush2.msra.mxu0 0.0
      %1077 = vmatprep.subr.mxu0 0.0
      %1078 = vmatpush2.msra.mxu0 0.0
      %1079 = vmatprep.subr.mxu0 0.0
      %1080 = vmatpush2.msra.mxu0 0.0
      %1081 = vmatprep.subr.mxu0 0.0
      %1082 = vmatpush2.msra.mxu0 0.0
      %1083 = vmatprep.subr.mxu0 0.0
      %1084 = vmatpush2.msra.mxu0 0.0
      %1085 = vmatprep.subr.mxu0 0.0
      %1086 = vmatpush2.msra.mxu0 0.0
      %1087 = vmatprep.mubr.f32.mxu0 0.0
      %1088 = vmatmul.mubr.f32.gmra.mxu0 %v944
      %v1089 = vpop.f32.mrf.mxu0
      %v1090 = vadd.f32 0.0, %v1089
      %v1091 = vpop.f32.mrf.mxu0
      %1092 = vdwg.mxu0
      %v1093 = vadd.f32 %v926, %v1019
      %v1094 = vadd.f32 %v927, %v1021
      %v1095 = vadd.f32 %v928, %v1090
      %s1096 = scalar_lea.vmem %s2, 20
      %v1097 = vld [vmem:[%s1096] sm:$0xf]
      %1098 = vrot.lane.b32.xlu0 %v271, 108
      %v1099 = vpop.permute.xlu0 %1098
      %1100 = vrot.lane.b32.xlu0 %v276, 108
      %v1101 = vpop.permute.xlu0 %1100
      %1102 = vrot.lane.b32.xlu0 %v272, 108
      %v1103 = vpop.permute.xlu0 %1102
      %1104 = vrot.lane.b32.xlu0 %v273, 108
      %v1105 = vpop.permute.xlu0 %1104
      %vm1106 = vcmask 883712
      %v1107 = vsel %vm1106, %v1099, %v1101
      %v1108 = vsel %vm1106, %v1101, %v1103
      %v1109 = vsel %vm1106, %v1103, %v1105
      %v1111 = vsel %vm293, %v1097, 0
      %v1113 = vsel %vm297, %v1107, 0
      %v1115 = vsel %vm297, %v1108, 0
      %v1117 = vsel %vm297, %v1109, 0
      %1119 = vmatprep.subr.mxu0 0.0
      %1120 = vmatpush1.msra.mxu0 0.0
      %1121 = vmatprep.subr.mxu0 0.0
      %1122 = vmatpush1.msra.mxu0 0.0
      %1123 = vmatprep.subr.mxu0 0.0
      %1124 = vmatpush1.msra.mxu0 0.0
      %1125 = vmatprep.subr.mxu0 0.0
      %1126 = vmatpush1.msra.mxu0 0.0
      %1127 = vmatprep.subr.mxu0 0.0
      %1128 = vmatpush1.msra.mxu0 0.0
      %1129 = vmatprep.subr.mxu0 0.0
      %1130 = vmatpush1.msra.mxu0 0.0
      %1131 = vmatprep.subr.mxu0 0.0
      %1132 = vmatpush1.msra.mxu0 0.0
      %1133 = vmatprep.subr.mxu0 0.0
      %1134 = vmatpush1.msra.mxu0 0.0
      %1135 = vmatprep.subr.mxu0 0.0
      %1136 = vmatpush1.msra.mxu0 0.0
      %1137 = vmatprep.subr.mxu0 0.0
      %1138 = vmatpush1.msra.mxu0 0.0
      %1139 = vmatprep.subr.mxu0 0.0
      %1140 = vmatpush1.msra.mxu0 0.0
      %1141 = vmatprep.subr.mxu0 0.0
      %1142 = vmatpush1.msra.mxu0 0.0
      %1143 = vmatprep.subr.mxu0 0.0
      %1144 = vmatpush1.msra.mxu0 0.0
      %1145 = vmatprep.subr.mxu0 0.0
      %1146 = vmatpush1.msra.mxu0 0.0
      %1147 = vmatprep.subr.mxu0 0.0
      %1148 = vmatpush1.msra.mxu0 0.0
      %1149 = vmatprep.subr.mxu0 %v1115
      %1150 = vmatpush1.msra.mxu0 %v1113
      %1151 = vmatprep.subr.mxu0 0.0
      %1152 = vmatpush2.msra.mxu0 0.0
      %1153 = vmatprep.subr.mxu0 0.0
      %1154 = vmatpush2.msra.mxu0 0.0
      %1155 = vmatprep.subr.mxu0 0.0
      %1156 = vmatpush2.msra.mxu0 0.0
      %1157 = vmatprep.subr.mxu0 0.0
      %1158 = vmatpush2.msra.mxu0 0.0
      %1159 = vmatprep.subr.mxu0 0.0
      %1160 = vmatpush2.msra.mxu0 0.0
      %1161 = vmatprep.subr.mxu0 0.0
      %1162 = vmatpush2.msra.mxu0 0.0
      %1163 = vmatprep.subr.mxu0 0.0
      %1164 = vmatpush2.msra.mxu0 0.0
      %1165 = vmatprep.subr.mxu0 0.0
      %1166 = vmatpush2.msra.mxu0 0.0
      %1167 = vmatprep.subr.mxu0 0.0
      %1168 = vmatpush2.msra.mxu0 0.0
      %1169 = vmatprep.subr.mxu0 0.0
      %1170 = vmatpush2.msra.mxu0 0.0
      %1171 = vmatprep.subr.mxu0 0.0
      %1172 = vmatpush2.msra.mxu0 0.0
      %1173 = vmatprep.subr.mxu0 0.0
      %1174 = vmatpush2.msra.mxu0 0.0
      %1175 = vmatprep.subr.mxu0 0.0
      %1176 = vmatpush2.msra.mxu0 0.0
      %1177 = vmatprep.subr.mxu0 0.0
      %1178 = vmatpush2.msra.mxu0 0.0
      %1179 = vmatprep.subr.mxu0 0.0
      %1180 = vmatpush2.msra.mxu0 0.0
      %1181 = vmatprep.subr.mxu0 0.0
      %1182 = vmatpush2.msra.mxu0 0.0
      %1183 = vmatprep.mubr.f32.mxu0 0.0
      %1184 = vmatmul.mubr.f32.gmra.mxu0 %v1111
      %v1185 = vpop.f32.mrf.mxu0
      %v1186 = vadd.f32 0.0, %v1185
      %v1187 = vpop.f32.mrf.mxu0
      %v1188 = vadd.f32 0.0, %v1187
      %1189 = vdwg.mxu0
      %1190 = vmatprep.subr.mxu0 0.0
      %1191 = vmatpush1.msra.mxu0 0.0
      %1192 = vmatprep.subr.mxu0 0.0
      %1193 = vmatpush1.msra.mxu0 0.0
      %1194 = vmatprep.subr.mxu0 0.0
      %1195 = vmatpush1.msra.mxu0 0.0
      %1196 = vmatprep.subr.mxu0 0.0
      %1197 = vmatpush1.msra.mxu0 0.0
      %1198 = vmatprep.subr.mxu0 0.0
      %1199 = vmatpush1.msra.mxu0 0.0
      %1200 = vmatprep.subr.mxu0 0.0
      %1201 = vmatpush1.msra.mxu0 0.0
      %1202 = vmatprep.subr.mxu0 0.0
      %1203 = vmatpush1.msra.mxu0 0.0
      %1204 = vmatprep.subr.mxu0 0.0
      %1205 = vmatpush1.msra.mxu0 0.0
      %1206 = vmatprep.subr.mxu0 0.0
      %1207 = vmatpush1.msra.mxu0 0.0
      %1208 = vmatprep.subr.mxu0 0.0
      %1209 = vmatpush1.msra.mxu0 0.0
      %1210 = vmatprep.subr.mxu0 0.0
      %1211 = vmatpush1.msra.mxu0 0.0
      %1212 = vmatprep.subr.mxu0 0.0
      %1213 = vmatpush1.msra.mxu0 0.0
      %1214 = vmatprep.subr.mxu0 0.0
      %1215 = vmatpush1.msra.mxu0 0.0
      %1216 = vmatprep.subr.mxu0 0.0
      %1217 = vmatpush1.msra.mxu0 0.0
      %1218 = vmatprep.subr.mxu0 0.0
      %1219 = vmatpush1.msra.mxu0 0.0
      %1220 = vmatprep.subr.mxu0 0.0
      %1221 = vmatpush1.msra.mxu0 %v1117
      %1222 = vmatprep.subr.mxu0 0.0
      %1223 = vmatpush2.msra.mxu0 0.0
      %1224 = vmatprep.subr.mxu0 0.0
      %1225 = vmatpush2.msra.mxu0 0.0
      %1226 = vmatprep.subr.mxu0 0.0
      %1227 = vmatpush2.msra.mxu0 0.0
      %1228 = vmatprep.subr.mxu0 0.0
      %1229 = vmatpush2.msra.mxu0 0.0
      %1230 = vmatprep.subr.mxu0 0.0
      %1231 = vmatpush2.msra.mxu0 0.0
      %1232 = vmatprep.subr.mxu0 0.0
      %1233 = vmatpush2.msra.mxu0 0.0
      %1234 = vmatprep.subr.mxu0 0.0
      %1235 = vmatpush2.msra.mxu0 0.0
      %1236 = vmatprep.subr.mxu0 0.0
      %1237 = vmatpush2.msra.mxu0 0.0
      %1238 = vmatprep.subr.mxu0 0.0
      %1239 = vmatpush2.msra.mxu0 0.0
      %1240 = vmatprep.subr.mxu0 0.0
      %1241 = vmatpush2.msra.mxu0 0.0
      %1242 = vmatprep.subr.mxu0 0.0
      %1243 = vmatpush2.msra.mxu0 0.0
      %1244 = vmatprep.subr.mxu0 0.0
      %1245 = vmatpush2.msra.mxu0 0.0
      %1246 = vmatprep.subr.mxu0 0.0
      %1247 = vmatpush2.msra.mxu0 0.0
      %1248 = vmatprep.subr.mxu0 0.0
      %1249 = vmatpush2.msra.mxu0 0.0
      %1250 = vmatprep.subr.mxu0 0.0
      %1251 = vmatpush2.msra.mxu0 0.0
      %1252 = vmatprep.subr.mxu0 0.0
      %1253 = vmatpush2.msra.mxu0 0.0
      %1254 = vmatprep.mubr.f32.mxu0 0.0
      %1255 = vmatmul.mubr.f32.gmra.mxu0 %v1111
      %v1256 = vpop.f32.mrf.mxu0
      %v1257 = vadd.f32 0.0, %v1256
      %v1258 = vpop.f32.mrf.mxu0
      %1259 = vdwg.mxu0
      %v1260 = vadd.f32 %v1093, %v1186
      %v1261 = vadd.f32 %v1094, %v1188
      %v1262 = vadd.f32 %v1095, %v1257
      %s1263 = scalar_lea.vmem %s2, 24
      %v1264 = vld [vmem:[%s1263] sm:$0xf]
      %1265 = vrot.lane.b32.xlu0 %v271, 92
      %v1266 = vpop.permute.xlu0 %1265
      %1267 = vrot.lane.b32.xlu0 %v276, 92
      %v1268 = vpop.permute.xlu0 %1267
      %1269 = vrot.lane.b32.xlu0 %v272, 92
      %v1270 = vpop.permute.xlu0 %1269
      %1271 = vrot.lane.b32.xlu0 %v273, 92
      %v1272 = vpop.permute.xlu0 %1271
      %vm1273 = vcmask 752640
      %v1274 = vsel %vm1273, %v1266, %v1268
      %v1275 = vsel %vm1273, %v1268, %v1270
      %v1276 = vsel %vm1273, %v1270, %v1272
      %v1278 = vsel %vm293, %v1264, 0
      %v1280 = vsel %vm297, %v1274, 0
      %v1282 = vsel %vm297, %v1275, 0
      %v1284 = vsel %vm297, %v1276, 0
      %1286 = vmatprep.subr.mxu0 0.0
      %1287 = vmatpush1.msra.mxu0 0.0
      %1288 = vmatprep.subr.mxu0 0.0
      %1289 = vmatpush1.msra.mxu0 0.0
      %1290 = vmatprep.subr.mxu0 0.0
      %1291 = vmatpush1.msra.mxu0 0.0
      %1292 = vmatprep.subr.mxu0 0.0
      %1293 = vmatpush1.msra.mxu0 0.0
      %1294 = vmatprep.subr.mxu0 0.0
      %1295 = vmatpush1.msra.mxu0 0.0
      %1296 = vmatprep.subr.mxu0 0.0
      %1297 = vmatpush1.msra.mxu0 0.0
      %1298 = vmatprep.subr.mxu0 0.0
      %1299 = vmatpush1.msra.mxu0 0.0
      %1300 = vmatprep.subr.mxu0 0.0
      %1301 = vmatpush1.msra.mxu0 0.0
      %1302 = vmatprep.subr.mxu0 0.0
      %1303 = vmatpush1.msra.mxu0 0.0
      %1304 = vmatprep.subr.mxu0 0.0
      %1305 = vmatpush1.msra.mxu0 0.0
      %1306 = vmatprep.subr.mxu0 0.0
      %1307 = vmatpush1.msra.mxu0 0.0
      %1308 = vmatprep.subr.mxu0 0.0
      %1309 = vmatpush1.msra.mxu0 0.0
      %1310 = vmatprep.subr.mxu0 0.0
      %1311 = vmatpush1.msra.mxu0 0.0
      %1312 = vmatprep.subr.mxu0 0.0
      %1313 = vmatpush1.msra.mxu0 0.0
      %1314 = vmatprep.subr.mxu0 0.0
      %1315 = vmatpush1.msra.mxu0 0.0
      %1316 = vmatprep.subr.mxu0 %v1282
      %1317 = vmatpush1.msra.mxu0 %v1280
      %1318 = vmatprep.subr.mxu0 0.0
      %1319 = vmatpush2.msra.mxu0 0.0
      %1320 = vmatprep.subr.mxu0 0.0
      %1321 = vmatpush2.msra.mxu0 0.0
      %1322 = vmatprep.subr.mxu0 0.0
      %1323 = vmatpush2.msra.mxu0 0.0
      %1324 = vmatprep.subr.mxu0 0.0
      %1325 = vmatpush2.msra.mxu0 0.0
      %1326 = vmatprep.subr.mxu0 0.0
      %1327 = vmatpush2.msra.mxu0 0.0
      %1328 = vmatprep.subr.mxu0 0.0
      %1329 = vmatpush2.msra.mxu0 0.0
      %1330 = vmatprep.subr.mxu0 0.0
      %1331 = vmatpush2.msra.mxu0 0.0
      %1332 = vmatprep.subr.mxu0 0.0
      %1333 = vmatpush2.msra.mxu0 0.0
      %1334 = vmatprep.subr.mxu0 0.0
      %1335 = vmatpush2.msra.mxu0 0.0
      %1336 = vmatprep.subr.mxu0 0.0
      %1337 = vmatpush2.msra.mxu0 0.0
      %1338 = vmatprep.subr.mxu0 0.0
      %1339 = vmatpush2.msra.mxu0 0.0
      %1340 = vmatprep.subr.mxu0 0.0
      %1341 = vmatpush2.msra.mxu0 0.0
      %1342 = vmatprep.subr.mxu0 0.0
      %1343 = vmatpush2.msra.mxu0 0.0
      %1344 = vmatprep.subr.mxu0 0.0
      %1345 = vmatpush2.msra.mxu0 0.0
      %1346 = vmatprep.subr.mxu0 0.0
      %1347 = vmatpush2.msra.mxu0 0.0
      %1348 = vmatprep.subr.mxu0 0.0
      %1349 = vmatpush2.msra.mxu0 0.0
      %1350 = vmatprep.mubr.f32.mxu0 0.0
      %1351 = vmatmul.mubr.f32.gmra.mxu0 %v1278
      %v1352 = vpop.f32.mrf.mxu0
      %v1353 = vadd.f32 0.0, %v1352
      %v1354 = vpop.f32.mrf.mxu0
      %v1355 = vadd.f32 0.0, %v1354
      %1356 = vdwg.mxu0
      %1357 = vmatprep.subr.mxu0 0.0
      %1358 = vmatpush1.msra.mxu0 0.0
      %1359 = vmatprep.subr.mxu0 0.0
      %1360 = vmatpush1.msra.mxu0 0.0
      %1361 = vmatprep.subr.mxu0 0.0
      %1362 = vmatpush1.msra.mxu0 0.0
      %1363 = vmatprep.subr.mxu0 0.0
      %1364 = vmatpush1.msra.mxu0 0.0
      %1365 = vmatprep.subr.mxu0 0.0
      %1366 = vmatpush1.msra.mxu0 0.0
      %1367 = vmatprep.subr.mxu0 0.0
      %1368 = vmatpush1.msra.mxu0 0.0
      %1369 = vmatprep.subr.mxu0 0.0
      %1370 = vmatpush1.msra.mxu0 0.0
      %1371 = vmatprep.subr.mxu0 0.0
      %1372 = vmatpush1.msra.mxu0 0.0
      %1373 = vmatprep.subr.mxu0 0.0
      %1374 = vmatpush1.msra.mxu0 0.0
      %1375 = vmatprep.subr.mxu0 0.0
      %1376 = vmatpush1.msra.mxu0 0.0
      %1377 = vmatprep.subr.mxu0 0.0
      %1378 = vmatpush1.msra.mxu0 0.0
      %1379 = vmatprep.subr.mxu0 0.0
      %1380 = vmatpush1.msra.mxu0 0.0
      %1381 = vmatprep.subr.mxu0 0.0
      %1382 = vmatpush1.msra.mxu0 0.0
      %1383 = vmatprep.subr.mxu0 0.0
      %1384 = vmatpush1.msra.mxu0 0.0
      %1385 = vmatprep.subr.mxu0 0.0
      %1386 = vmatpush1.msra.mxu0 0.0
      %1387 = vmatprep.subr.mxu0 0.0
      %1388 = vmatpush1.msra.mxu0 %v1284
      %1389 = vmatprep.subr.mxu0 0.0
      %1390 = vmatpush2.msra.mxu0 0.0
      %1391 = vmatprep.subr.mxu0 0.0
      %1392 = vmatpush2.msra.mxu0 0.0
      %1393 = vmatprep.subr.mxu0 0.0
      %1394 = vmatpush2.msra.mxu0 0.0
      %1395 = vmatprep.subr.mxu0 0.0
      %1396 = vmatpush2.msra.mxu0 0.0
      %1397 = vmatprep.subr.mxu0 0.0
      %1398 = vmatpush2.msra.mxu0 0.0
      %1399 = vmatprep.subr.mxu0 0.0
      %1400 = vmatpush2.msra.mxu0 0.0
      %1401 = vmatprep.subr.mxu0 0.0
      %1402 = vmatpush2.msra.mxu0 0.0
      %1403 = vmatprep.subr.mxu0 0.0
      %1404 = vmatpush2.msra.mxu0 0.0
      %1405 = vmatprep.subr.mxu0 0.0
      %1406 = vmatpush2.msra.mxu0 0.0
      %1407 = vmatprep.subr.mxu0 0.0
      %1408 = vmatpush2.msra.mxu0 0.0
      %1409 = vmatprep.subr.mxu0 0.0
      %1410 = vmatpush2.msra.mxu0 0.0
      %1411 = vmatprep.subr.mxu0 0.0
      %1412 = vmatpush2.msra.mxu0 0.0
      %1413 = vmatprep.subr.mxu0 0.0
      %1414 = vmatpush2.msra.mxu0 0.0
      %1415 = vmatprep.subr.mxu0 0.0
      %1416 = vmatpush2.msra.mxu0 0.0
      %1417 = vmatprep.subr.mxu0 0.0
      %1418 = vmatpush2.msra.mxu0 0.0
      %1419 = vmatprep.subr.mxu0 0.0
      %1420 = vmatpush2.msra.mxu0 0.0
      %1421 = vmatprep.mubr.f32.mxu0 0.0
      %1422 = vmatmul.mubr.f32.gmra.mxu0 %v1278
      %v1423 = vpop.f32.mrf.mxu0
      %v1424 = vadd.f32 0.0, %v1423
      %v1425 = vpop.f32.mrf.mxu0
      %1426 = vdwg.mxu0
      %v1427 = vadd.f32 %v1260, %v1353
      %v1428 = vadd.f32 %v1261, %v1355
      %v1429 = vadd.f32 %v1262, %v1424
      %s1430 = scalar_lea.vmem %s2, 28
      %v1431 = vld [vmem:[%s1430] sm:$0xf]
      %1432 = vrot.lane.b32.xlu0 %v271, 91
      %v1433 = vpop.permute.xlu0 %1432
      %1434 = vrot.lane.b32.xlu0 %v276, 91
      %v1435 = vpop.permute.xlu0 %1434
      %1436 = vrot.lane.b32.xlu0 %v272, 91
      %v1437 = vpop.permute.xlu0 %1436
      %1438 = vrot.lane.b32.xlu0 %v273, 91
      %v1439 = vpop.permute.xlu0 %1438
      %vm1440 = vcmask 744448
      %v1441 = vsel %vm1440, %v1433, %v1435
      %v1442 = vsel %vm1440, %v1435, %v1437
      %v1443 = vsel %vm1440, %v1437, %v1439
      %v1445 = vsel %vm293, %v1431, 0
      %v1447 = vsel %vm297, %v1441, 0
      %v1449 = vsel %vm297, %v1442, 0
      %v1451 = vsel %vm297, %v1443, 0
      %1453 = vmatprep.subr.mxu0 0.0
      %1454 = vmatpush1.msra.mxu0 0.0
      %1455 = vmatprep.subr.mxu0 0.0
      %1456 = vmatpush1.msra.mxu0 0.0
      %1457 = vmatprep.subr.mxu0 0.0
      %1458 = vmatpush1.msra.mxu0 0.0
      %1459 = vmatprep.subr.mxu0 0.0
      %1460 = vmatpush1.msra.mxu0 0.0
      %1461 = vmatprep.subr.mxu0 0.0
      %1462 = vmatpush1.msra.mxu0 0.0
      %1463 = vmatprep.subr.mxu0 0.0
      %1464 = vmatpush1.msra.mxu0 0.0
      %1465 = vmatprep.subr.mxu0 0.0
      %1466 = vmatpush1.msra.mxu0 0.0
      %1467 = vmatprep.subr.mxu0 0.0
      %1468 = vmatpush1.msra.mxu0 0.0
      %1469 = vmatprep.subr.mxu0 0.0
      %1470 = vmatpush1.msra.mxu0 0.0
      %1471 = vmatprep.subr.mxu0 0.0
      %1472 = vmatpush1.msra.mxu0 0.0
      %1473 = vmatprep.subr.mxu0 0.0
      %1474 = vmatpush1.msra.mxu0 0.0
      %1475 = vmatprep.subr.mxu0 0.0
      %1476 = vmatpush1.msra.mxu0 0.0
      %1477 = vmatprep.subr.mxu0 0.0
      %1478 = vmatpush1.msra.mxu0 0.0
      %1479 = vmatprep.subr.mxu0 0.0
      %1480 = vmatpush1.msra.mxu0 0.0
      %1481 = vmatprep.subr.mxu0 0.0
      %1482 = vmatpush1.msra.mxu0 0.0
      %1483 = vmatprep.subr.mxu0 %v1449
      %1484 = vmatpush1.msra.mxu0 %v1447
      %1485 = vmatprep.subr.mxu0 0.0
      %1486 = vmatpush2.msra.mxu0 0.0
      %1487 = vmatprep.subr.mxu0 0.0
      %1488 = vmatpush2.msra.mxu0 0.0
      %1489 = vmatprep.subr.mxu0 0.0
      %1490 = vmatpush2.msra.mxu0 0.0
      %1491 = vmatprep.subr.mxu0 0.0
      %1492 = vmatpush2.msra.mxu0 0.0
      %1493 = vmatprep.subr.mxu0 0.0
      %1494 = vmatpush2.msra.mxu0 0.0
      %1495 = vmatprep.subr.mxu0 0.0
      %1496 = vmatpush2.msra.mxu0 0.0
      %1497 = vmatprep.subr.mxu0 0.0
      %1498 = vmatpush2.msra.mxu0 0.0
      %1499 = vmatprep.subr.mxu0 0.0
      %1500 = vmatpush2.msra.mxu0 0.0
      %1501 = vmatprep.subr.mxu0 0.0
      %1502 = vmatpush2.msra.mxu0 0.0
      %1503 = vmatprep.subr.mxu0 0.0
      %1504 = vmatpush2.msra.mxu0 0.0
      %1505 = vmatprep.subr.mxu0 0.0
      %1506 = vmatpush2.msra.mxu0 0.0
      %1507 = vmatprep.subr.mxu0 0.0
      %1508 = vmatpush2.msra.mxu0 0.0
      %1509 = vmatprep.subr.mxu0 0.0
      %1510 = vmatpush2.msra.mxu0 0.0
      %1511 = vmatprep.subr.mxu0 0.0
      %1512 = vmatpush2.msra.mxu0 0.0
      %1513 = vmatprep.subr.mxu0 0.0
      %1514 = vmatpush2.msra.mxu0 0.0
      %1515 = vmatprep.subr.mxu0 0.0
      %1516 = vmatpush2.msra.mxu0 0.0
      %1517 = vmatprep.mubr.f32.mxu0 0.0
      %1518 = vmatmul.mubr.f32.gmra.mxu0 %v1445
      %v1519 = vpop.f32.mrf.mxu0
      %v1520 = vadd.f32 0.0, %v1519
      %v1521 = vpop.f32.mrf.mxu0
      %v1522 = vadd.f32 0.0, %v1521
      %1523 = vdwg.mxu0
      %1524 = vmatprep.subr.mxu0 0.0
      %1525 = vmatpush1.msra.mxu0 0.0
      %1526 = vmatprep.subr.mxu0 0.0
      %1527 = vmatpush1.msra.mxu0 0.0
      %1528 = vmatprep.subr.mxu0 0.0
      %1529 = vmatpush1.msra.mxu0 0.0
      %1530 = vmatprep.subr.mxu0 0.0
      %1531 = vmatpush1.msra.mxu0 0.0
      %1532 = vmatprep.subr.mxu0 0.0
      %1533 = vmatpush1.msra.mxu0 0.0
      %1534 = vmatprep.subr.mxu0 0.0
      %1535 = vmatpush1.msra.mxu0 0.0
      %1536 = vmatprep.subr.mxu0 0.0
      %1537 = vmatpush1.msra.mxu0 0.0
      %1538 = vmatprep.subr.mxu0 0.0
      %1539 = vmatpush1.msra.mxu0 0.0
      %1540 = vmatprep.subr.mxu0 0.0
      %1541 = vmatpush1.msra.mxu0 0.0
      %1542 = vmatprep.subr.mxu0 0.0
      %1543 = vmatpush1.msra.mxu0 0.0
      %1544 = vmatprep.subr.mxu0 0.0
      %1545 = vmatpush1.msra.mxu0 0.0
      %1546 = vmatprep.subr.mxu0 0.0
      %1547 = vmatpush1.msra.mxu0 0.0
      %1548 = vmatprep.subr.mxu0 0.0
      %1549 = vmatpush1.msra.mxu0 0.0
      %1550 = vmatprep.subr.mxu0 0.0
      %1551 = vmatpush1.msra.mxu0 0.0
      %1552 = vmatprep.subr.mxu0 0.0
      %1553 = vmatpush1.msra.mxu0 0.0
      %1554 = vmatprep.subr.mxu0 0.0
      %1555 = vmatpush1.msra.mxu0 %v1451
      %1556 = vmatprep.subr.mxu0 0.0
      %1557 = vmatpush2.msra.mxu0 0.0
      %1558 = vmatprep.subr.mxu0 0.0
      %1559 = vmatpush2.msra.mxu0 0.0
      %1560 = vmatprep.subr.mxu0 0.0
      %1561 = vmatpush2.msra.mxu0 0.0
      %1562 = vmatprep.subr.mxu0 0.0
      %1563 = vmatpush2.msra.mxu0 0.0
      %1564 = vmatprep.subr.mxu0 0.0
      %1565 = vmatpush2.msra.mxu0 0.0
      %1566 = vmatprep.subr.mxu0 0.0
      %1567 = vmatpush2.msra.mxu0 0.0
      %1568 = vmatprep.subr.mxu0 0.0
      %1569 = vmatpush2.msra.mxu0 0.0
      %1570 = vmatprep.subr.mxu0 0.0
      %1571 = vmatpush2.msra.mxu0 0.0
      %1572 = vmatprep.subr.mxu0 0.0
      %1573 = vmatpush2.msra.mxu0 0.0
      %1574 = vmatprep.subr.mxu0 0.0
      %1575 = vmatpush2.msra.mxu0 0.0
      %1576 = vmatprep.subr.mxu0 0.0
      %1577 = vmatpush2.msra.mxu0 0.0
      %1578 = vmatprep.subr.mxu0 0.0
      %1579 = vmatpush2.msra.mxu0 0.0
      %1580 = vmatprep.subr.mxu0 0.0
      %1581 = vmatpush2.msra.mxu0 0.0
      %1582 = vmatprep.subr.mxu0 0.0
      %1583 = vmatpush2.msra.mxu0 0.0
      %1584 = vmatprep.subr.mxu0 0.0
      %1585 = vmatpush2.msra.mxu0 0.0
      %1586 = vmatprep.subr.mxu0 0.0
      %1587 = vmatpush2.msra.mxu0 0.0
      %1588 = vmatprep.mubr.f32.mxu0 0.0
      %1589 = vmatmul.mubr.f32.gmra.mxu0 %v1445
      %v1590 = vpop.f32.mrf.mxu0
      %v1591 = vadd.f32 0.0, %v1590
      %v1592 = vpop.f32.mrf.mxu0
      %1593 = vdwg.mxu0
      %v1594 = vadd.f32 %v1427, %v1520
      %v1595 = vadd.f32 %v1428, %v1522
      %v1596 = vadd.f32 %v1429, %v1591
      %s1597 = scalar_lea.vmem %s2, 32
      %v1598 = vld [vmem:[%s1597] sm:$0xf]
      %1599 = vrot.lane.b32.xlu0 %v271, 90
      %v1600 = vpop.permute.xlu0 %1599
      %1601 = vrot.lane.b32.xlu0 %v276, 90
      %v1602 = vpop.permute.xlu0 %1601
      %1603 = vrot.lane.b32.xlu0 %v272, 90
      %v1604 = vpop.permute.xlu0 %1603
      %1605 = vrot.lane.b32.xlu0 %v273, 90
      %v1606 = vpop.permute.xlu0 %1605
      %vm1607 = vcmask 736256
      %v1608 = vsel %vm1607, %v1600, %v1602
      %v1609 = vsel %vm1607, %v1602, %v1604
      %v1610 = vsel %vm1607, %v1604, %v1606
      %v1612 = vsel %vm293, %v1598, 0
      %v1614 = vsel %vm297, %v1608, 0
      %v1616 = vsel %vm297, %v1609, 0
      %v1618 = vsel %vm297, %v1610, 0
      %1620 = vmatprep.subr.mxu0 0.0
      %1621 = vmatpush1.msra.mxu0 0.0
      %1622 = vmatprep.subr.mxu0 0.0
      %1623 = vmatpush1.msra.mxu0 0.0
      %1624 = vmatprep.subr.mxu0 0.0
      %1625 = vmatpush1.msra.mxu0 0.0
      %1626 = vmatprep.subr.mxu0 0.0
      %1627 = vmatpush1.msra.mxu0 0.0
      %1628 = vmatprep.subr.mxu0 0.0
      %1629 = vmatpush1.msra.mxu0 0.0
      %1630 = vmatprep.subr.mxu0 0.0
      %1631 = vmatpush1.msra.mxu0 0.0
      %1632 = vmatprep.subr.mxu0 0.0
      %1633 = vmatpush1.msra.mxu0 0.0
      %1634 = vmatprep.subr.mxu0 0.0
      %1635 = vmatpush1.msra.mxu0 0.0
      %1636 = vmatprep.subr.mxu0 0.0
      %1637 = vmatpush1.msra.mxu0 0.0
      %1638 = vmatprep.subr.mxu0 0.0
      %1639 = vmatpush1.msra.mxu0 0.0
      %1640 = vmatprep.subr.mxu0 0.0
      %1641 = vmatpush1.msra.mxu0 0.0
      %1642 = vmatprep.subr.mxu0 0.0
      %1643 = vmatpush1.msra.mxu0 0.0
      %1644 = vmatprep.subr.mxu0 0.0
      %1645 = vmatpush1.msra.mxu0 0.0
      %1646 = vmatprep.subr.mxu0 0.0
      %1647 = vmatpush1.msra.mxu0 0.0
      %1648 = vmatprep.subr.mxu0 0.0
      %1649 = vmatpush1.msra.mxu0 0.0
      %1650 = vmatprep.subr.mxu0 %v1616
      %1651 = vmatpush1.msra.mxu0 %v1614
      %1652 = vmatprep.subr.mxu0 0.0
      %1653 = vmatpush2.msra.mxu0 0.0
      %1654 = vmatprep.subr.mxu0 0.0
      %1655 = vmatpush2.msra.mxu0 0.0
      %1656 = vmatprep.subr.mxu0 0.0
      %1657 = vmatpush2.msra.mxu0 0.0
      %1658 = vmatprep.subr.mxu0 0.0
      %1659 = vmatpush2.msra.mxu0 0.0
      %1660 = vmatprep.subr.mxu0 0.0
      %1661 = vmatpush2.msra.mxu0 0.0
      %1662 = vmatprep.subr.mxu0 0.0
      %1663 = vmatpush2.msra.mxu0 0.0
      %1664 = vmatprep.subr.mxu0 0.0
      %1665 = vmatpush2.msra.mxu0 0.0
      %1666 = vmatprep.subr.mxu0 0.0
      %1667 = vmatpush2.msra.mxu0 0.0
      %1668 = vmatprep.subr.mxu0 0.0
      %1669 = vmatpush2.msra.mxu0 0.0
      %1670 = vmatprep.subr.mxu0 0.0
      %1671 = vmatpush2.msra.mxu0 0.0
      %1672 = vmatprep.subr.mxu0 0.0
      %1673 = vmatpush2.msra.mxu0 0.0
      %1674 = vmatprep.subr.mxu0 0.0
      %1675 = vmatpush2.msra.mxu0 0.0
      %1676 = vmatprep.subr.mxu0 0.0
      %1677 = vmatpush2.msra.mxu0 0.0
      %1678 = vmatprep.subr.mxu0 0.0
      %1679 = vmatpush2.msra.mxu0 0.0
      %1680 = vmatprep.subr.mxu0 0.0
      %1681 = vmatpush2.msra.mxu0 0.0
      %1682 = vmatprep.subr.mxu0 0.0
      %1683 = vmatpush2.msra.mxu0 0.0
      %1684 = vmatprep.mubr.f32.mxu0 0.0
      %1685 = vmatmul.mubr.f32.gmra.mxu0 %v1612
      %v1686 = vpop.f32.mrf.mxu0
      %v1687 = vadd.f32 0.0, %v1686
      %v1688 = vpop.f32.mrf.mxu0
      %v1689 = vadd.f32 0.0, %v1688
      %1690 = vdwg.mxu0
      %1691 = vmatprep.subr.mxu0 0.0
      %1692 = vmatpush1.msra.mxu0 0.0
      %1693 = vmatprep.subr.mxu0 0.0
      %1694 = vmatpush1.msra.mxu0 0.0
      %1695 = vmatprep.subr.mxu0 0.0
      %1696 = vmatpush1.msra.mxu0 0.0
      %1697 = vmatprep.subr.mxu0 0.0
      %1698 = vmatpush1.msra.mxu0 0.0
      %1699 = vmatprep.subr.mxu0 0.0
      %1700 = vmatpush1.msra.mxu0 0.0
      %1701 = vmatprep.subr.mxu0 0.0
      %1702 = vmatpush1.msra.mxu0 0.0
      %1703 = vmatprep.subr.mxu0 0.0
      %1704 = vmatpush1.msra.mxu0 0.0
      %1705 = vmatprep.subr.mxu0 0.0
      %1706 = vmatpush1.msra.mxu0 0.0
      %1707 = vmatprep.subr.mxu0 0.0
      %1708 = vmatpush1.msra.mxu0 0.0
      %1709 = vmatprep.subr.mxu0 0.0
      %1710 = vmatpush1.msra.mxu0 0.0
      %1711 = vmatprep.subr.mxu0 0.0
      %1712 = vmatpush1.msra.mxu0 0.0
      %1713 = vmatprep.subr.mxu0 0.0
      %1714 = vmatpush1.msra.mxu0 0.0
      %1715 = vmatprep.subr.mxu0 0.0
      %1716 = vmatpush1.msra.mxu0 0.0
      %1717 = vmatprep.subr.mxu0 0.0
      %1718 = vmatpush1.msra.mxu0 0.0
      %1719 = vmatprep.subr.mxu0 0.0
      %1720 = vmatpush1.msra.mxu0 0.0
      %1721 = vmatprep.subr.mxu0 0.0
      %1722 = vmatpush1.msra.mxu0 %v1618
      %1723 = vmatprep.subr.mxu0 0.0
      %1724 = vmatpush2.msra.mxu0 0.0
      %1725 = vmatprep.subr.mxu0 0.0
      %1726 = vmatpush2.msra.mxu0 0.0
      %1727 = vmatprep.subr.mxu0 0.0
      %1728 = vmatpush2.msra.mxu0 0.0
      %1729 = vmatprep.subr.mxu0 0.0
      %1730 = vmatpush2.msra.mxu0 0.0
      %1731 = vmatprep.subr.mxu0 0.0
      %1732 = vmatpush2.msra.mxu0 0.0
      %1733 = vmatprep.subr.mxu0 0.0
      %1734 = vmatpush2.msra.mxu0 0.0
      %1735 = vmatprep.subr.mxu0 0.0
      %1736 = vmatpush2.msra.mxu0 0.0
      %1737 = vmatprep.subr.mxu0 0.0
      %1738 = vmatpush2.msra.mxu0 0.0
      %1739 = vmatprep.subr.mxu0 0.0
      %1740 = vmatpush2.msra.mxu0 0.0
      %1741 = vmatprep.subr.mxu0 0.0
      %1742 = vmatpush2.msra.mxu0 0.0
      %1743 = vmatprep.subr.mxu0 0.0
      %1744 = vmatpush2.msra.mxu0 0.0
      %1745 = vmatprep.subr.mxu0 0.0
      %1746 = vmatpush2.msra.mxu0 0.0
      %1747 = vmatprep.subr.mxu0 0.0
      %1748 = vmatpush2.msra.mxu0 0.0
      %1749 = vmatprep.subr.mxu0 0.0
      %1750 = vmatpush2.msra.mxu0 0.0
      %1751 = vmatprep.subr.mxu0 0.0
      %1752 = vmatpush2.msra.mxu0 0.0
      %1753 = vmatprep.subr.mxu0 0.0
      %1754 = vmatpush2.msra.mxu0 0.0
      %1755 = vmatprep.mubr.f32.mxu0 0.0
      %1756 = vmatmul.mubr.f32.gmra.mxu0 %v1612
      %v1757 = vpop.f32.mrf.mxu0
      %v1758 = vadd.f32 0.0, %v1757
      %v1759 = vpop.f32.mrf.mxu0
      %1760 = vdwg.mxu0
      %v1761 = vadd.f32 %v1594, %v1687
      %v1762 = vadd.f32 %v1595, %v1689
      %v1763 = vadd.f32 %v1596, %v1758
      %vm1764 = vcmp.ge.f32.partialorder %v1761, 0.0
      %vm1765 = vcmp.ge.f32.partialorder %v1762, 0.0
      %vm1766 = vcmp.ge.f32.partialorder %v1763, 0.0
      %v1767 = vmul.f32 %v1761, 0.01
      %v1768 = vmul.f32 %v1762, 0.01
      %v1769 = vmul.f32 %v1763, 0.01
      %v1770 = vsel %vm1764, %v1761, %v1767
      %v1771 = vsel %vm1765, %v1762, %v1768
      %v1772 = vsel %vm1766, %v1763, %v1769
      %v1773 = vld [vmem:[%s263] sm:$0x7]
      %v1775 = vlaneseq
      %v1776 = vshrl.u32 %v1775, 7
      %v1777 = vsub.s32 0, %v1776
      %v1778 = vrot.slane %v1773, %v1777
      %v1779 = vlaneseq
      %v1780 = vshrl.u32 %v1779, 7
      %v1781 = vsub.s32 1, %v1780
      %v1782 = vrot.slane %v1773, %v1781
      %v1783 = vlaneseq
      %v1784 = vshrl.u32 %v1783, 7
      %v1785 = vsub.s32 2, %v1784
      %v1786 = vrot.slane %v1773, %v1785
      %v1790 = vmul.f32 %v1770, %v1778
      %v1791 = vmul.f32 %v1771, %v1782
      %v1792 = vmul.f32 %v1772, %v1786
      %v1795 = vcombine.low %v1790, %v1791
      %1797 = vst [vmem:[%s269] sm:$0xff] %v1795
      %1798 = vst [vmem:[%s269 + $0x8] sm:$0xf] %v1792
      %s1799 = smul.u32 3, %s15
      %p1800 = scmp.lt.s32.totalorder %s1799, 5
      %s1801 = scalar_select %p1800, %s1799, 5
      %s1802 = smul.addr %s1801, 4
      %s1803 = scalar_lea.vmem %s4, %s1802
      // Predicated region
      $region37: #{resnet_block_forward.2} parent=35 // pred_check
        %p1804 = pneg %p136
      $region38: #{resnet_block_forward.2} parent=35 // pred_check_branch
        %1806 = sbr.rel (%p1804) target = $region40
      $region39: #{resnet_block_forward.2} parent=35 // pred_region
        %s1807 = smul.u32 3, %s15
      $region40: #{resnet_block_forward.2} parent=35 // pred_fallthru
        _
    $region36: #{resnet_block_forward.2} parent=5 // pred_fallthru
      _
    %p1808 = scmp.le.s32.totalorder 2, %s10
    // Predicated region
    $region41: #{resnet_block_forward.2} parent=5 // pred_check
      %p1809 = pneg %p1808
    $region42: #{resnet_block_forward.2} parent=5 // pred_check_branch
      %1811 = sbr.rel (%p1809) target = $region44
    $region43: #{resnet_block_forward.2} parent=5 // pred_region
      %s1812 = ssub.s32 %s10, 2
      // Predicated region
      $region45: #{resnet_block_forward.2} parent=43 // pred_check
        %p1813 = pneg %p142
      $region46: #{resnet_block_forward.2} parent=43 // pred_check_branch
        %1815 = sbr.rel (%p1813) target = $region48
      $region47: #{resnet_block_forward.2} parent=43 // pred_region
        %s1816 = smul.u32 3, %s16
        %p1817 = scmp.lt.s32.totalorder %s1816, 5
        %s1818 = scalar_select %p1817, %s1816, 5
        %s1819 = smul.addr %s1818, 4
        %s1820 = scalar_lea.vmem %s4, %s1819
      $region48: #{resnet_block_forward.2} parent=43 // pred_fallthru
        _
    $region44: #{resnet_block_forward.2} parent=5 // pred_fallthru
      _
  $region6: #{resnet_block_forward.2} parent=0 // loop_footer
    %s14 = sadd.s32 1, %s10
  $region7: #{resnet_block_forward.2} parent=0 // loop_footer_branch
    %9 = sbr.rel target = $region3
  $region8: #{resnet_block_forward.2} parent=0 // loop_exit
    _

</llo_original>
